<compile_context>
chip_gen: v7x
topology: tpu7x:2x2x1
jax: 0.10.0
libtpu: 0.0.40
codegen_flags: <defaults>
</compile_context>

<pallas_src>
import jax
import jax.numpy as jnp
import numpy as np
from jax.experimental import pallas as pl
from jax.experimental.pallas import tpu as pltpu

_HIGHEST = jax.lax.Precision.HIGHEST


def _slot_single_action_kernel(
    x_ref,       # (rb, SD)   f32  slots[:, :-1] lane-dense rows
    xn_ref,      # (rb, SD)   f32  slots[:, 1:]  lane-dense rows
    e_prev_ref,  # (SD, AP)   f32  mean-pool folded into prev encoder weight
    e_next_ref,  # (SD, AP)   f32  mean-pool folded into next encoder weight
    b_act_ref,   # (1, AP)    f32
    cb_ref,      # (KP, AP)   f32  zero-padded codebook
    cb_t_ref,    # (AP, KP)   f32  codebook^T (precomputed)
    cb_sq_ref,   # (1, KP)    f32  ||c||^2 (+huge for padded code rows)
    wcond_ref,   # (AP, SD)   f32  tile(w_cond, (1, S)), zero-padded rows
    w1_ref,      # (SD, SH)   bf16 block-diag(w1) over slots
    b1_ref,      # (1, SH)    f32
    w2_ref,      # (SH, SD)   bf16 block-diag(w2) over slots
    b2_ref,      # (1, SD)    f32
    pred_ref,    # (rb, SD)   f32 out: predicted slots (lane-dense)
    proto_ref,   # (rb, AP)   f32 out: action_proto, first A lanes valid
    var_ref,     # (rb, AP)   f32 out: action_variability, first A lanes valid
):
    f32, bf16 = jnp.float32, jnp.bfloat16
    KP = cb_ref.shape[0]
    x = x_ref[...]
    xn = xn_ref[...]

    # ---- Latent-action encoder (slot mean-pooling folded into the weights).
    # Kept f32 / HIGHEST so VQ nearest-code selection matches the f32 reference.
    a_pre = (jnp.dot(x, e_prev_ref[...], preferred_element_type=f32,
                     precision=_HIGHEST)
             + jnp.dot(xn, e_next_ref[...], preferred_element_type=f32,
                       precision=_HIGHEST)
             + b_act_ref[...])                                        # (rb, AP)

    # ---- Vector quantization: nearest codebook entry, first-index tie-break.
    d = (jnp.sum(a_pre * a_pre, axis=-1, keepdims=True)
         - 2.0 * jnp.dot(a_pre, cb_t_ref[...], preferred_element_type=f32,
                         precision=_HIGHEST)
         + cb_sq_ref[...])                                            # (rb, KP)
    min_d = jnp.min(d, axis=-1, keepdims=True)
    iota = jax.lax.broadcasted_iota(jnp.int32, d.shape, 1)
    idx = jnp.min(jnp.where(d <= min_d, iota, KP), axis=-1, keepdims=True)
    onehot = (iota == idx).astype(f32)
    proto = jnp.dot(onehot, cb_ref[...], preferred_element_type=f32,
                    precision=_HIGHEST)                               # (rb, AP)
    var = a_pre - proto

    # ---- Dynamics: condition_mode='sum' residual MLP (teacher forcing),
    # fully lane-dense (each row = all S slots of one (b, t)).  Conditioning
    # stays f32; MLP matmuls use bf16 operands with f32 accumulation.
    cond = x + jnp.dot(proto, wcond_ref[...], preferred_element_type=f32,
                       precision=_HIGHEST)                            # (rb, SD)
    h = jnp.maximum(
        jnp.dot(cond.astype(bf16), w1_ref[...], preferred_element_type=f32)
        + b1_ref[...], 0.0)                                           # (rb, SH)
    delta = (jnp.dot(h.astype(bf16), w2_ref[...], preferred_element_type=f32)
             + b2_ref[...])                                           # (rb, SD)

    pred_ref[...] = x + delta
    proto_ref[...] = proto
    var_ref[...] = var


def _round_up(x, m):
    return ((x + m - 1) // m) * m


def make_slot_single_action_predictor(params, num_slots, slot_dim):
    """One-time weight preprocessing; returns a jitted forward(slots) callable."""
    S, D = num_slots, slot_dim
    K, A = params["codebook"].shape
    H = params["w1"].shape[1]
    SD, SH = S * D, S * H
    AP = _round_up(max(A, 128), 128)   # lane-dense action width
    KP = _round_up(max(K, 128), 128)   # lane-dense codebook rows

    # Lane-dense layout requires these (explicit error instead of bad layout).
    assert SD % 128 == 0, f"S*D={SD} must be a multiple of 128"
    assert SH % 128 == 0, f"S*H={SH} must be a multiple of 128"

    f32, bf16 = jnp.float32, jnp.bfloat16

    def pad2(a, shape):
        out = jnp.zeros(shape, a.dtype)
        return out.at[: a.shape[0], : a.shape[1]].set(a)

    # mean-pooling over slots folded into encoder weights: E = (1/S)*[w; w; ...]
    e_prev = pad2((jnp.tile(params["w_prev"], (S, 1)) / S).astype(f32), (SD, AP))
    e_next = pad2((jnp.tile(params["w_next"], (S, 1)) / S).astype(f32), (SD, AP))
    b_act = pad2(params["b_act"].astype(f32), (1, AP))

    cb = pad2(params["codebook"].astype(f32), (KP, AP))
    cb_t = cb.T
    cb_sq = (jnp.sum(cb * cb, axis=-1)
             + jnp.where(jnp.arange(KP) >= K, 1e30, 0.0))[None, :]    # (1, KP)

    # 'sum' conditioning broadcast over slots as a tiled weight; block-diag MLP.
    wcond = pad2(jnp.tile(params["w_cond"], (1, S)).astype(f32), (AP, SD))
    w1_bd = jax.scipy.linalg.block_diag(*([params["w1"]] * S)).astype(bf16)
    w2_bd = jax.scipy.linalg.block_diag(*([params["w2"]] * S)).astype(bf16)
    b1_t = jnp.tile(params["b1"], (1, S)).astype(f32)
    b2_t = jnp.tile(params["b2"], (1, S)).astype(f32)

    weights = tuple(jnp.asarray(w) for w in (
        e_prev, e_next, b_act, cb, cb_t, cb_sq, wcond,
        w1_bd, b1_t, w2_bd, b2_t))

    @jax.jit
    def forward(slots):
        B, T, S_, D_ = slots.shape
        assert S_ == S and D_ == D and T >= 2
        n = B * (T - 1)

        # Frame selection as pure layout (no selection matmuls).
        x_ld = slots[:, :-1].reshape(n, SD).astype(f32)
        xn_ld = slots[:, 1:].reshape(n, SD).astype(f32)

        # Pad rows to a whole number of row-blocks (multiple of 8 sublanes).
        rb = 256 if n >= 256 else _round_up(n, 8)
        n_pad = _round_up(n, rb)
        if n_pad != n:
            x_ld = jnp.pad(x_ld, ((0, n_pad - n), (0, 0)))
            xn_ld = jnp.pad(xn_ld, ((0, n_pad - n), (0, 0)))

        row_in = pl.BlockSpec((rb, SD), lambda i: (i, 0))
        resident = lambda shp: pl.BlockSpec(shp, lambda i: (0, 0))

        pred2d, proto_p, var_p = pl.pallas_call(
            _slot_single_action_kernel,
            out_shape=(
                jax.ShapeDtypeStruct((n_pad, SD), f32),
                jax.ShapeDtypeStruct((n_pad, AP), f32),
                jax.ShapeDtypeStruct((n_pad, AP), f32),
            ),
            grid=(n_pad // rb,),
            in_specs=[
                row_in, row_in,
                resident((SD, AP)), resident((SD, AP)), resident((1, AP)),
                resident((KP, AP)), resident((AP, KP)), resident((1, KP)),
                resident((AP, SD)),
                resident((SD, SH)), resident((1, SH)),
                resident((SH, SD)), resident((1, SD)),
            ],
            out_specs=(
                pl.BlockSpec((rb, SD), lambda i: (i, 0)),
                pl.BlockSpec((rb, AP), lambda i: (i, 0)),
                pl.BlockSpec((rb, AP), lambda i: (i, 0)),
            ),
            compiler_params=pltpu.CompilerParams(
                dimension_semantics=("parallel",),
                vmem_limit_bytes=32 * 1024 * 1024,
            ),
        )(x_ld, xn_ld, *weights)

        pred_slots = pred2d[:n].reshape(B, T - 1, S, D)
        action_proto = proto_p[:n, :A].reshape(B, T - 1, A)
        action_var = var_p[:n, :A].reshape(B, T - 1, A)
        return pred_slots, action_proto, action_var

    return forward


def _reference(slots, p):
    """Pure-JAX (f32) reference of the same forward semantics."""
    pooled = slots.mean(axis=2)                      # (B, T, D)
    prev, nxt = pooled[:, :-1], pooled[:, 1:]
    a_pre = prev @ p["w_prev"] + nxt @ p["w_next"] + p["b_act"]
    cb = p["codebook"]
    d = (jnp.sum(a_pre ** 2, -1, keepdims=True)
         - 2.0 * a_pre @ cb.T + jnp.sum(cb ** 2, -1))
    idx = jnp.argmin(d, axis=-1)
    proto = cb[idx]
    var = a_pre - proto
    slots_in = slots[:, :-1]
    cond = slots_in + (proto @ p["w_cond"])[:, :, None, :]
    h = jax.nn.relu(cond @ p["w1"] + p["b1"])
    pred = slots_in + (h @ p["w2"] + p["b2"])
    return pred, proto, var


def _init_params(key, slot_dim, action_dim, num_actions, hidden):
    ks = jax.random.split(key, 8)
    s = 0.1
    return {
        "w_prev": s * jax.random.normal(ks[0], (slot_dim, action_dim), jnp.float32),
        "w_next": s * jax.random.normal(ks[1], (slot_dim, action_dim), jnp.float32),
        "b_act": s * jax.random.normal(ks[2], (1, action_dim), jnp.float32),
        "codebook": jax.random.normal(ks[3], (num_actions, action_dim), jnp.float32),
        "w_cond": s * jax.random.normal(ks[4], (action_dim, slot_dim), jnp.float32),
        "w1": s * jax.random.normal(ks[5], (slot_dim, hidden), jnp.float32),
        "b1": jnp.zeros((1, hidden), jnp.float32),
        "w2": s * jax.random.normal(ks[6], (hidden, slot_dim), jnp.float32),
        "b2": jnp.zeros((1, slot_dim), jnp.float32),
    }


if __name__ == "__main__":
    B, T, S = 2, 8, 4           # batch, frames, num_slots
    slot_dim, action_dim, num_actions, hidden = 32, 16, 8, 64

    key = jax.random.PRNGKey(0)
    k_slots, k_params = jax.random.split(key)
    slots = jax.random.normal(k_slots, (B, T, S, slot_dim), jnp.float32)
    params = _init_params(k_params, slot_dim, action_dim, num_actions, hidden)

    predictor = make_slot_single_action_predictor(params, num_slots=S,
                                                  slot_dim=slot_dim)
    pred_slots, action_proto, action_var = jax.block_until_ready(predictor(slots))

    ref_pred, ref_proto, ref_var = _reference(slots, params)
    np.testing.assert_allclose(np.asarray(pred_slots), np.asarray(ref_pred),
                               rtol=1e-2, atol=2e-2)
    np.testing.assert_allclose(np.asarray(action_proto), np.asarray(ref_proto),
                               rtol=1e-2, atol=2e-2)
    np.testing.assert_allclose(np.asarray(action_var), np.asarray(ref_var),
                               rtol=1e-2, atol=2e-2)

    assert pred_slots.shape == (B, T - 1, S, slot_dim)
    assert action_proto.shape == (B, T - 1, action_dim)
    assert action_var.shape == (B, T - 1, action_dim)
    print("KERNEL_OK")
</pallas_src>

<mosaic_0001>
module attributes {stable_mosaic.version = 11 : i64} {
  func.func @_slot_single_action_kernel(%arg0: i32, %arg1: memref<16x128xf32, #tpu.memory_space<vmem>>, %arg2: memref<16x128xf32, #tpu.memory_space<vmem>>, %arg3: memref<128x128xf32, #tpu.memory_space<vmem>>, %arg4: memref<128x128xf32, #tpu.memory_space<vmem>>, %arg5: memref<1x128xf32, #tpu.memory_space<vmem>>, %arg6: memref<128x128xf32, #tpu.memory_space<vmem>>, %arg7: memref<128x128xf32, #tpu.memory_space<vmem>>, %arg8: memref<1x128xf32, #tpu.memory_space<vmem>>, %arg9: memref<128x128xf32, #tpu.memory_space<vmem>>, %arg10: memref<128x256xbf16, #tpu.memory_space<vmem>>, %arg11: memref<1x256xf32, #tpu.memory_space<vmem>>, %arg12: memref<256x128xbf16, #tpu.memory_space<vmem>>, %arg13: memref<1x128xf32, #tpu.memory_space<vmem>>, %arg14: memref<16x128xf32, #tpu.memory_space<vmem>>, %arg15: memref<16x128xf32, #tpu.memory_space<vmem>>, %arg16: memref<16x128xf32, #tpu.memory_space<vmem>>) attributes {dimension_semantics = [#tpu.dimension_semantics<parallel>], iteration_bounds = array<i64: 1>, scalar_prefetch = 0 : i64, scratch_operands = 0 : i64, tpu.core_type = #tpu.core_type<tc>, window_params = [{transform_indices = @transform_0, window_bounds = array<i64: 16, 128>}, {transform_indices = @transform_1, window_bounds = array<i64: 16, 128>}, {pipeline_mode = #tpu.pipeline_mode<synchronous>, transform_indices = @transform_2, window_bounds = array<i64: 128, 128>}, {pipeline_mode = #tpu.pipeline_mode<synchronous>, transform_indices = @transform_3, window_bounds = array<i64: 128, 128>}, {pipeline_mode = #tpu.pipeline_mode<synchronous>, transform_indices = @transform_4, window_bounds = array<i64: 1, 128>}, {pipeline_mode = #tpu.pipeline_mode<synchronous>, transform_indices = @transform_5, window_bounds = array<i64: 128, 128>}, {pipeline_mode = #tpu.pipeline_mode<synchronous>, transform_indices = @transform_6, window_bounds = array<i64: 128, 128>}, {pipeline_mode = #tpu.pipeline_mode<synchronous>, transform_indices = @transform_7, window_bounds = array<i64: 1, 128>}, {pipeline_mode = #tpu.pipeline_mode<synchronous>, transform_indices = @transform_8, window_bounds = array<i64: 128, 128>}, {pipeline_mode = #tpu.pipeline_mode<synchronous>, transform_indices = @transform_9, window_bounds = array<i64: 128, 256>}, {pipeline_mode = #tpu.pipeline_mode<synchronous>, transform_indices = @transform_10, window_bounds = array<i64: 1, 256>}, {pipeline_mode = #tpu.pipeline_mode<synchronous>, transform_indices = @transform_11, window_bounds = array<i64: 256, 128>}, {pipeline_mode = #tpu.pipeline_mode<synchronous>, transform_indices = @transform_12, window_bounds = array<i64: 1, 128>}, {transform_indices = @transform_13, window_bounds = array<i64: 16, 128>}, {transform_indices = @transform_14, window_bounds = array<i64: 16, 128>}, {transform_indices = @transform_15, window_bounds = array<i64: 16, 128>}]} {
    %c0 = arith.constant 0 : index
    %c0_0 = arith.constant 0 : index
    %0 = vector.load %arg1[%c0, %c0_0] : memref<16x128xf32, #tpu.memory_space<vmem>>, vector<16x128xf32>
    %c0_1 = arith.constant 0 : index
    %c0_2 = arith.constant 0 : index
    %1 = vector.load %arg2[%c0_1, %c0_2] : memref<16x128xf32, #tpu.memory_space<vmem>>, vector<16x128xf32>
    %c0_3 = arith.constant 0 : index
    %c0_4 = arith.constant 0 : index
    %2 = vector.load %arg3[%c0_3, %c0_4] : memref<128x128xf32, #tpu.memory_space<vmem>>, vector<128x128xf32>
    %cst = arith.constant dense<0.000000e+00> : vector<16x128xf32>
    %3 = tpu.matmul %0, %2, %cst {dimension_numbers = #tpu.dot_dimension_numbers<[1], [0], [0], [1], [0, 0, 1, 1], [], []>, precision = #tpu.contract_precision<fp32>} : vector<16x128xf32>, vector<128x128xf32>, vector<16x128xf32> -> vector<16x128xf32>
    %c0_5 = arith.constant 0 : index
    %c0_6 = arith.constant 0 : index
    %4 = vector.load %arg4[%c0_5, %c0_6] : memref<128x128xf32, #tpu.memory_space<vmem>>, vector<128x128xf32>
    %cst_7 = arith.constant dense<0.000000e+00> : vector<16x128xf32>
    %5 = tpu.matmul %1, %4, %cst_7 {dimension_numbers = #tpu.dot_dimension_numbers<[1], [0], [0], [1], [0, 0, 1, 1], [], []>, precision = #tpu.contract_precision<fp32>} : vector<16x128xf32>, vector<128x128xf32>, vector<16x128xf32> -> vector<16x128xf32>
    %6 = arith.addf %3, %5 : vector<16x128xf32>
    %c0_8 = arith.constant 0 : index
    %c0_9 = arith.constant 0 : index
    %7 = vector.load %arg5[%c0_8, %c0_9] : memref<1x128xf32, #tpu.memory_space<vmem>>, vector<1x128xf32>
    %8 = vector.broadcast %7 : vector<1x128xf32> to vector<16x128xf32>
    %9 = arith.addf %6, %8 : vector<16x128xf32>
    %10 = arith.mulf %9, %9 : vector<16x128xf32>
    %cst_10 = arith.constant dense<0.000000e+00> : vector<16xf32>
    %11 = vector.multi_reduction <add>, %10, %cst_10 [1] : vector<16x128xf32> to vector<16xf32>
    %12 = vector.shape_cast %11 : vector<16xf32> to vector<16x1xf32>
    %c0_11 = arith.constant 0 : index
    %c0_12 = arith.constant 0 : index
    %13 = vector.load %arg7[%c0_11, %c0_12] : memref<128x128xf32, #tpu.memory_space<vmem>>, vector<128x128xf32>
    %cst_13 = arith.constant dense<0.000000e+00> : vector<16x128xf32>
    %14 = tpu.matmul %9, %13, %cst_13 {dimension_numbers = #tpu.dot_dimension_numbers<[1], [0], [0], [1], [0, 0, 1, 1], [], []>, precision = #tpu.contract_precision<fp32>} : vector<16x128xf32>, vector<128x128xf32>, vector<16x128xf32> -> vector<16x128xf32>
    %cst_14 = arith.constant 2.000000e+00 : f32
    %15 = vector.broadcast %cst_14 : f32 to vector<16x128xf32>
    %16 = arith.mulf %15, %14 : vector<16x128xf32>
    %17 = vector.broadcast %12 : vector<16x1xf32> to vector<16x128xf32>
    %18 = arith.subf %17, %16 : vector<16x128xf32>
    %c0_15 = arith.constant 0 : index
    %c0_16 = arith.constant 0 : index
    %19 = vector.load %arg8[%c0_15, %c0_16] : memref<1x128xf32, #tpu.memory_space<vmem>>, vector<1x128xf32>
    %20 = vector.broadcast %19 : vector<1x128xf32> to vector<16x128xf32>
    %21 = arith.addf %18, %20 : vector<16x128xf32>
    %cst_17 = arith.constant dense<0x7F800000> : vector<16xf32>
    %22 = vector.multi_reduction <minimumf>, %21, %cst_17 [1] : vector<16x128xf32> to vector<16xf32>
    %23 = vector.shape_cast %22 : vector<16xf32> to vector<16x1xf32>
    %24 = tpu.iota {dimensions = array<i32: 1>} : vector<16x128xi32>
    %25 = vector.broadcast %23 : vector<16x1xf32> to vector<16x128xf32>
    %26 = arith.cmpf ole, %21, %25 : vector<16x128xf32>
    %c128_i32 = arith.constant 128 : i32
    %27 = vector.broadcast %c128_i32 : i32 to vector<16x128xi32>
    %28 = arith.select %26, %24, %27 : vector<16x128xi1>, vector<16x128xi32>
    %cst_18 = arith.constant dense<2147483647> : vector<16xi32>
    %29 = vector.multi_reduction <minsi>, %28, %cst_18 [1] : vector<16x128xi32> to vector<16xi32>
    %30 = vector.shape_cast %29 : vector<16xi32> to vector<16x1xi32>
    %31 = vector.broadcast %30 : vector<16x1xi32> to vector<16x128xi32>
    %32 = arith.cmpi eq, %24, %31 : vector<16x128xi32>
    %33 = arith.extui %32 : vector<16x128xi1> to vector<16x128xi32>
    %34 = arith.sitofp %33 : vector<16x128xi32> to vector<16x128xf32>
    %c0_19 = arith.constant 0 : index
    %c0_20 = arith.constant 0 : index
    %35 = vector.load %arg6[%c0_19, %c0_20] : memref<128x128xf32, #tpu.memory_space<vmem>>, vector<128x128xf32>
    %cst_21 = arith.constant dense<0.000000e+00> : vector<16x128xf32>
    %36 = tpu.matmul %34, %35, %cst_21 {dimension_numbers = #tpu.dot_dimension_numbers<[1], [0], [0], [1], [0, 0, 1, 1], [], []>, precision = #tpu.contract_precision<fp32>} : vector<16x128xf32>, vector<128x128xf32>, vector<16x128xf32> -> vector<16x128xf32>
    %37 = arith.subf %9, %36 : vector<16x128xf32>
    %c0_22 = arith.constant 0 : index
    %c0_23 = arith.constant 0 : index
    %38 = vector.load %arg9[%c0_22, %c0_23] : memref<128x128xf32, #tpu.memory_space<vmem>>, vector<128x128xf32>
    %cst_24 = arith.constant dense<0.000000e+00> : vector<16x128xf32>
    %39 = tpu.matmul %36, %38, %cst_24 {dimension_numbers = #tpu.dot_dimension_numbers<[1], [0], [0], [1], [0, 0, 1, 1], [], []>, precision = #tpu.contract_precision<fp32>} : vector<16x128xf32>, vector<128x128xf32>, vector<16x128xf32> -> vector<16x128xf32>
    %40 = arith.addf %0, %39 : vector<16x128xf32>
    %41 = arith.truncf %40 : vector<16x128xf32> to vector<16x128xbf16>
    %c0_25 = arith.constant 0 : index
    %c0_26 = arith.constant 0 : index
    %42 = vector.load %arg10[%c0_25, %c0_26] : memref<128x256xbf16, #tpu.memory_space<vmem>>, vector<128x256xbf16>
    %cst_27 = arith.constant dense<0.000000e+00> : vector<16x256xf32>
    %43 = tpu.matmul %41, %42, %cst_27 {dimension_numbers = #tpu.dot_dimension_numbers<[1], [0], [0], [1], [0, 0, 1, 1], [], []>} : vector<16x128xbf16>, vector<128x256xbf16>, vector<16x256xf32> -> vector<16x256xf32>
    %c0_28 = arith.constant 0 : index
    %c0_29 = arith.constant 0 : index
    %44 = vector.load %arg11[%c0_28, %c0_29] : memref<1x256xf32, #tpu.memory_space<vmem>>, vector<1x256xf32>
    %45 = vector.broadcast %44 : vector<1x256xf32> to vector<16x256xf32>
    %46 = arith.addf %43, %45 : vector<16x256xf32>
    %cst_30 = arith.constant 0.000000e+00 : f32
    %47 = vector.broadcast %cst_30 : f32 to vector<16x256xf32>
    %48 = arith.maximumf %46, %47 : vector<16x256xf32>
    %49 = arith.truncf %48 : vector<16x256xf32> to vector<16x256xbf16>
    %c0_31 = arith.constant 0 : index
    %c0_32 = arith.constant 0 : index
    %50 = vector.load %arg12[%c0_31, %c0_32] : memref<256x128xbf16, #tpu.memory_space<vmem>>, vector<256x128xbf16>
    %cst_33 = arith.constant dense<0.000000e+00> : vector<16x128xf32>
    %51 = tpu.matmul %49, %50, %cst_33 {dimension_numbers = #tpu.dot_dimension_numbers<[1], [0], [0], [1], [0, 0, 1, 1], [], []>} : vector<16x256xbf16>, vector<256x128xbf16>, vector<16x128xf32> -> vector<16x128xf32>
    %c0_34 = arith.constant 0 : index
    %c0_35 = arith.constant 0 : index
    %52 = vector.load %arg13[%c0_34, %c0_35] : memref<1x128xf32, #tpu.memory_space<vmem>>, vector<1x128xf32>
    %53 = vector.broadcast %52 : vector<1x128xf32> to vector<16x128xf32>
    %54 = arith.addf %51, %53 : vector<16x128xf32>
    %55 = arith.addf %0, %54 : vector<16x128xf32>
    %c0_36 = arith.constant 0 : index
    %c0_37 = arith.constant 0 : index
    %56 = vector.load %arg14[%c0_36, %c0_37] : memref<16x128xf32, #tpu.memory_space<vmem>>, vector<16x128xf32>
    tpu.vector_store %arg14[%c0_36, %c0_37], %55 {strides = array<i32>} : memref<16x128xf32, #tpu.memory_space<vmem>>, vector<16x128xf32>,
    %c0_38 = arith.constant 0 : index
    %c0_39 = arith.constant 0 : index
    %57 = vector.load %arg15[%c0_38, %c0_39] : memref<16x128xf32, #tpu.memory_space<vmem>>, vector<16x128xf32>
    tpu.vector_store %arg15[%c0_38, %c0_39], %36 {strides = array<i32>} : memref<16x128xf32, #tpu.memory_space<vmem>>, vector<16x128xf32>,
    %c0_40 = arith.constant 0 : index
    %c0_41 = arith.constant 0 : index
    %58 = vector.load %arg16[%c0_40, %c0_41] : memref<16x128xf32, #tpu.memory_space<vmem>>, vector<16x128xf32>
    tpu.vector_store %arg16[%c0_40, %c0_41], %37 {strides = array<i32>} : memref<16x128xf32, #tpu.memory_space<vmem>>, vector<16x128xf32>,
    return
  }
  func.func @transform_0(%arg0: i32) -> (i32, i32) {
    %c0_i32 = arith.constant 0 : i32
    %c0_i32_0 = arith.constant 0 : i32
    return %arg0, %c0_i32 : i32, i32
  }
  func.func @transform_1(%arg0: i32) -> (i32, i32) {
    %c0_i32 = arith.constant 0 : i32
    %c0_i32_0 = arith.constant 0 : i32
    return %arg0, %c0_i32 : i32, i32
  }
  func.func @transform_2(%arg0: i32) -> (i32, i32) {
    %c0_i32 = arith.constant 0 : i32
    %c0_i32_0 = arith.constant 0 : i32
    %c0_i32_1 = arith.constant 0 : i32
    return %c0_i32, %c0_i32_0 : i32, i32
  }
  func.func @transform_3(%arg0: i32) -> (i32, i32) {
    %c0_i32 = arith.constant 0 : i32
    %c0_i32_0 = arith.constant 0 : i32
    %c0_i32_1 = arith.constant 0 : i32
    return %c0_i32, %c0_i32_0 : i32, i32
  }
  func.func @transform_4(%arg0: i32) -> (i32, i32) {
    %c0_i32 = arith.constant 0 : i32
    %c0_i32_0 = arith.constant 0 : i32
    %c0_i32_1 = arith.constant 0 : i32
    return %c0_i32, %c0_i32_0 : i32, i32
  }
  func.func @transform_5(%arg0: i32) -> (i32, i32) {
    %c0_i32 = arith.constant 0 : i32
    %c0_i32_0 = arith.constant 0 : i32
    %c0_i32_1 = arith.constant 0 : i32
    return %c0_i32, %c0_i32_0 : i32, i32
  }
  func.func @transform_6(%arg0: i32) -> (i32, i32) {
    %c0_i32 = arith.constant 0 : i32
    %c0_i32_0 = arith.constant 0 : i32
    %c0_i32_1 = arith.constant 0 : i32
    return %c0_i32, %c0_i32_0 : i32, i32
  }
  func.func @transform_7(%arg0: i32) -> (i32, i32) {
    %c0_i32 = arith.constant 0 : i32
    %c0_i32_0 = arith.constant 0 : i32
    %c0_i32_1 = arith.constant 0 : i32
    return %c0_i32, %c0_i32_0 : i32, i32
  }
  func.func @transform_8(%arg0: i32) -> (i32, i32) {
    %c0_i32 = arith.constant 0 : i32
    %c0_i32_0 = arith.constant 0 : i32
    %c0_i32_1 = arith.constant 0 : i32
    return %c0_i32, %c0_i32_0 : i32, i32
  }
  func.func @transform_9(%arg0: i32) -> (i32, i32) {
    %c0_i32 = arith.constant 0 : i32
    %c0_i32_0 = arith.constant 0 : i32
    %c0_i32_1 = arith.constant 0 : i32
    return %c0_i32, %c0_i32_0 : i32, i32
  }
  func.func @transform_10(%arg0: i32) -> (i32, i32) {
    %c0_i32 = arith.constant 0 : i32
    %c0_i32_0 = arith.constant 0 : i32
    %c0_i32_1 = arith.constant 0 : i32
    return %c0_i32, %c0_i32_0 : i32, i32
  }
  func.func @transform_11(%arg0: i32) -> (i32, i32) {
    %c0_i32 = arith.constant 0 : i32
    %c0_i32_0 = arith.constant 0 : i32
    %c0_i32_1 = arith.constant 0 : i32
    return %c0_i32, %c0_i32_0 : i32, i32
  }
  func.func @transform_12(%arg0: i32) -> (i32, i32) {
    %c0_i32 = arith.constant 0 : i32
    %c0_i32_0 = arith.constant 0 : i32
    %c0_i32_1 = arith.constant 0 : i32
    return %c0_i32, %c0_i32_0 : i32, i32
  }
  func.func @transform_13(%arg0: i32) -> (i32, i32) {
    %c0_i32 = arith.constant 0 : i32
    %c0_i32_0 = arith.constant 0 : i32
    return %arg0, %c0_i32 : i32, i32
  }
  func.func @transform_14(%arg0: i32) -> (i32, i32) {
    %c0_i32 = arith.constant 0 : i32
    %c0_i32_0 = arith.constant 0 : i32
    return %arg0, %c0_i32 : i32, i32
  }
  func.func @transform_15(%arg0: i32) -> (i32, i32) {
    %c0_i32 = arith.constant 0 : i32
    %c0_i32_0 = arith.constant 0 : i32
    return %arg0, %c0_i32 : i32, i32
  }
}

</mosaic_0001>

<llo_original>
// kernel: forward.1
$region0: #{forward.1}
  #allocation0 [shape = 'u32[]', space=smem, size = 0x4, offset = 0x4, fixed_abs, tag = 'smem constant byte address 0x4 - core index']
  #allocation1 [shape = 'u32[144,128]{1,0:T(1,128)}', space=vmem, size = 0x12000, scoped, tag = 'internal scratch']
  %s0 = inlined_call_operand.vmem [shape: f32[16,128], index: 0, kind: input, shape index: {}]
  %s1 = inlined_call_operand.vmem [shape: f32[16,128], index: 1, kind: input, shape index: {}]
  %s2 = inlined_call_operand.hbm [shape: f32[128,128], index: 2, kind: input, shape index: {}]
  %s3 = inlined_call_operand.hbm [shape: f32[128,128], index: 3, kind: input, shape index: {}]
  %s4 = inlined_call_operand.vmem [shape: f32[1,128], index: 4, kind: input, shape index: {}]
  %s5 = inlined_call_operand.vmem [shape: f32[128,128], index: 5, kind: input, shape index: {}]
  %s6 = inlined_call_operand.vmem [shape: f32[128,128], index: 6, kind: input, shape index: {}]
  %s7 = inlined_call_operand.vmem [shape: f32[1,128], index: 7, kind: input, shape index: {}]
  %s8 = inlined_call_operand.vmem [shape: f32[128,128], index: 8, kind: input, shape index: {}]
  %s9 = inlined_call_operand.vmem [shape: bf16[128,256], index: 9, kind: input, shape index: {}]
  %s10 = inlined_call_operand.vmem [shape: f32[1,256], index: 10, kind: input, shape index: {}]
  %s11 = inlined_call_operand.vmem [shape: bf16[256,128], index: 11, kind: input, shape index: {}]
  %s12 = inlined_call_operand.vmem [shape: f32[1,128], index: 12, kind: input, shape index: {}]
  %s13 = inlined_call_operand.vmem [shape: f32[16,128], index: 13, kind: output, shape index: {0}]
  %s14 = inlined_call_operand.vmem [shape: f32[16,128], index: 14, kind: output, shape index: {1}]
  %s15 = inlined_call_operand.vmem [shape: f32[16,128], index: 15, kind: output, shape index: {2}]
  %16 = xla_tuple %s13, %s14, %s15
  %s17 = sld [smem:[#allocation0]]
  $region86: #{forward.1} parent=0
    _
  %s19 = ssub.s32 1, %s17
  %s20 = scalar_select 0, %s19, %s17
  $region1: #{forward.1} parent=0
    #allocation2 [shape = 'u8[65536]{0}', space=vmem, size = 0x10000, scoped, tag = 'input window, operand 2, single buffered']
    #allocation3 [shape = 's32[1]{0}', space=sflag, size = 0x4, scoped, tag = 'scoped memory for forward.1']
    #allocation4 [shape = 'u8[65536]{0}', space=vmem, size = 0x10000, scoped, tag = 'input window, operand 3, single buffered']
    #allocation5 [shape = 's32[1]{0}', space=sflag, size = 0x4, scoped, tag = 'scoped memory for forward.1']
    %21 = vsyncpa [#allocation3], 0
    %22 = vsyncpa [#allocation5], 0
    // Predicated region
    $region2: #{forward.1} parent=1 // pred_check
      _
    $region3: #{forward.1} parent=1 // pred_check_branch
      %24 = sbr.rel (0) target = $region5
    $region4: #{forward.1} parent=1 // pred_region
      _
    $region5: #{forward.1} parent=1 // pred_fallthru
      _
    // Predicated region
    $region6: #{forward.1} parent=1 // pred_check
      _
    $region7: #{forward.1} parent=1 // pred_check_branch
      %26 = sbr.rel (0) target = $region9
    $region8: #{forward.1} parent=1 // pred_region
      _
    $region9: #{forward.1} parent=1 // pred_fallthru
      _
    // Predicated region
    $region10: #{forward.1} parent=1 // pred_check
      _
    $region11: #{forward.1} parent=1 // pred_check_branch
      %28 = sbr.rel (0) target = $region13
    $region12: #{forward.1} parent=1 // pred_region
      %s30 = ssub.s32 2048, 2048
      %31 = vsyncadd [#allocation3], %s30
      %s32 = sshll.u32 [#allocation2], 4
      %s33 = int_to_ptr.vmem [resolvable:$true] %s32
      %38 = dma.hbm_to_vmem [thread:$0]  %s2, 2048, %s33, [#allocation3], 128, 128, 8
    $region13: #{forward.1} parent=1 // pred_fallthru
      _
    // Predicated region
    $region14: #{forward.1} parent=1 // pred_check
      _
    $region15: #{forward.1} parent=1 // pred_check_branch
      %40 = sbr.rel (0) target = $region17
    $region16: #{forward.1} parent=1 // pred_region
      %s42 = ssub.s32 2048, 2048
      %43 = vsyncadd [#allocation5], %s42
      %s44 = sshll.u32 [#allocation4], 4
      %s45 = int_to_ptr.vmem [resolvable:$true] %s44
      %50 = dma.hbm_to_vmem [thread:$0]  %s3, 2048, %s45, [#allocation5], 128, 128, 8
    $region17: #{forward.1} parent=1 // pred_fallthru
      _
    // Predicated region
    $region18: #{forward.1} parent=1 // pred_check
      _
    $region19: #{forward.1} parent=1 // pred_check_branch
      %52 = sbr.rel (0) target = $region21
    $region20: #{forward.1} parent=1 // pred_region
      _
    $region21: #{forward.1} parent=1 // pred_fallthru
      _
    // Predicated region
    $region22: #{forward.1} parent=1 // pred_check
      _
    $region23: #{forward.1} parent=1 // pred_check_branch
      %54 = sbr.rel (0) target = $region25
    $region24: #{forward.1} parent=1 // pred_region
      _
    $region25: #{forward.1} parent=1 // pred_fallthru
      _
    // Predicated region
    $region26: #{forward.1} parent=1 // pred_check
      _
    $region27: #{forward.1} parent=1 // pred_check_branch
      %56 = sbr.rel (0) target = $region29
    $region28: #{forward.1} parent=1 // pred_region
      _
    $region29: #{forward.1} parent=1 // pred_fallthru
      _
    // Predicated region
    $region30: #{forward.1} parent=1 // pred_check
      _
    $region31: #{forward.1} parent=1 // pred_check_branch
      %58 = sbr.rel (0) target = $region33
    $region32: #{forward.1} parent=1 // pred_region
      _
    $region33: #{forward.1} parent=1 // pred_fallthru
      _
    // Predicated region
    $region34: #{forward.1} parent=1 // pred_check
      _
    $region35: #{forward.1} parent=1 // pred_check_branch
      %60 = sbr.rel (0) target = $region37
    $region36: #{forward.1} parent=1 // pred_region
      _
    $region37: #{forward.1} parent=1 // pred_fallthru
      _
    // Predicated region
    $region38: #{forward.1} parent=1 // pred_check
      _
    $region39: #{forward.1} parent=1 // pred_check_branch
      %62 = sbr.rel (0) target = $region41
    $region40: #{forward.1} parent=1 // pred_region
      _
    $region41: #{forward.1} parent=1 // pred_fallthru
      _
    // Predicated region
    $region42: #{forward.1} parent=1 // pred_check
      _
    $region43: #{forward.1} parent=1 // pred_check_branch
      %64 = sbr.rel (0) target = $region45
    $region44: #{forward.1} parent=1 // pred_region
      _
    $region45: #{forward.1} parent=1 // pred_fallthru
      _
    // Predicated region
    $region46: #{forward.1} parent=1 // pred_check
      _
    $region47: #{forward.1} parent=1 // pred_check_branch
      %66 = sbr.rel (0) target = $region49
    $region48: #{forward.1} parent=1 // pred_region
      _
    $region49: #{forward.1} parent=1 // pred_fallthru
      _
    // Predicated region
    $region50: #{forward.1} parent=1 // pred_check
      _
    $region51: #{forward.1} parent=1 // pred_check_branch
      %68 = sbr.rel (0) target = $region53
    $region52: #{forward.1} parent=1 // pred_region
      _
    $region53: #{forward.1} parent=1 // pred_fallthru
      _
    // Predicated region
    $region54: #{forward.1} parent=1 // pred_check
      _
    $region55: #{forward.1} parent=1 // pred_check_branch
      %70 = sbr.rel (0) target = $region57
    $region56: #{forward.1} parent=1 // pred_region
      %71 = dma.done [#allocation3], 2048
    $region57: #{forward.1} parent=1 // pred_fallthru
      _
    // Predicated region
    $region58: #{forward.1} parent=1 // pred_check
      _
    $region59: #{forward.1} parent=1 // pred_check_branch
      %73 = sbr.rel (0) target = $region61
    $region60: #{forward.1} parent=1 // pred_region
      %74 = dma.done [#allocation5], 2048
    $region61: #{forward.1} parent=1 // pred_fallthru
      _
    %v76 = vld [vmem:[%s0] sm:$0xff]
    %v77 = vld [vmem:[%s0 + $0x8] sm:$0xff]
    %v78 = vld [vmem:[%s1] sm:$0xff]
    %v79 = vld [vmem:[%s1 + $0x8] sm:$0xff]
    %v80 = vld [vmem:[#allocation2] sm:$0xff]
    %v81 = vld [vmem:[#allocation2 + $0x8] sm:$0xff]
    %v82 = vld [vmem:[#allocation2 + $0x10] sm:$0xff]
    %v83 = vld [vmem:[#allocation2 + $0x18] sm:$0xff]
    %v84 = vld [vmem:[#allocation2 + $0x20] sm:$0xff]
    %v85 = vld [vmem:[#allocation2 + $0x28] sm:$0xff]
    %v86 = vld [vmem:[#allocation2 + $0x30] sm:$0xff]
    %v87 = vld [vmem:[#allocation2 + $0x38] sm:$0xff]
    %v88 = vld [vmem:[#allocation2 + $0x40] sm:$0xff]
    %v89 = vld [vmem:[#allocation2 + $0x48] sm:$0xff]
    %v90 = vld [vmem:[#allocation2 + $0x50] sm:$0xff]
    %v91 = vld [vmem:[#allocation2 + $0x58] sm:$0xff]
    %v92 = vld [vmem:[#allocation2 + $0x60] sm:$0xff]
    %v93 = vld [vmem:[#allocation2 + $0x68] sm:$0xff]
    %v94 = vld [vmem:[#allocation2 + $0x70] sm:$0xff]
    %v95 = vld [vmem:[#allocation2 + $0x78] sm:$0xff]
    %v96 = vld [vmem:[#allocation4] sm:$0xff]
    %v97 = vld [vmem:[#allocation4 + $0x8] sm:$0xff]
    %v98 = vld [vmem:[#allocation4 + $0x10] sm:$0xff]
    %v99 = vld [vmem:[#allocation4 + $0x18] sm:$0xff]
    %v100 = vld [vmem:[#allocation4 + $0x20] sm:$0xff]
    %v101 = vld [vmem:[#allocation4 + $0x28] sm:$0xff]
    %v102 = vld [vmem:[#allocation4 + $0x30] sm:$0xff]
    %v103 = vld [vmem:[#allocation4 + $0x38] sm:$0xff]
    %v104 = vld [vmem:[#allocation4 + $0x40] sm:$0xff]
    %v105 = vld [vmem:[#allocation4 + $0x48] sm:$0xff]
    %v106 = vld [vmem:[#allocation4 + $0x50] sm:$0xff]
    %v107 = vld [vmem:[#allocation4 + $0x58] sm:$0xff]
    %v108 = vld [vmem:[#allocation4 + $0x60] sm:$0xff]
    %v109 = vld [vmem:[#allocation4 + $0x68] sm:$0xff]
    %v110 = vld [vmem:[#allocation4 + $0x70] sm:$0xff]
    %v111 = vld [vmem:[#allocation4 + $0x78] sm:$0xff]
    %112 = vmatprep.subr.mxu0 0.0
    %v113 = vand.u32 %v96, 4294901760
    %114 = vmatpush1.msra.mxu0 %v113
    %115 = vmatprep.subr.mxu0 0.0
    %v116 = vand.u32 %v97, 4294901760
    %117 = vmatpush1.msra.mxu0 %v116
    %118 = vmatprep.subr.mxu0 0.0
    %v119 = vand.u32 %v98, 4294901760
    %120 = vmatpush1.msra.mxu0 %v119
    %121 = vmatprep.subr.mxu0 0.0
    %v122 = vand.u32 %v99, 4294901760
    %123 = vmatpush1.msra.mxu0 %v122
    %124 = vmatprep.subr.mxu0 0.0
    %v125 = vand.u32 %v100, 4294901760
    %126 = vmatpush1.msra.mxu0 %v125
    %127 = vmatprep.subr.mxu0 0.0
    %v128 = vand.u32 %v101, 4294901760
    %129 = vmatpush1.msra.mxu0 %v128
    %130 = vmatprep.subr.mxu0 0.0
    %v131 = vand.u32 %v102, 4294901760
    %132 = vmatpush1.msra.mxu0 %v131
    %133 = vmatprep.subr.mxu0 0.0
    %v134 = vand.u32 %v103, 4294901760
    %135 = vmatpush1.msra.mxu0 %v134
    %136 = vmatprep.subr.mxu0 0.0
    %v137 = vand.u32 %v104, 4294901760
    %138 = vmatpush1.msra.mxu0 %v137
    %139 = vmatprep.subr.mxu0 0.0
    %v140 = vand.u32 %v105, 4294901760
    %141 = vmatpush1.msra.mxu0 %v140
    %142 = vmatprep.subr.mxu0 0.0
    %v143 = vand.u32 %v106, 4294901760
    %144 = vmatpush1.msra.mxu0 %v143
    %145 = vmatprep.subr.mxu0 0.0
    %v146 = vand.u32 %v107, 4294901760
    %147 = vmatpush1.msra.mxu0 %v146
    %148 = vmatprep.subr.mxu0 0.0
    %v149 = vand.u32 %v108, 4294901760
    %150 = vmatpush1.msra.mxu0 %v149
    %151 = vmatprep.subr.mxu0 0.0
    %v152 = vand.u32 %v109, 4294901760
    %153 = vmatpush1.msra.mxu0 %v152
    %154 = vmatprep.subr.mxu0 0.0
    %v155 = vand.u32 %v110, 4294901760
    %156 = vmatpush1.msra.mxu0 %v155
    %157 = vmatprep.subr.mxu0 0.0
    %v158 = vand.u32 %v111, 4294901760
    %159 = vmatpush1.msra.mxu0 %v158
    %160 = vmatprep.subr.mxu0 0.0
    %161 = vmatpush1.msra.mxu0 0.0
    %162 = vmatprep.subr.mxu0 0.0
    %163 = vmatpush1.msra.mxu0 0.0
    %164 = vmatprep.subr.mxu0 0.0
    %165 = vmatpush1.msra.mxu0 0.0
    %166 = vmatprep.subr.mxu0 0.0
    %167 = vmatpush1.msra.mxu0 0.0
    %168 = vmatprep.subr.mxu0 0.0
    %169 = vmatpush1.msra.mxu0 0.0
    %170 = vmatprep.subr.mxu0 0.0
    %171 = vmatpush1.msra.mxu0 0.0
    %172 = vmatprep.subr.mxu0 0.0
    %173 = vmatpush1.msra.mxu0 0.0
    %174 = vmatprep.subr.mxu0 0.0
    %175 = vmatpush1.msra.mxu0 0.0
    %176 = vmatprep.subr.mxu0 0.0
    %177 = vmatpush1.msra.mxu0 0.0
    %178 = vmatprep.subr.mxu0 0.0
    %179 = vmatpush1.msra.mxu0 0.0
    %180 = vmatprep.subr.mxu0 0.0
    %181 = vmatpush1.msra.mxu0 0.0
    %182 = vmatprep.subr.mxu0 0.0
    %183 = vmatpush1.msra.mxu0 0.0
    %184 = vmatprep.subr.mxu0 0.0
    %185 = vmatpush1.msra.mxu0 0.0
    %186 = vmatprep.subr.mxu0 0.0
    %187 = vmatpush1.msra.mxu0 0.0
    %188 = vmatprep.subr.mxu0 0.0
    %189 = vmatpush1.msra.mxu0 0.0
    %190 = vmatprep.subr.mxu0 0.0
    %191 = vmatpush1.msra.mxu0 0.0
    %192 = vmatprep.mubr.f32.mxu0 0.0
    %v193 = vand.u32 %v78, 4294901760
    %v194 = vsub.f32 %v78, %v193
    %v195 = vand.u32 %v194, 4294901760
    %v196 = vsub.f32 %v194, %v195
    %v197 = vand.u32 %v196, 4294901760
    %198 = vmatmul.mubr.f32.gmra.mrb[0].mxu0 %v197
    %v199 = vpop.f32.mrb[0].mxu0
    %v200 = vadd.f32 0.0, %v199
    %v201 = vpop.f32.mrb[0].mxu0
    %202 = vmatprep.mubr.f32.mxu0 0.0
    %v203 = vand.u32 %v79, 4294901760
    %v204 = vsub.f32 %v79, %v203
    %v205 = vand.u32 %v204, 4294901760
    %v206 = vsub.f32 %v204, %v205
    %v207 = vand.u32 %v206, 4294901760
    %208 = vmatmul.mubr.f32.gmra.mrb[0].mxu0 %v207
    %v209 = vpop.f32.mrb[0].mxu0
    %v210 = vadd.f32 0.0, %v209
    %v211 = vpop.f32.mrb[0].mxu0
    %212 = vdwg.mxu0
    %213 = vmatprep.subr.mxu0 0.0
    %v214 = vand.u32 %v96, 4294901760
    %v215 = vsub.f32 %v96, %v214
    %v216 = vand.u32 %v215, 4294901760
    %v217 = vsub.f32 %v215, %v216
    %v218 = vand.u32 %v217, 4294901760
    %219 = vmatpush1.msra.mxu0 %v218
    %220 = vmatprep.subr.mxu0 0.0
    %v221 = vand.u32 %v97, 4294901760
    %v222 = vsub.f32 %v97, %v221
    %v223 = vand.u32 %v222, 4294901760
    %v224 = vsub.f32 %v222, %v223
    %v225 = vand.u32 %v224, 4294901760
    %226 = vmatpush1.msra.mxu0 %v225
    %227 = vmatprep.subr.mxu0 0.0
    %v228 = vand.u32 %v98, 4294901760
    %v229 = vsub.f32 %v98, %v228
    %v230 = vand.u32 %v229, 4294901760
    %v231 = vsub.f32 %v229, %v230
    %v232 = vand.u32 %v231, 4294901760
    %233 = vmatpush1.msra.mxu0 %v232
    %234 = vmatprep.subr.mxu0 0.0
    %v235 = vand.u32 %v99, 4294901760
    %v236 = vsub.f32 %v99, %v235
    %v237 = vand.u32 %v236, 4294901760
    %v238 = vsub.f32 %v236, %v237
    %v239 = vand.u32 %v238, 4294901760
    %240 = vmatpush1.msra.mxu0 %v239
    %241 = vmatprep.subr.mxu0 0.0
    %v242 = vand.u32 %v100, 4294901760
    %v243 = vsub.f32 %v100, %v242
    %v244 = vand.u32 %v243, 4294901760
    %v245 = vsub.f32 %v243, %v244
    %v246 = vand.u32 %v245, 4294901760
    %247 = vmatpush1.msra.mxu0 %v246
    %248 = vmatprep.subr.mxu0 0.0
    %v249 = vand.u32 %v101, 4294901760
    %v250 = vsub.f32 %v101, %v249
    %v251 = vand.u32 %v250, 4294901760
    %v252 = vsub.f32 %v250, %v251
    %v253 = vand.u32 %v252, 4294901760
    %254 = vmatpush1.msra.mxu0 %v253
    %255 = vmatprep.subr.mxu0 0.0
    %v256 = vand.u32 %v102, 4294901760
    %v257 = vsub.f32 %v102, %v256
    %v258 = vand.u32 %v257, 4294901760
    %v259 = vsub.f32 %v257, %v258
    %v260 = vand.u32 %v259, 4294901760
    %261 = vmatpush1.msra.mxu0 %v260
    %262 = vmatprep.subr.mxu0 0.0
    %v263 = vand.u32 %v103, 4294901760
    %v264 = vsub.f32 %v103, %v263
    %v265 = vand.u32 %v264, 4294901760
    %v266 = vsub.f32 %v264, %v265
    %v267 = vand.u32 %v266, 4294901760
    %268 = vmatpush1.msra.mxu0 %v267
    %269 = vmatprep.subr.mxu0 0.0
    %v270 = vand.u32 %v104, 4294901760
    %v271 = vsub.f32 %v104, %v270
    %v272 = vand.u32 %v271, 4294901760
    %v273 = vsub.f32 %v271, %v272
    %v274 = vand.u32 %v273, 4294901760
    %275 = vmatpush1.msra.mxu0 %v274
    %276 = vmatprep.subr.mxu0 0.0
    %v277 = vand.u32 %v105, 4294901760
    %v278 = vsub.f32 %v105, %v277
    %v279 = vand.u32 %v278, 4294901760
    %v280 = vsub.f32 %v278, %v279
    %v281 = vand.u32 %v280, 4294901760
    %282 = vmatpush1.msra.mxu0 %v281
    %283 = vmatprep.subr.mxu0 0.0
    %v284 = vand.u32 %v106, 4294901760
    %v285 = vsub.f32 %v106, %v284
    %v286 = vand.u32 %v285, 4294901760
    %v287 = vsub.f32 %v285, %v286
    %v288 = vand.u32 %v287, 4294901760
    %289 = vmatpush1.msra.mxu0 %v288
    %290 = vmatprep.subr.mxu0 0.0
    %v291 = vand.u32 %v107, 4294901760
    %v292 = vsub.f32 %v107, %v291
    %v293 = vand.u32 %v292, 4294901760
    %v294 = vsub.f32 %v292, %v293
    %v295 = vand.u32 %v294, 4294901760
    %296 = vmatpush1.msra.mxu0 %v295
    %297 = vmatprep.subr.mxu0 0.0
    %v298 = vand.u32 %v108, 4294901760
    %v299 = vsub.f32 %v108, %v298
    %v300 = vand.u32 %v299, 4294901760
    %v301 = vsub.f32 %v299, %v300
    %v302 = vand.u32 %v301, 4294901760
    %303 = vmatpush1.msra.mxu0 %v302
    %304 = vmatprep.subr.mxu0 0.0
    %v305 = vand.u32 %v109, 4294901760
    %v306 = vsub.f32 %v109, %v305
    %v307 = vand.u32 %v306, 4294901760
    %v308 = vsub.f32 %v306, %v307
    %v309 = vand.u32 %v308, 4294901760
    %310 = vmatpush1.msra.mxu0 %v309
    %311 = vmatprep.subr.mxu0 0.0
    %v312 = vand.u32 %v110, 4294901760
    %v313 = vsub.f32 %v110, %v312
    %v314 = vand.u32 %v313, 4294901760
    %v315 = vsub.f32 %v313, %v314
    %v316 = vand.u32 %v315, 4294901760
    %317 = vmatpush1.msra.mxu0 %v316
    %318 = vmatprep.subr.mxu0 0.0
    %v319 = vand.u32 %v111, 4294901760
    %v320 = vsub.f32 %v111, %v319
    %v321 = vand.u32 %v320, 4294901760
    %v322 = vsub.f32 %v320, %v321
    %v323 = vand.u32 %v322, 4294901760
    %324 = vmatpush1.msra.mxu0 %v323
    %325 = vmatprep.subr.mxu0 0.0
    %326 = vmatpush1.msra.mxu0 0.0
    %327 = vmatprep.subr.mxu0 0.0
    %328 = vmatpush1.msra.mxu0 0.0
    %329 = vmatprep.subr.mxu0 0.0
    %330 = vmatpush1.msra.mxu0 0.0
    %331 = vmatprep.subr.mxu0 0.0
    %332 = vmatpush1.msra.mxu0 0.0
    %333 = vmatprep.subr.mxu0 0.0
    %334 = vmatpush1.msra.mxu0 0.0
    %335 = vmatprep.subr.mxu0 0.0
    %336 = vmatpush1.msra.mxu0 0.0
    %337 = vmatprep.subr.mxu0 0.0
    %338 = vmatpush1.msra.mxu0 0.0
    %339 = vmatprep.subr.mxu0 0.0
    %340 = vmatpush1.msra.mxu0 0.0
    %341 = vmatprep.subr.mxu0 0.0
    %342 = vmatpush1.msra.mxu0 0.0
    %343 = vmatprep.subr.mxu0 0.0
    %344 = vmatpush1.msra.mxu0 0.0
    %345 = vmatprep.subr.mxu0 0.0
    %346 = vmatpush1.msra.mxu0 0.0
    %347 = vmatprep.subr.mxu0 0.0
    %348 = vmatpush1.msra.mxu0 0.0
    %349 = vmatprep.subr.mxu0 0.0
    %350 = vmatpush1.msra.mxu0 0.0
    %351 = vmatprep.subr.mxu0 0.0
    %352 = vmatpush1.msra.mxu0 0.0
    %353 = vmatprep.subr.mxu0 0.0
    %354 = vmatpush1.msra.mxu0 0.0
    %355 = vmatprep.subr.mxu0 0.0
    %356 = vmatpush1.msra.mxu0 0.0
    %357 = vmatprep.mubr.f32.mxu0 0.0
    %v358 = vand.u32 %v78, 4294901760
    %359 = vmatmul.mubr.f32.gmra.mrb[0].mxu0 %v358
    %v360 = vpop.f32.mrb[0].mxu0
    %v361 = vadd.f32 %v200, %v360
    %v362 = vpop.f32.mrb[0].mxu0
    %363 = vmatprep.mubr.f32.mxu0 0.0
    %v364 = vand.u32 %v79, 4294901760
    %365 = vmatmul.mubr.f32.gmra.mrb[0].mxu0 %v364
    %v366 = vpop.f32.mrb[0].mxu0
    %v367 = vadd.f32 %v210, %v366
    %v368 = vpop.f32.mrb[0].mxu0
    %369 = vdwg.mxu0
    %370 = vmatprep.subr.mxu0 0.0
    %v371 = vand.u32 %v96, 4294901760
    %v372 = vsub.f32 %v96, %v371
    %373 = vmatpush1.msra.mxu0 %v372
    %374 = vmatprep.subr.mxu0 0.0
    %v375 = vand.u32 %v97, 4294901760
    %v376 = vsub.f32 %v97, %v375
    %377 = vmatpush1.msra.mxu0 %v376
    %378 = vmatprep.subr.mxu0 0.0
    %v379 = vand.u32 %v98, 4294901760
    %v380 = vsub.f32 %v98, %v379
    %381 = vmatpush1.msra.mxu0 %v380
    %382 = vmatprep.subr.mxu0 0.0
    %v383 = vand.u32 %v99, 4294901760
    %v384 = vsub.f32 %v99, %v383
    %385 = vmatpush1.msra.mxu0 %v384
    %386 = vmatprep.subr.mxu0 0.0
    %v387 = vand.u32 %v100, 4294901760
    %v388 = vsub.f32 %v100, %v387
    %389 = vmatpush1.msra.mxu0 %v388
    %390 = vmatprep.subr.mxu0 0.0
    %v391 = vand.u32 %v101, 4294901760
    %v392 = vsub.f32 %v101, %v391
    %393 = vmatpush1.msra.mxu0 %v392
    %394 = vmatprep.subr.mxu0 0.0
    %v395 = vand.u32 %v102, 4294901760
    %v396 = vsub.f32 %v102, %v395
    %397 = vmatpush1.msra.mxu0 %v396
    %398 = vmatprep.subr.mxu0 0.0
    %v399 = vand.u32 %v103, 4294901760
    %v400 = vsub.f32 %v103, %v399
    %401 = vmatpush1.msra.mxu0 %v400
    %402 = vmatprep.subr.mxu0 0.0
    %v403 = vand.u32 %v104, 4294901760
    %v404 = vsub.f32 %v104, %v403
    %405 = vmatpush1.msra.mxu0 %v404
    %406 = vmatprep.subr.mxu0 0.0
    %v407 = vand.u32 %v105, 4294901760
    %v408 = vsub.f32 %v105, %v407
    %409 = vmatpush1.msra.mxu0 %v408
    %410 = vmatprep.subr.mxu0 0.0
    %v411 = vand.u32 %v106, 4294901760
    %v412 = vsub.f32 %v106, %v411
    %413 = vmatpush1.msra.mxu0 %v412
    %414 = vmatprep.subr.mxu0 0.0
    %v415 = vand.u32 %v107, 4294901760
    %v416 = vsub.f32 %v107, %v415
    %417 = vmatpush1.msra.mxu0 %v416
    %418 = vmatprep.subr.mxu0 0.0
    %v419 = vand.u32 %v108, 4294901760
    %v420 = vsub.f32 %v108, %v419
    %421 = vmatpush1.msra.mxu0 %v420
    %422 = vmatprep.subr.mxu0 0.0
    %v423 = vand.u32 %v109, 4294901760
    %v424 = vsub.f32 %v109, %v423
    %425 = vmatpush1.msra.mxu0 %v424
    %426 = vmatprep.subr.mxu0 0.0
    %v427 = vand.u32 %v110, 4294901760
    %v428 = vsub.f32 %v110, %v427
    %429 = vmatpush1.msra.mxu0 %v428
    %430 = vmatprep.subr.mxu0 0.0
    %v431 = vand.u32 %v111, 4294901760
    %v432 = vsub.f32 %v111, %v431
    %433 = vmatpush1.msra.mxu0 %v432
    %434 = vmatprep.subr.mxu0 0.0
    %435 = vmatpush1.msra.mxu0 0.0
    %436 = vmatprep.subr.mxu0 0.0
    %437 = vmatpush1.msra.mxu0 0.0
    %438 = vmatprep.subr.mxu0 0.0
    %439 = vmatpush1.msra.mxu0 0.0
    %440 = vmatprep.subr.mxu0 0.0
    %441 = vmatpush1.msra.mxu0 0.0
    %442 = vmatprep.subr.mxu0 0.0
    %443 = vmatpush1.msra.mxu0 0.0
    %444 = vmatprep.subr.mxu0 0.0
    %445 = vmatpush1.msra.mxu0 0.0
    %446 = vmatprep.subr.mxu0 0.0
    %447 = vmatpush1.msra.mxu0 0.0
    %448 = vmatprep.subr.mxu0 0.0
    %449 = vmatpush1.msra.mxu0 0.0
    %450 = vmatprep.subr.mxu0 0.0
    %451 = vmatpush1.msra.mxu0 0.0
    %452 = vmatprep.subr.mxu0 0.0
    %453 = vmatpush1.msra.mxu0 0.0
    %454 = vmatprep.subr.mxu0 0.0
    %455 = vmatpush1.msra.mxu0 0.0
    %456 = vmatprep.subr.mxu0 0.0
    %457 = vmatpush1.msra.mxu0 0.0
    %458 = vmatprep.subr.mxu0 0.0
    %459 = vmatpush1.msra.mxu0 0.0
    %460 = vmatprep.subr.mxu0 0.0
    %461 = vmatpush1.msra.mxu0 0.0
    %462 = vmatprep.subr.mxu0 0.0
    %463 = vmatpush1.msra.mxu0 0.0
    %464 = vmatprep.subr.mxu0 0.0
    %465 = vmatpush1.msra.mxu0 0.0
    %466 = vmatprep.mubr.f32.mxu0 0.0
    %v467 = vand.u32 %v78, 4294901760
    %v468 = vsub.f32 %v78, %v467
    %469 = vmatmul.mubr.f32.gmra.mrb[0].mxu0 %v468
    %v470 = vpop.f32.mrb[0].mxu0
    %v471 = vadd.f32 %v361, %v470
    %v472 = vpop.f32.mrb[0].mxu0
    %473 = vmatprep.mubr.f32.mxu0 0.0
    %v474 = vand.u32 %v79, 4294901760
    %v475 = vsub.f32 %v79, %v474
    %476 = vmatmul.mubr.f32.gmra.mrb[0].mxu0 %v475
    %v477 = vpop.f32.mrb[0].mxu0
    %v478 = vadd.f32 %v367, %v477
    %v479 = vpop.f32.mrb[0].mxu0
    %480 = vdwg.mxu0
    %481 = vmatprep.subr.mxu0 0.0
    %v482 = vand.u32 %v96, 4294901760
    %483 = vmatpush1.msra.mxu0 %v482
    %484 = vmatprep.subr.mxu0 0.0
    %v485 = vand.u32 %v97, 4294901760
    %486 = vmatpush1.msra.mxu0 %v485
    %487 = vmatprep.subr.mxu0 0.0
    %v488 = vand.u32 %v98, 4294901760
    %489 = vmatpush1.msra.mxu0 %v488
    %490 = vmatprep.subr.mxu0 0.0
    %v491 = vand.u32 %v99, 4294901760
    %492 = vmatpush1.msra.mxu0 %v491
    %493 = vmatprep.subr.mxu0 0.0
    %v494 = vand.u32 %v100, 4294901760
    %495 = vmatpush1.msra.mxu0 %v494
    %496 = vmatprep.subr.mxu0 0.0
    %v497 = vand.u32 %v101, 4294901760
    %498 = vmatpush1.msra.mxu0 %v497
    %499 = vmatprep.subr.mxu0 0.0
    %v500 = vand.u32 %v102, 4294901760
    %501 = vmatpush1.msra.mxu0 %v500
    %502 = vmatprep.subr.mxu0 0.0
    %v503 = vand.u32 %v103, 4294901760
    %504 = vmatpush1.msra.mxu0 %v503
    %505 = vmatprep.subr.mxu0 0.0
    %v506 = vand.u32 %v104, 4294901760
    %507 = vmatpush1.msra.mxu0 %v506
    %508 = vmatprep.subr.mxu0 0.0
    %v509 = vand.u32 %v105, 4294901760
    %510 = vmatpush1.msra.mxu0 %v509
    %511 = vmatprep.subr.mxu0 0.0
    %v512 = vand.u32 %v106, 4294901760
    %513 = vmatpush1.msra.mxu0 %v512
    %514 = vmatprep.subr.mxu0 0.0
    %v515 = vand.u32 %v107, 4294901760
    %516 = vmatpush1.msra.mxu0 %v515
    %517 = vmatprep.subr.mxu0 0.0
    %v518 = vand.u32 %v108, 4294901760
    %519 = vmatpush1.msra.mxu0 %v518
    %520 = vmatprep.subr.mxu0 0.0
    %v521 = vand.u32 %v109, 4294901760
    %522 = vmatpush1.msra.mxu0 %v521
    %523 = vmatprep.subr.mxu0 0.0
    %v524 = vand.u32 %v110, 4294901760
    %525 = vmatpush1.msra.mxu0 %v524
    %526 = vmatprep.subr.mxu0 0.0
    %v527 = vand.u32 %v111, 4294901760
    %528 = vmatpush1.msra.mxu0 %v527
    %529 = vmatprep.subr.mxu0 0.0
    %530 = vmatpush1.msra.mxu0 0.0
    %531 = vmatprep.subr.mxu0 0.0
    %532 = vmatpush1.msra.mxu0 0.0
    %533 = vmatprep.subr.mxu0 0.0
    %534 = vmatpush1.msra.mxu0 0.0
    %535 = vmatprep.subr.mxu0 0.0
    %536 = vmatpush1.msra.mxu0 0.0
    %537 = vmatprep.subr.mxu0 0.0
    %538 = vmatpush1.msra.mxu0 0.0
    %539 = vmatprep.subr.mxu0 0.0
    %540 = vmatpush1.msra.mxu0 0.0
    %541 = vmatprep.subr.mxu0 0.0
    %542 = vmatpush1.msra.mxu0 0.0
    %543 = vmatprep.subr.mxu0 0.0
    %544 = vmatpush1.msra.mxu0 0.0
    %545 = vmatprep.subr.mxu0 0.0
    %546 = vmatpush1.msra.mxu0 0.0
    %547 = vmatprep.subr.mxu0 0.0
    %548 = vmatpush1.msra.mxu0 0.0
    %549 = vmatprep.subr.mxu0 0.0
    %550 = vmatpush1.msra.mxu0 0.0
    %551 = vmatprep.subr.mxu0 0.0
    %552 = vmatpush1.msra.mxu0 0.0
    %553 = vmatprep.subr.mxu0 0.0
    %554 = vmatpush1.msra.mxu0 0.0
    %555 = vmatprep.subr.mxu0 0.0
    %556 = vmatpush1.msra.mxu0 0.0
    %557 = vmatprep.subr.mxu0 0.0
    %558 = vmatpush1.msra.mxu0 0.0
    %559 = vmatprep.subr.mxu0 0.0
    %560 = vmatpush1.msra.mxu0 0.0
    %561 = vmatprep.mubr.f32.mxu0 0.0
    %v562 = vand.u32 %v78, 4294901760
    %v563 = vsub.f32 %v78, %v562
    %v564 = vand.u32 %v563, 4294901760
    %565 = vmatmul.mubr.f32.gmra.mrb[0].mxu0 %v564
    %v566 = vpop.f32.mrb[0].mxu0
    %v567 = vadd.f32 %v471, %v566
    %v568 = vpop.f32.mrb[0].mxu0
    %569 = vmatprep.mubr.f32.mxu0 0.0
    %v570 = vand.u32 %v79, 4294901760
    %v571 = vsub.f32 %v79, %v570
    %v572 = vand.u32 %v571, 4294901760
    %573 = vmatmul.mubr.f32.gmra.mrb[0].mxu0 %v572
    %v574 = vpop.f32.mrb[0].mxu0
    %v575 = vadd.f32 %v478, %v574
    %v576 = vpop.f32.mrb[0].mxu0
    %577 = vdwg.mxu0
    %578 = vmatprep.subr.mxu0 0.0
    %v579 = vand.u32 %v96, 4294901760
    %v580 = vsub.f32 %v96, %v579
    %v581 = vand.u32 %v580, 4294901760
    %582 = vmatpush1.msra.mxu0 %v581
    %583 = vmatprep.subr.mxu0 0.0
    %v584 = vand.u32 %v97, 4294901760
    %v585 = vsub.f32 %v97, %v584
    %v586 = vand.u32 %v585, 4294901760
    %587 = vmatpush1.msra.mxu0 %v586
    %588 = vmatprep.subr.mxu0 0.0
    %v589 = vand.u32 %v98, 4294901760
    %v590 = vsub.f32 %v98, %v589
    %v591 = vand.u32 %v590, 4294901760
    %592 = vmatpush1.msra.mxu0 %v591
    %593 = vmatprep.subr.mxu0 0.0
    %v594 = vand.u32 %v99, 4294901760
    %v595 = vsub.f32 %v99, %v594
    %v596 = vand.u32 %v595, 4294901760
    %597 = vmatpush1.msra.mxu0 %v596
    %598 = vmatprep.subr.mxu0 0.0
    %v599 = vand.u32 %v100, 4294901760
    %v600 = vsub.f32 %v100, %v599
    %v601 = vand.u32 %v600, 4294901760
    %602 = vmatpush1.msra.mxu0 %v601
    %603 = vmatprep.subr.mxu0 0.0
    %v604 = vand.u32 %v101, 4294901760
    %v605 = vsub.f32 %v101, %v604
    %v606 = vand.u32 %v605, 4294901760
    %607 = vmatpush1.msra.mxu0 %v606
    %608 = vmatprep.subr.mxu0 0.0
    %v609 = vand.u32 %v102, 4294901760
    %v610 = vsub.f32 %v102, %v609
    %v611 = vand.u32 %v610, 4294901760
    %612 = vmatpush1.msra.mxu0 %v611
    %613 = vmatprep.subr.mxu0 0.0
    %v614 = vand.u32 %v103, 4294901760
    %v615 = vsub.f32 %v103, %v614
    %v616 = vand.u32 %v615, 4294901760
    %617 = vmatpush1.msra.mxu0 %v616
    %618 = vmatprep.subr.mxu0 0.0
    %v619 = vand.u32 %v104, 4294901760
    %v620 = vsub.f32 %v104, %v619
    %v621 = vand.u32 %v620, 4294901760
    %622 = vmatpush1.msra.mxu0 %v621
    %623 = vmatprep.subr.mxu0 0.0
    %v624 = vand.u32 %v105, 4294901760
    %v625 = vsub.f32 %v105, %v624
    %v626 = vand.u32 %v625, 4294901760
    %627 = vmatpush1.msra.mxu0 %v626
    %628 = vmatprep.subr.mxu0 0.0
    %v629 = vand.u32 %v106, 4294901760
    %v630 = vsub.f32 %v106, %v629
    %v631 = vand.u32 %v630, 4294901760
    %632 = vmatpush1.msra.mxu0 %v631
    %633 = vmatprep.subr.mxu0 0.0
    %v634 = vand.u32 %v107, 4294901760
    %v635 = vsub.f32 %v107, %v634
    %v636 = vand.u32 %v635, 4294901760
    %637 = vmatpush1.msra.mxu0 %v636
    %638 = vmatprep.subr.mxu0 0.0
    %v639 = vand.u32 %v108, 4294901760
    %v640 = vsub.f32 %v108, %v639
    %v641 = vand.u32 %v640, 4294901760
    %642 = vmatpush1.msra.mxu0 %v641
    %643 = vmatprep.subr.mxu0 0.0
    %v644 = vand.u32 %v109, 4294901760
    %v645 = vsub.f32 %v109, %v644
    %v646 = vand.u32 %v645, 4294901760
    %647 = vmatpush1.msra.mxu0 %v646
    %648 = vmatprep.subr.mxu0 0.0
    %v649 = vand.u32 %v110, 4294901760
    %v650 = vsub.f32 %v110, %v649
    %v651 = vand.u32 %v650, 4294901760
    %652 = vmatpush1.msra.mxu0 %v651
    %653 = vmatprep.subr.mxu0 0.0
    %v654 = vand.u32 %v111, 4294901760
    %v655 = vsub.f32 %v111, %v654
    %v656 = vand.u32 %v655, 4294901760
    %657 = vmatpush1.msra.mxu0 %v656
    %658 = vmatprep.subr.mxu0 0.0
    %659 = vmatpush1.msra.mxu0 0.0
    %660 = vmatprep.subr.mxu0 0.0
    %661 = vmatpush1.msra.mxu0 0.0
    %662 = vmatprep.subr.mxu0 0.0
    %663 = vmatpush1.msra.mxu0 0.0
    %664 = vmatprep.subr.mxu0 0.0
    %665 = vmatpush1.msra.mxu0 0.0
    %666 = vmatprep.subr.mxu0 0.0
    %667 = vmatpush1.msra.mxu0 0.0
    %668 = vmatprep.subr.mxu0 0.0
    %669 = vmatpush1.msra.mxu0 0.0
    %670 = vmatprep.subr.mxu0 0.0
    %671 = vmatpush1.msra.mxu0 0.0
    %672 = vmatprep.subr.mxu0 0.0
    %673 = vmatpush1.msra.mxu0 0.0
    %674 = vmatprep.subr.mxu0 0.0
    %675 = vmatpush1.msra.mxu0 0.0
    %676 = vmatprep.subr.mxu0 0.0
    %677 = vmatpush1.msra.mxu0 0.0
    %678 = vmatprep.subr.mxu0 0.0
    %679 = vmatpush1.msra.mxu0 0.0
    %680 = vmatprep.subr.mxu0 0.0
    %681 = vmatpush1.msra.mxu0 0.0
    %682 = vmatprep.subr.mxu0 0.0
    %683 = vmatpush1.msra.mxu0 0.0
    %684 = vmatprep.subr.mxu0 0.0
    %685 = vmatpush1.msra.mxu0 0.0
    %686 = vmatprep.subr.mxu0 0.0
    %687 = vmatpush1.msra.mxu0 0.0
    %688 = vmatprep.subr.mxu0 0.0
    %689 = vmatpush1.msra.mxu0 0.0
    %690 = vmatprep.mubr.f32.mxu0 0.0
    %v691 = vand.u32 %v78, 4294901760
    %692 = vmatmul.mubr.f32.gmra.mrb[0].mxu0 %v691
    %v693 = vpop.f32.mrb[0].mxu0
    %v694 = vadd.f32 %v567, %v693
    %v695 = vpop.f32.mrb[0].mxu0
    %696 = vmatprep.mubr.f32.mxu0 0.0
    %v697 = vand.u32 %v79, 4294901760
    %698 = vmatmul.mubr.f32.gmra.mrb[0].mxu0 %v697
    %v699 = vpop.f32.mrb[0].mxu0
    %v700 = vadd.f32 %v575, %v699
    %v701 = vpop.f32.mrb[0].mxu0
    %702 = vdwg.mxu0
    %703 = vmatprep.subr.mxu0 0.0
    %v704 = vand.u32 %v96, 4294901760
    %705 = vmatpush1.msra.mxu0 %v704
    %706 = vmatprep.subr.mxu0 0.0
    %v707 = vand.u32 %v97, 4294901760
    %708 = vmatpush1.msra.mxu0 %v707
    %709 = vmatprep.subr.mxu0 0.0
    %v710 = vand.u32 %v98, 4294901760
    %711 = vmatpush1.msra.mxu0 %v710
    %712 = vmatprep.subr.mxu0 0.0
    %v713 = vand.u32 %v99, 4294901760
    %714 = vmatpush1.msra.mxu0 %v713
    %715 = vmatprep.subr.mxu0 0.0
    %v716 = vand.u32 %v100, 4294901760
    %717 = vmatpush1.msra.mxu0 %v716
    %718 = vmatprep.subr.mxu0 0.0
    %v719 = vand.u32 %v101, 4294901760
    %720 = vmatpush1.msra.mxu0 %v719
    %721 = vmatprep.subr.mxu0 0.0
    %v722 = vand.u32 %v102, 4294901760
    %723 = vmatpush1.msra.mxu0 %v722
    %724 = vmatprep.subr.mxu0 0.0
    %v725 = vand.u32 %v103, 4294901760
    %726 = vmatpush1.msra.mxu0 %v725
    %727 = vmatprep.subr.mxu0 0.0
    %v728 = vand.u32 %v104, 4294901760
    %729 = vmatpush1.msra.mxu0 %v728
    %730 = vmatprep.subr.mxu0 0.0
    %v731 = vand.u32 %v105, 4294901760
    %732 = vmatpush1.msra.mxu0 %v731
    %733 = vmatprep.subr.mxu0 0.0
    %v734 = vand.u32 %v106, 4294901760
    %735 = vmatpush1.msra.mxu0 %v734
    %736 = vmatprep.subr.mxu0 0.0
    %v737 = vand.u32 %v107, 4294901760
    %738 = vmatpush1.msra.mxu0 %v737
    %739 = vmatprep.subr.mxu0 0.0
    %v740 = vand.u32 %v108, 4294901760
    %741 = vmatpush1.msra.mxu0 %v740
    %742 = vmatprep.subr.mxu0 0.0
    %v743 = vand.u32 %v109, 4294901760
    %744 = vmatpush1.msra.mxu0 %v743
    %745 = vmatprep.subr.mxu0 0.0
    %v746 = vand.u32 %v110, 4294901760
    %747 = vmatpush1.msra.mxu0 %v746
    %748 = vmatprep.subr.mxu0 0.0
    %v749 = vand.u32 %v111, 4294901760
    %750 = vmatpush1.msra.mxu0 %v749
    %751 = vmatprep.subr.mxu0 0.0
    %752 = vmatpush1.msra.mxu0 0.0
    %753 = vmatprep.subr.mxu0 0.0
    %754 = vmatpush1.msra.mxu0 0.0
    %755 = vmatprep.subr.mxu0 0.0
    %756 = vmatpush1.msra.mxu0 0.0
    %757 = vmatprep.subr.mxu0 0.0
    %758 = vmatpush1.msra.mxu0 0.0
    %759 = vmatprep.subr.mxu0 0.0
    %760 = vmatpush1.msra.mxu0 0.0
    %761 = vmatprep.subr.mxu0 0.0
    %762 = vmatpush1.msra.mxu0 0.0
    %763 = vmatprep.subr.mxu0 0.0
    %764 = vmatpush1.msra.mxu0 0.0
    %765 = vmatprep.subr.mxu0 0.0
    %766 = vmatpush1.msra.mxu0 0.0
    %767 = vmatprep.subr.mxu0 0.0
    %768 = vmatpush1.msra.mxu0 0.0
    %769 = vmatprep.subr.mxu0 0.0
    %770 = vmatpush1.msra.mxu0 0.0
    %771 = vmatprep.subr.mxu0 0.0
    %772 = vmatpush1.msra.mxu0 0.0
    %773 = vmatprep.subr.mxu0 0.0
    %774 = vmatpush1.msra.mxu0 0.0
    %775 = vmatprep.subr.mxu0 0.0
    %776 = vmatpush1.msra.mxu0 0.0
    %777 = vmatprep.subr.mxu0 0.0
    %778 = vmatpush1.msra.mxu0 0.0
    %779 = vmatprep.subr.mxu0 0.0
    %780 = vmatpush1.msra.mxu0 0.0
    %781 = vmatprep.subr.mxu0 0.0
    %782 = vmatpush1.msra.mxu0 0.0
    %783 = vmatprep.mubr.f32.mxu0 0.0
    %v784 = vand.u32 %v78, 4294901760
    %785 = vmatmul.mubr.f32.gmra.mrb[0].mxu0 %v784
    %v786 = vpop.f32.mrb[0].mxu0
    %v787 = vadd.f32 %v694, %v786
    %v788 = vpop.f32.mrb[0].mxu0
    %789 = vmatprep.mubr.f32.mxu0 0.0
    %v790 = vand.u32 %v79, 4294901760
    %791 = vmatmul.mubr.f32.gmra.mrb[0].mxu0 %v790
    %v792 = vpop.f32.mrb[0].mxu0
    %v793 = vadd.f32 %v700, %v792
    %v794 = vpop.f32.mrb[0].mxu0
    %795 = vdwg.mxu0
    %796 = vmatprep.subr.mxu0 0.0
    %v797 = vand.u32 %v80, 4294901760
    %798 = vmatpush1.msra.mxu0 %v797
    %799 = vmatprep.subr.mxu0 0.0
    %v800 = vand.u32 %v81, 4294901760
    %801 = vmatpush1.msra.mxu0 %v800
    %802 = vmatprep.subr.mxu0 0.0
    %v803 = vand.u32 %v82, 4294901760
    %804 = vmatpush1.msra.mxu0 %v803
    %805 = vmatprep.subr.mxu0 0.0
    %v806 = vand.u32 %v83, 4294901760
    %807 = vmatpush1.msra.mxu0 %v806
    %808 = vmatprep.subr.mxu0 0.0
    %v809 = vand.u32 %v84, 4294901760
    %810 = vmatpush1.msra.mxu0 %v809
    %811 = vmatprep.subr.mxu0 0.0
    %v812 = vand.u32 %v85, 4294901760
    %813 = vmatpush1.msra.mxu0 %v812
    %814 = vmatprep.subr.mxu0 0.0
    %v815 = vand.u32 %v86, 4294901760
    %816 = vmatpush1.msra.mxu0 %v815
    %817 = vmatprep.subr.mxu0 0.0
    %v818 = vand.u32 %v87, 4294901760
    %819 = vmatpush1.msra.mxu0 %v818
    %820 = vmatprep.subr.mxu0 0.0
    %v821 = vand.u32 %v88, 4294901760
    %822 = vmatpush1.msra.mxu0 %v821
    %823 = vmatprep.subr.mxu0 0.0
    %v824 = vand.u32 %v89, 4294901760
    %825 = vmatpush1.msra.mxu0 %v824
    %826 = vmatprep.subr.mxu0 0.0
    %v827 = vand.u32 %v90, 4294901760
    %828 = vmatpush1.msra.mxu0 %v827
    %829 = vmatprep.subr.mxu0 0.0
    %v830 = vand.u32 %v91, 4294901760
    %831 = vmatpush1.msra.mxu0 %v830
    %832 = vmatprep.subr.mxu0 0.0
    %v833 = vand.u32 %v92, 4294901760
    %834 = vmatpush1.msra.mxu0 %v833
    %835 = vmatprep.subr.mxu0 0.0
    %v836 = vand.u32 %v93, 4294901760
    %837 = vmatpush1.msra.mxu0 %v836
    %838 = vmatprep.subr.mxu0 0.0
    %v839 = vand.u32 %v94, 4294901760
    %840 = vmatpush1.msra.mxu0 %v839
    %841 = vmatprep.subr.mxu0 0.0
    %v842 = vand.u32 %v95, 4294901760
    %843 = vmatpush1.msra.mxu0 %v842
    %844 = vmatprep.subr.mxu0 0.0
    %845 = vmatpush1.msra.mxu0 0.0
    %846 = vmatprep.subr.mxu0 0.0
    %847 = vmatpush1.msra.mxu0 0.0
    %848 = vmatprep.subr.mxu0 0.0
    %849 = vmatpush1.msra.mxu0 0.0
    %850 = vmatprep.subr.mxu0 0.0
    %851 = vmatpush1.msra.mxu0 0.0
    %852 = vmatprep.subr.mxu0 0.0
    %853 = vmatpush1.msra.mxu0 0.0
    %854 = vmatprep.subr.mxu0 0.0
    %855 = vmatpush1.msra.mxu0 0.0
    %856 = vmatprep.subr.mxu0 0.0
    %857 = vmatpush1.msra.mxu0 0.0
    %858 = vmatprep.subr.mxu0 0.0
    %859 = vmatpush1.msra.mxu0 0.0
    %860 = vmatprep.subr.mxu0 0.0
    %861 = vmatpush1.msra.mxu0 0.0
    %862 = vmatprep.subr.mxu0 0.0
    %863 = vmatpush1.msra.mxu0 0.0
    %864 = vmatprep.subr.mxu0 0.0
    %865 = vmatpush1.msra.mxu0 0.0
    %866 = vmatprep.subr.mxu0 0.0
    %867 = vmatpush1.msra.mxu0 0.0
    %868 = vmatprep.subr.mxu0 0.0
    %869 = vmatpush1.msra.mxu0 0.0
    %870 = vmatprep.subr.mxu0 0.0
    %871 = vmatpush1.msra.mxu0 0.0
    %872 = vmatprep.subr.mxu0 0.0
    %873 = vmatpush1.msra.mxu0 0.0
    %874 = vmatprep.subr.mxu0 0.0
    %875 = vmatpush1.msra.mxu0 0.0
    %876 = vmatprep.mubr.f32.mxu0 0.0
    %v877 = vand.u32 %v76, 4294901760
    %v878 = vsub.f32 %v76, %v877
    %v879 = vand.u32 %v878, 4294901760
    %v880 = vsub.f32 %v878, %v879
    %v881 = vand.u32 %v880, 4294901760
    %882 = vmatmul.mubr.f32.gmra.mrb[0].mxu0 %v881
    %v883 = vpop.f32.mrb[0].mxu0
    %v884 = vadd.f32 %v787, %v883
    %v885 = vpop.f32.mrb[0].mxu0
    %886 = vmatprep.mubr.f32.mxu0 0.0
    %v887 = vand.u32 %v77, 4294901760
    %v888 = vsub.f32 %v77, %v887
    %v889 = vand.u32 %v888, 4294901760
    %v890 = vsub.f32 %v888, %v889
    %v891 = vand.u32 %v890, 4294901760
    %892 = vmatmul.mubr.f32.gmra.mrb[0].mxu0 %v891
    %v893 = vpop.f32.mrb[0].mxu0
    %v894 = vadd.f32 %v793, %v893
    %v895 = vpop.f32.mrb[0].mxu0
    %896 = vdwg.mxu0
    %897 = vmatprep.subr.mxu0 0.0
    %v898 = vand.u32 %v80, 4294901760
    %v899 = vsub.f32 %v80, %v898
    %v900 = vand.u32 %v899, 4294901760
    %v901 = vsub.f32 %v899, %v900
    %v902 = vand.u32 %v901, 4294901760
    %903 = vmatpush1.msra.mxu0 %v902
    %904 = vmatprep.subr.mxu0 0.0
    %v905 = vand.u32 %v81, 4294901760
    %v906 = vsub.f32 %v81, %v905
    %v907 = vand.u32 %v906, 4294901760
    %v908 = vsub.f32 %v906, %v907
    %v909 = vand.u32 %v908, 4294901760
    %910 = vmatpush1.msra.mxu0 %v909
    %911 = vmatprep.subr.mxu0 0.0
    %v912 = vand.u32 %v82, 4294901760
    %v913 = vsub.f32 %v82, %v912
    %v914 = vand.u32 %v913, 4294901760
    %v915 = vsub.f32 %v913, %v914
    %v916 = vand.u32 %v915, 4294901760
    %917 = vmatpush1.msra.mxu0 %v916
    %918 = vmatprep.subr.mxu0 0.0
    %v919 = vand.u32 %v83, 4294901760
    %v920 = vsub.f32 %v83, %v919
    %v921 = vand.u32 %v920, 4294901760
    %v922 = vsub.f32 %v920, %v921
    %v923 = vand.u32 %v922, 4294901760
    %924 = vmatpush1.msra.mxu0 %v923
    %925 = vmatprep.subr.mxu0 0.0
    %v926 = vand.u32 %v84, 4294901760
    %v927 = vsub.f32 %v84, %v926
    %v928 = vand.u32 %v927, 4294901760
    %v929 = vsub.f32 %v927, %v928
    %v930 = vand.u32 %v929, 4294901760
    %931 = vmatpush1.msra.mxu0 %v930
    %932 = vmatprep.subr.mxu0 0.0
    %v933 = vand.u32 %v85, 4294901760
    %v934 = vsub.f32 %v85, %v933
    %v935 = vand.u32 %v934, 4294901760
    %v936 = vsub.f32 %v934, %v935
    %v937 = vand.u32 %v936, 4294901760
    %938 = vmatpush1.msra.mxu0 %v937
    %939 = vmatprep.subr.mxu0 0.0
    %v940 = vand.u32 %v86, 4294901760
    %v941 = vsub.f32 %v86, %v940
    %v942 = vand.u32 %v941, 4294901760
    %v943 = vsub.f32 %v941, %v942
    %v944 = vand.u32 %v943, 4294901760
    %945 = vmatpush1.msra.mxu0 %v944
    %946 = vmatprep.subr.mxu0 0.0
    %v947 = vand.u32 %v87, 4294901760
    %v948 = vsub.f32 %v87, %v947
    %v949 = vand.u32 %v948, 4294901760
    %v950 = vsub.f32 %v948, %v949
    %v951 = vand.u32 %v950, 4294901760
    %952 = vmatpush1.msra.mxu0 %v951
    %953 = vmatprep.subr.mxu0 0.0
    %v954 = vand.u32 %v88, 4294901760
    %v955 = vsub.f32 %v88, %v954
    %v956 = vand.u32 %v955, 4294901760
    %v957 = vsub.f32 %v955, %v956
    %v958 = vand.u32 %v957, 4294901760
    %959 = vmatpush1.msra.mxu0 %v958
    %960 = vmatprep.subr.mxu0 0.0
    %v961 = vand.u32 %v89, 4294901760
    %v962 = vsub.f32 %v89, %v961
    %v963 = vand.u32 %v962, 4294901760
    %v964 = vsub.f32 %v962, %v963
    %v965 = vand.u32 %v964, 4294901760
    %966 = vmatpush1.msra.mxu0 %v965
    %967 = vmatprep.subr.mxu0 0.0
    %v968 = vand.u32 %v90, 4294901760
    %v969 = vsub.f32 %v90, %v968
    %v970 = vand.u32 %v969, 4294901760
    %v971 = vsub.f32 %v969, %v970
    %v972 = vand.u32 %v971, 4294901760
    %973 = vmatpush1.msra.mxu0 %v972
    %974 = vmatprep.subr.mxu0 0.0
    %v975 = vand.u32 %v91, 4294901760
    %v976 = vsub.f32 %v91, %v975
    %v977 = vand.u32 %v976, 4294901760
    %v978 = vsub.f32 %v976, %v977
    %v979 = vand.u32 %v978, 4294901760
    %980 = vmatpush1.msra.mxu0 %v979
    %981 = vmatprep.subr.mxu0 0.0
    %v982 = vand.u32 %v92, 4294901760
    %v983 = vsub.f32 %v92, %v982
    %v984 = vand.u32 %v983, 4294901760
    %v985 = vsub.f32 %v983, %v984
    %v986 = vand.u32 %v985, 4294901760
    %987 = vmatpush1.msra.mxu0 %v986
    %988 = vmatprep.subr.mxu0 0.0
    %v989 = vand.u32 %v93, 4294901760
    %v990 = vsub.f32 %v93, %v989
    %v991 = vand.u32 %v990, 4294901760
    %v992 = vsub.f32 %v990, %v991
    %v993 = vand.u32 %v992, 4294901760
    %994 = vmatpush1.msra.mxu0 %v993
    %995 = vmatprep.subr.mxu0 0.0
    %v996 = vand.u32 %v94, 4294901760
    %v997 = vsub.f32 %v94, %v996
    %v998 = vand.u32 %v997, 4294901760
    %v999 = vsub.f32 %v997, %v998
    %v1000 = vand.u32 %v999, 4294901760
    %1001 = vmatpush1.msra.mxu0 %v1000
    %1002 = vmatprep.subr.mxu0 0.0
    %v1003 = vand.u32 %v95, 4294901760
    %v1004 = vsub.f32 %v95, %v1003
    %v1005 = vand.u32 %v1004, 4294901760
    %v1006 = vsub.f32 %v1004, %v1005
    %v1007 = vand.u32 %v1006, 4294901760
    %1008 = vmatpush1.msra.mxu0 %v1007
    %1009 = vmatprep.subr.mxu0 0.0
    %1010 = vmatpush1.msra.mxu0 0.0
    %1011 = vmatprep.subr.mxu0 0.0
    %1012 = vmatpush1.msra.mxu0 0.0
    %1013 = vmatprep.subr.mxu0 0.0
    %1014 = vmatpush1.msra.mxu0 0.0
    %1015 = vmatprep.subr.mxu0 0.0
    %1016 = vmatpush1.msra.mxu0 0.0
    %1017 = vmatprep.subr.mxu0 0.0
    %1018 = vmatpush1.msra.mxu0 0.0
    %1019 = vmatprep.subr.mxu0 0.0
    %1020 = vmatpush1.msra.mxu0 0.0
    %1021 = vmatprep.subr.mxu0 0.0
    %1022 = vmatpush1.msra.mxu0 0.0
    %1023 = vmatprep.subr.mxu0 0.0
    %1024 = vmatpush1.msra.mxu0 0.0
    %1025 = vmatprep.subr.mxu0 0.0
    %1026 = vmatpush1.msra.mxu0 0.0
    %1027 = vmatprep.subr.mxu0 0.0
    %1028 = vmatpush1.msra.mxu0 0.0
    %1029 = vmatprep.subr.mxu0 0.0
    %1030 = vmatpush1.msra.mxu0 0.0
    %1031 = vmatprep.subr.mxu0 0.0
    %1032 = vmatpush1.msra.mxu0 0.0
    %1033 = vmatprep.subr.mxu0 0.0
    %1034 = vmatpush1.msra.mxu0 0.0
    %1035 = vmatprep.subr.mxu0 0.0
    %1036 = vmatpush1.msra.mxu0 0.0
    %1037 = vmatprep.subr.mxu0 0.0
    %1038 = vmatpush1.msra.mxu0 0.0
    %1039 = vmatprep.subr.mxu0 0.0
    %1040 = vmatpush1.msra.mxu0 0.0
    %1041 = vmatprep.mubr.f32.mxu0 0.0
    %v1042 = vand.u32 %v76, 4294901760
    %1043 = vmatmul.mubr.f32.gmra.mrb[0].mxu0 %v1042
    %v1044 = vpop.f32.mrb[0].mxu0
    %v1045 = vadd.f32 %v884, %v1044
    %v1046 = vpop.f32.mrb[0].mxu0
    %1047 = vmatprep.mubr.f32.mxu0 0.0
    %v1048 = vand.u32 %v77, 4294901760
    %1049 = vmatmul.mubr.f32.gmra.mrb[0].mxu0 %v1048
    %v1050 = vpop.f32.mrb[0].mxu0
    %v1051 = vadd.f32 %v894, %v1050
    %v1052 = vpop.f32.mrb[0].mxu0
    %1053 = vdwg.mxu0
    %1054 = vmatprep.subr.mxu0 0.0
    %v1055 = vand.u32 %v80, 4294901760
    %v1056 = vsub.f32 %v80, %v1055
    %1057 = vmatpush1.msra.mxu0 %v1056
    %1058 = vmatprep.subr.mxu0 0.0
    %v1059 = vand.u32 %v81, 4294901760
    %v1060 = vsub.f32 %v81, %v1059
    %1061 = vmatpush1.msra.mxu0 %v1060
    %1062 = vmatprep.subr.mxu0 0.0
    %v1063 = vand.u32 %v82, 4294901760
    %v1064 = vsub.f32 %v82, %v1063
    %1065 = vmatpush1.msra.mxu0 %v1064
    %1066 = vmatprep.subr.mxu0 0.0
    %v1067 = vand.u32 %v83, 4294901760
    %v1068 = vsub.f32 %v83, %v1067
    %1069 = vmatpush1.msra.mxu0 %v1068
    %1070 = vmatprep.subr.mxu0 0.0
    %v1071 = vand.u32 %v84, 4294901760
    %v1072 = vsub.f32 %v84, %v1071
    %1073 = vmatpush1.msra.mxu0 %v1072
    %1074 = vmatprep.subr.mxu0 0.0
    %v1075 = vand.u32 %v85, 4294901760
    %v1076 = vsub.f32 %v85, %v1075
    %1077 = vmatpush1.msra.mxu0 %v1076
    %1078 = vmatprep.subr.mxu0 0.0
    %v1079 = vand.u32 %v86, 4294901760
    %v1080 = vsub.f32 %v86, %v1079
    %1081 = vmatpush1.msra.mxu0 %v1080
    %1082 = vmatprep.subr.mxu0 0.0
    %v1083 = vand.u32 %v87, 4294901760
    %v1084 = vsub.f32 %v87, %v1083
    %1085 = vmatpush1.msra.mxu0 %v1084
    %1086 = vmatprep.subr.mxu0 0.0
    %v1087 = vand.u32 %v88, 4294901760
    %v1088 = vsub.f32 %v88, %v1087
    %1089 = vmatpush1.msra.mxu0 %v1088
    %1090 = vmatprep.subr.mxu0 0.0
    %v1091 = vand.u32 %v89, 4294901760
    %v1092 = vsub.f32 %v89, %v1091
    %1093 = vmatpush1.msra.mxu0 %v1092
    %1094 = vmatprep.subr.mxu0 0.0
    %v1095 = vand.u32 %v90, 4294901760
    %v1096 = vsub.f32 %v90, %v1095
    %1097 = vmatpush1.msra.mxu0 %v1096
    %1098 = vmatprep.subr.mxu0 0.0
    %v1099 = vand.u32 %v91, 4294901760
    %v1100 = vsub.f32 %v91, %v1099
    %1101 = vmatpush1.msra.mxu0 %v1100
    %1102 = vmatprep.subr.mxu0 0.0
    %v1103 = vand.u32 %v92, 4294901760
    %v1104 = vsub.f32 %v92, %v1103
    %1105 = vmatpush1.msra.mxu0 %v1104
    %1106 = vmatprep.subr.mxu0 0.0
    %v1107 = vand.u32 %v93, 4294901760
    %v1108 = vsub.f32 %v93, %v1107
    %1109 = vmatpush1.msra.mxu0 %v1108
    %1110 = vmatprep.subr.mxu0 0.0
    %v1111 = vand.u32 %v94, 4294901760
    %v1112 = vsub.f32 %v94, %v1111
    %1113 = vmatpush1.msra.mxu0 %v1112
    %1114 = vmatprep.subr.mxu0 0.0
    %v1115 = vand.u32 %v95, 4294901760
    %v1116 = vsub.f32 %v95, %v1115
    %1117 = vmatpush1.msra.mxu0 %v1116
    %1118 = vmatprep.subr.mxu0 0.0
    %1119 = vmatpush1.msra.mxu0 0.0
    %1120 = vmatprep.subr.mxu0 0.0
    %1121 = vmatpush1.msra.mxu0 0.0
    %1122 = vmatprep.subr.mxu0 0.0
    %1123 = vmatpush1.msra.mxu0 0.0
    %1124 = vmatprep.subr.mxu0 0.0
    %1125 = vmatpush1.msra.mxu0 0.0
    %1126 = vmatprep.subr.mxu0 0.0
    %1127 = vmatpush1.msra.mxu0 0.0
    %1128 = vmatprep.subr.mxu0 0.0
    %1129 = vmatpush1.msra.mxu0 0.0
    %1130 = vmatprep.subr.mxu0 0.0
    %1131 = vmatpush1.msra.mxu0 0.0
    %1132 = vmatprep.subr.mxu0 0.0
    %1133 = vmatpush1.msra.mxu0 0.0
    %1134 = vmatprep.subr.mxu0 0.0
    %1135 = vmatpush1.msra.mxu0 0.0
    %1136 = vmatprep.subr.mxu0 0.0
    %1137 = vmatpush1.msra.mxu0 0.0
    %1138 = vmatprep.subr.mxu0 0.0
    %1139 = vmatpush1.msra.mxu0 0.0
    %1140 = vmatprep.subr.mxu0 0.0
    %1141 = vmatpush1.msra.mxu0 0.0
    %1142 = vmatprep.subr.mxu0 0.0
    %1143 = vmatpush1.msra.mxu0 0.0
    %1144 = vmatprep.subr.mxu0 0.0
    %1145 = vmatpush1.msra.mxu0 0.0
    %1146 = vmatprep.subr.mxu0 0.0
    %1147 = vmatpush1.msra.mxu0 0.0
    %1148 = vmatprep.subr.mxu0 0.0
    %1149 = vmatpush1.msra.mxu0 0.0
    %1150 = vmatprep.mubr.f32.mxu0 0.0
    %v1151 = vand.u32 %v76, 4294901760
    %v1152 = vsub.f32 %v76, %v1151
    %1153 = vmatmul.mubr.f32.gmra.mrb[0].mxu0 %v1152
    %v1154 = vpop.f32.mrb[0].mxu0
    %v1155 = vadd.f32 %v1045, %v1154
    %v1156 = vpop.f32.mrb[0].mxu0
    %1157 = vmatprep.mubr.f32.mxu0 0.0
    %v1158 = vand.u32 %v77, 4294901760
    %v1159 = vsub.f32 %v77, %v1158
    %1160 = vmatmul.mubr.f32.gmra.mrb[0].mxu0 %v1159
    %v1161 = vpop.f32.mrb[0].mxu0
    %v1162 = vadd.f32 %v1051, %v1161
    %v1163 = vpop.f32.mrb[0].mxu0
    %1164 = vdwg.mxu0
    %1165 = vmatprep.subr.mxu0 0.0
    %v1166 = vand.u32 %v80, 4294901760
    %1167 = vmatpush1.msra.mxu0 %v1166
    %1168 = vmatprep.subr.mxu0 0.0
    %v1169 = vand.u32 %v81, 4294901760
    %1170 = vmatpush1.msra.mxu0 %v1169
    %1171 = vmatprep.subr.mxu0 0.0
    %v1172 = vand.u32 %v82, 4294901760
    %1173 = vmatpush1.msra.mxu0 %v1172
    %1174 = vmatprep.subr.mxu0 0.0
    %v1175 = vand.u32 %v83, 4294901760
    %1176 = vmatpush1.msra.mxu0 %v1175
    %1177 = vmatprep.subr.mxu0 0.0
    %v1178 = vand.u32 %v84, 4294901760
    %1179 = vmatpush1.msra.mxu0 %v1178
    %1180 = vmatprep.subr.mxu0 0.0
    %v1181 = vand.u32 %v85, 4294901760
    %1182 = vmatpush1.msra.mxu0 %v1181
    %1183 = vmatprep.subr.mxu0 0.0
    %v1184 = vand.u32 %v86, 4294901760
    %1185 = vmatpush1.msra.mxu0 %v1184
    %1186 = vmatprep.subr.mxu0 0.0
    %v1187 = vand.u32 %v87, 4294901760
    %1188 = vmatpush1.msra.mxu0 %v1187
    %1189 = vmatprep.subr.mxu0 0.0
    %v1190 = vand.u32 %v88, 4294901760
    %1191 = vmatpush1.msra.mxu0 %v1190
    %1192 = vmatprep.subr.mxu0 0.0
    %v1193 = vand.u32 %v89, 4294901760
    %1194 = vmatpush1.msra.mxu0 %v1193
    %1195 = vmatprep.subr.mxu0 0.0
    %v1196 = vand.u32 %v90, 4294901760
    %1197 = vmatpush1.msra.mxu0 %v1196
    %1198 = vmatprep.subr.mxu0 0.0
    %v1199 = vand.u32 %v91, 4294901760
    %1200 = vmatpush1.msra.mxu0 %v1199
    %1201 = vmatprep.subr.mxu0 0.0
    %v1202 = vand.u32 %v92, 4294901760
    %1203 = vmatpush1.msra.mxu0 %v1202
    %1204 = vmatprep.subr.mxu0 0.0
    %v1205 = vand.u32 %v93, 4294901760
    %1206 = vmatpush1.msra.mxu0 %v1205
    %1207 = vmatprep.subr.mxu0 0.0
    %v1208 = vand.u32 %v94, 4294901760
    %1209 = vmatpush1.msra.mxu0 %v1208
    %1210 = vmatprep.subr.mxu0 0.0
    %v1211 = vand.u32 %v95, 4294901760
    %1212 = vmatpush1.msra.mxu0 %v1211
    %1213 = vmatprep.subr.mxu0 0.0
    %1214 = vmatpush1.msra.mxu0 0.0
    %1215 = vmatprep.subr.mxu0 0.0
    %1216 = vmatpush1.msra.mxu0 0.0
    %1217 = vmatprep.subr.mxu0 0.0
    %1218 = vmatpush1.msra.mxu0 0.0
    %1219 = vmatprep.subr.mxu0 0.0
    %1220 = vmatpush1.msra.mxu0 0.0
    %1221 = vmatprep.subr.mxu0 0.0
    %1222 = vmatpush1.msra.mxu0 0.0
    %1223 = vmatprep.subr.mxu0 0.0
    %1224 = vmatpush1.msra.mxu0 0.0
    %1225 = vmatprep.subr.mxu0 0.0
    %1226 = vmatpush1.msra.mxu0 0.0
    %1227 = vmatprep.subr.mxu0 0.0
    %1228 = vmatpush1.msra.mxu0 0.0
    %1229 = vmatprep.subr.mxu0 0.0
    %1230 = vmatpush1.msra.mxu0 0.0
    %1231 = vmatprep.subr.mxu0 0.0
    %1232 = vmatpush1.msra.mxu0 0.0
    %1233 = vmatprep.subr.mxu0 0.0
    %1234 = vmatpush1.msra.mxu0 0.0
    %1235 = vmatprep.subr.mxu0 0.0
    %1236 = vmatpush1.msra.mxu0 0.0
    %1237 = vmatprep.subr.mxu0 0.0
    %1238 = vmatpush1.msra.mxu0 0.0
    %1239 = vmatprep.subr.mxu0 0.0
    %1240 = vmatpush1.msra.mxu0 0.0
    %1241 = vmatprep.subr.mxu0 0.0
    %1242 = vmatpush1.msra.mxu0 0.0
    %1243 = vmatprep.subr.mxu0 0.0
    %1244 = vmatpush1.msra.mxu0 0.0
    %1245 = vmatprep.mubr.f32.mxu0 0.0
    %v1246 = vand.u32 %v76, 4294901760
    %v1247 = vsub.f32 %v76, %v1246
    %v1248 = vand.u32 %v1247, 4294901760
    %1249 = vmatmul.mubr.f32.gmra.mrb[0].mxu0 %v1248
    %v1250 = vpop.f32.mrb[0].mxu0
    %v1251 = vadd.f32 %v1155, %v1250
    %v1252 = vpop.f32.mrb[0].mxu0
    %1253 = vmatprep.mubr.f32.mxu0 0.0
    %v1254 = vand.u32 %v77, 4294901760
    %v1255 = vsub.f32 %v77, %v1254
    %v1256 = vand.u32 %v1255, 4294901760
    %1257 = vmatmul.mubr.f32.gmra.mrb[0].mxu0 %v1256
    %v1258 = vpop.f32.mrb[0].mxu0
    %v1259 = vadd.f32 %v1162, %v1258
    %v1260 = vpop.f32.mrb[0].mxu0
    %1261 = vdwg.mxu0
    %1262 = vmatprep.subr.mxu0 0.0
    %v1263 = vand.u32 %v80, 4294901760
    %v1264 = vsub.f32 %v80, %v1263
    %v1265 = vand.u32 %v1264, 4294901760
    %1266 = vmatpush1.msra.mxu0 %v1265
    %1267 = vmatprep.subr.mxu0 0.0
    %v1268 = vand.u32 %v81, 4294901760
    %v1269 = vsub.f32 %v81, %v1268
    %v1270 = vand.u32 %v1269, 4294901760
    %1271 = vmatpush1.msra.mxu0 %v1270
    %1272 = vmatprep.subr.mxu0 0.0
    %v1273 = vand.u32 %v82, 4294901760
    %v1274 = vsub.f32 %v82, %v1273
    %v1275 = vand.u32 %v1274, 4294901760
    %1276 = vmatpush1.msra.mxu0 %v1275
    %1277 = vmatprep.subr.mxu0 0.0
    %v1278 = vand.u32 %v83, 4294901760
    %v1279 = vsub.f32 %v83, %v1278
    %v1280 = vand.u32 %v1279, 4294901760
    %1281 = vmatpush1.msra.mxu0 %v1280
    %1282 = vmatprep.subr.mxu0 0.0
    %v1283 = vand.u32 %v84, 4294901760
    %v1284 = vsub.f32 %v84, %v1283
    %v1285 = vand.u32 %v1284, 4294901760
    %1286 = vmatpush1.msra.mxu0 %v1285
    %1287 = vmatprep.subr.mxu0 0.0
    %v1288 = vand.u32 %v85, 4294901760
    %v1289 = vsub.f32 %v85, %v1288
    %v1290 = vand.u32 %v1289, 4294901760
    %1291 = vmatpush1.msra.mxu0 %v1290
    %1292 = vmatprep.subr.mxu0 0.0
    %v1293 = vand.u32 %v86, 4294901760
    %v1294 = vsub.f32 %v86, %v1293
    %v1295 = vand.u32 %v1294, 4294901760
    %1296 = vmatpush1.msra.mxu0 %v1295
    %1297 = vmatprep.subr.mxu0 0.0
    %v1298 = vand.u32 %v87, 4294901760
    %v1299 = vsub.f32 %v87, %v1298
    %v1300 = vand.u32 %v1299, 4294901760
    %1301 = vmatpush1.msra.mxu0 %v1300
    %1302 = vmatprep.subr.mxu0 0.0
    %v1303 = vand.u32 %v88, 4294901760
    %v1304 = vsub.f32 %v88, %v1303
    %v1305 = vand.u32 %v1304, 4294901760
    %1306 = vmatpush1.msra.mxu0 %v1305
    %1307 = vmatprep.subr.mxu0 0.0
    %v1308 = vand.u32 %v89, 4294901760
    %v1309 = vsub.f32 %v89, %v1308
    %v1310 = vand.u32 %v1309, 4294901760
    %1311 = vmatpush1.msra.mxu0 %v1310
    %1312 = vmatprep.subr.mxu0 0.0
    %v1313 = vand.u32 %v90, 4294901760
    %v1314 = vsub.f32 %v90, %v1313
    %v1315 = vand.u32 %v1314, 4294901760
    %1316 = vmatpush1.msra.mxu0 %v1315
    %1317 = vmatprep.subr.mxu0 0.0
    %v1318 = vand.u32 %v91, 4294901760
    %v1319 = vsub.f32 %v91, %v1318
    %v1320 = vand.u32 %v1319, 4294901760
    %1321 = vmatpush1.msra.mxu0 %v1320
    %1322 = vmatprep.subr.mxu0 0.0
    %v1323 = vand.u32 %v92, 4294901760
    %v1324 = vsub.f32 %v92, %v1323
    %v1325 = vand.u32 %v1324, 4294901760
    %1326 = vmatpush1.msra.mxu0 %v1325
    %1327 = vmatprep.subr.mxu0 0.0
    %v1328 = vand.u32 %v93, 4294901760
    %v1329 = vsub.f32 %v93, %v1328
    %v1330 = vand.u32 %v1329, 4294901760
    %1331 = vmatpush1.msra.mxu0 %v1330
    %1332 = vmatprep.subr.mxu0 0.0
    %v1333 = vand.u32 %v94, 4294901760
    %v1334 = vsub.f32 %v94, %v1333
    %v1335 = vand.u32 %v1334, 4294901760
    %1336 = vmatpush1.msra.mxu0 %v1335
    %1337 = vmatprep.subr.mxu0 0.0
    %v1338 = vand.u32 %v95, 4294901760
    %v1339 = vsub.f32 %v95, %v1338
    %v1340 = vand.u32 %v1339, 4294901760
    %1341 = vmatpush1.msra.mxu0 %v1340
    %1342 = vmatprep.subr.mxu0 0.0
    %1343 = vmatpush1.msra.mxu0 0.0
    %1344 = vmatprep.subr.mxu0 0.0
    %1345 = vmatpush1.msra.mxu0 0.0
    %1346 = vmatprep.subr.mxu0 0.0
    %1347 = vmatpush1.msra.mxu0 0.0
    %1348 = vmatprep.subr.mxu0 0.0
    %1349 = vmatpush1.msra.mxu0 0.0
    %1350 = vmatprep.subr.mxu0 0.0
    %1351 = vmatpush1.msra.mxu0 0.0
    %1352 = vmatprep.subr.mxu0 0.0
    %1353 = vmatpush1.msra.mxu0 0.0
    %1354 = vmatprep.subr.mxu0 0.0
    %1355 = vmatpush1.msra.mxu0 0.0
    %1356 = vmatprep.subr.mxu0 0.0
    %1357 = vmatpush1.msra.mxu0 0.0
    %1358 = vmatprep.subr.mxu0 0.0
    %1359 = vmatpush1.msra.mxu0 0.0
    %1360 = vmatprep.subr.mxu0 0.0
    %1361 = vmatpush1.msra.mxu0 0.0
    %1362 = vmatprep.subr.mxu0 0.0
    %1363 = vmatpush1.msra.mxu0 0.0
    %1364 = vmatprep.subr.mxu0 0.0
    %1365 = vmatpush1.msra.mxu0 0.0
    %1366 = vmatprep.subr.mxu0 0.0
    %1367 = vmatpush1.msra.mxu0 0.0
    %1368 = vmatprep.subr.mxu0 0.0
    %1369 = vmatpush1.msra.mxu0 0.0
    %1370 = vmatprep.subr.mxu0 0.0
    %1371 = vmatpush1.msra.mxu0 0.0
    %1372 = vmatprep.subr.mxu0 0.0
    %1373 = vmatpush1.msra.mxu0 0.0
    %1374 = vmatprep.mubr.f32.mxu0 0.0
    %v1375 = vand.u32 %v76, 4294901760
    %1376 = vmatmul.mubr.f32.gmra.mrb[0].mxu0 %v1375
    %v1377 = vpop.f32.mrb[0].mxu0
    %v1378 = vadd.f32 %v1251, %v1377
    %v1379 = vpop.f32.mrb[0].mxu0
    %1380 = vmatprep.mubr.f32.mxu0 0.0
    %v1381 = vand.u32 %v77, 4294901760
    %1382 = vmatmul.mubr.f32.gmra.mrb[0].mxu0 %v1381
    %v1383 = vpop.f32.mrb[0].mxu0
    %v1384 = vadd.f32 %v1259, %v1383
    %v1385 = vpop.f32.mrb[0].mxu0
    %1386 = vdwg.mxu0
    %1387 = vmatprep.subr.mxu0 0.0
    %v1388 = vand.u32 %v80, 4294901760
    %1389 = vmatpush1.msra.mxu0 %v1388
    %1390 = vmatprep.subr.mxu0 0.0
    %v1391 = vand.u32 %v81, 4294901760
    %1392 = vmatpush1.msra.mxu0 %v1391
    %1393 = vmatprep.subr.mxu0 0.0
    %v1394 = vand.u32 %v82, 4294901760
    %1395 = vmatpush1.msra.mxu0 %v1394
    %1396 = vmatprep.subr.mxu0 0.0
    %v1397 = vand.u32 %v83, 4294901760
    %1398 = vmatpush1.msra.mxu0 %v1397
    %1399 = vmatprep.subr.mxu0 0.0
    %v1400 = vand.u32 %v84, 4294901760
    %1401 = vmatpush1.msra.mxu0 %v1400
    %1402 = vmatprep.subr.mxu0 0.0
    %v1403 = vand.u32 %v85, 4294901760
    %1404 = vmatpush1.msra.mxu0 %v1403
    %1405 = vmatprep.subr.mxu0 0.0
    %v1406 = vand.u32 %v86, 4294901760
    %1407 = vmatpush1.msra.mxu0 %v1406
    %1408 = vmatprep.subr.mxu0 0.0
    %v1409 = vand.u32 %v87, 4294901760
    %1410 = vmatpush1.msra.mxu0 %v1409
    %1411 = vmatprep.subr.mxu0 0.0
    %v1412 = vand.u32 %v88, 4294901760
    %1413 = vmatpush1.msra.mxu0 %v1412
    %1414 = vmatprep.subr.mxu0 0.0
    %v1415 = vand.u32 %v89, 4294901760
    %1416 = vmatpush1.msra.mxu0 %v1415
    %1417 = vmatprep.subr.mxu0 0.0
    %v1418 = vand.u32 %v90, 4294901760
    %1419 = vmatpush1.msra.mxu0 %v1418
    %1420 = vmatprep.subr.mxu0 0.0
    %v1421 = vand.u32 %v91, 4294901760
    %1422 = vmatpush1.msra.mxu0 %v1421
    %1423 = vmatprep.subr.mxu0 0.0
    %v1424 = vand.u32 %v92, 4294901760
    %1425 = vmatpush1.msra.mxu0 %v1424
    %1426 = vmatprep.subr.mxu0 0.0
    %v1427 = vand.u32 %v93, 4294901760
    %1428 = vmatpush1.msra.mxu0 %v1427
    %1429 = vmatprep.subr.mxu0 0.0
    %v1430 = vand.u32 %v94, 4294901760
    %1431 = vmatpush1.msra.mxu0 %v1430
    %1432 = vmatprep.subr.mxu0 0.0
    %v1433 = vand.u32 %v95, 4294901760
    %1434 = vmatpush1.msra.mxu0 %v1433
    %1435 = vmatprep.subr.mxu0 0.0
    %1436 = vmatpush1.msra.mxu0 0.0
    %1437 = vmatprep.subr.mxu0 0.0
    %1438 = vmatpush1.msra.mxu0 0.0
    %1439 = vmatprep.subr.mxu0 0.0
    %1440 = vmatpush1.msra.mxu0 0.0
    %1441 = vmatprep.subr.mxu0 0.0
    %1442 = vmatpush1.msra.mxu0 0.0
    %1443 = vmatprep.subr.mxu0 0.0
    %1444 = vmatpush1.msra.mxu0 0.0
    %1445 = vmatprep.subr.mxu0 0.0
    %1446 = vmatpush1.msra.mxu0 0.0
    %1447 = vmatprep.subr.mxu0 0.0
    %1448 = vmatpush1.msra.mxu0 0.0
    %1449 = vmatprep.subr.mxu0 0.0
    %1450 = vmatpush1.msra.mxu0 0.0
    %1451 = vmatprep.subr.mxu0 0.0
    %1452 = vmatpush1.msra.mxu0 0.0
    %1453 = vmatprep.subr.mxu0 0.0
    %1454 = vmatpush1.msra.mxu0 0.0
    %1455 = vmatprep.subr.mxu0 0.0
    %1456 = vmatpush1.msra.mxu0 0.0
    %1457 = vmatprep.subr.mxu0 0.0
    %1458 = vmatpush1.msra.mxu0 0.0
    %1459 = vmatprep.subr.mxu0 0.0
    %1460 = vmatpush1.msra.mxu0 0.0
    %1461 = vmatprep.subr.mxu0 0.0
    %1462 = vmatpush1.msra.mxu0 0.0
    %1463 = vmatprep.subr.mxu0 0.0
    %1464 = vmatpush1.msra.mxu0 0.0
    %1465 = vmatprep.subr.mxu0 0.0
    %1466 = vmatpush1.msra.mxu0 0.0
    %1467 = vmatprep.mubr.f32.mxu0 0.0
    %v1468 = vand.u32 %v76, 4294901760
    %1469 = vmatmul.mubr.f32.gmra.mrb[0].mxu0 %v1468
    %v1470 = vpop.f32.mrb[0].mxu0
    %v1471 = vadd.f32 %v1378, %v1470
    %v1472 = vpop.f32.mrb[0].mxu0
    %1473 = vmatprep.mubr.f32.mxu0 0.0
    %v1474 = vand.u32 %v77, 4294901760
    %1475 = vmatmul.mubr.f32.gmra.mrb[0].mxu0 %v1474
    %v1476 = vpop.f32.mrb[0].mxu0
    %v1477 = vadd.f32 %v1384, %v1476
    %v1478 = vpop.f32.mrb[0].mxu0
    %1479 = vdwg.mxu0
    %v1480 = vld [vmem:[%s4] sm:$0x1]
    %v1482 = vlaneseq
    %v1483 = vshrl.u32 %v1482, 7
    %v1484 = vsub.s32 0, %v1483
    %v1485 = vrot.slane %v1480, %v1484
    %v1487 = vadd.f32 %v1471, %v1485
    %v1488 = vadd.f32 %v1477, %v1485
    %v1489 = vmul.f32 %v1487, %v1487
    %v1490 = vmul.f32 %v1488, %v1488
    %1491 = vadd.xlane.f32.xlu0 %v1489
    %v1492 = vpop.xlane.xlu0 %1491
    %1493 = vadd.xlane.f32.xlu0 %v1490
    %v1494 = vpop.xlane.xlu0 %1493
    %v1495 = vld [vmem:[%s6] sm:$0xff]
    %v1496 = vld [vmem:[%s6 + $0x8] sm:$0xff]
    %v1497 = vld [vmem:[%s6 + $0x10] sm:$0xff]
    %v1498 = vld [vmem:[%s6 + $0x18] sm:$0xff]
    %v1499 = vld [vmem:[%s6 + $0x20] sm:$0xff]
    %v1500 = vld [vmem:[%s6 + $0x28] sm:$0xff]
    %v1501 = vld [vmem:[%s6 + $0x30] sm:$0xff]
    %v1502 = vld [vmem:[%s6 + $0x38] sm:$0xff]
    %v1503 = vld [vmem:[%s6 + $0x40] sm:$0xff]
    %v1504 = vld [vmem:[%s6 + $0x48] sm:$0xff]
    %v1505 = vld [vmem:[%s6 + $0x50] sm:$0xff]
    %v1506 = vld [vmem:[%s6 + $0x58] sm:$0xff]
    %v1507 = vld [vmem:[%s6 + $0x60] sm:$0xff]
    %v1508 = vld [vmem:[%s6 + $0x68] sm:$0xff]
    %v1509 = vld [vmem:[%s6 + $0x70] sm:$0xff]
    %v1510 = vld [vmem:[%s6 + $0x78] sm:$0xff]
    %1511 = vmatprep.subr.mxu0 0.0
    %v1512 = vand.u32 %v1495, 4294901760
    %1513 = vmatpush1.msra.mxu0 %v1512
    %1514 = vmatprep.subr.mxu0 0.0
    %v1515 = vand.u32 %v1496, 4294901760
    %1516 = vmatpush1.msra.mxu0 %v1515
    %1517 = vmatprep.subr.mxu0 0.0
    %v1518 = vand.u32 %v1497, 4294901760
    %1519 = vmatpush1.msra.mxu0 %v1518
    %1520 = vmatprep.subr.mxu0 0.0
    %v1521 = vand.u32 %v1498, 4294901760
    %1522 = vmatpush1.msra.mxu0 %v1521
    %1523 = vmatprep.subr.mxu0 0.0
    %v1524 = vand.u32 %v1499, 4294901760
    %1525 = vmatpush1.msra.mxu0 %v1524
    %1526 = vmatprep.subr.mxu0 0.0
    %v1527 = vand.u32 %v1500, 4294901760
    %1528 = vmatpush1.msra.mxu0 %v1527
    %1529 = vmatprep.subr.mxu0 0.0
    %v1530 = vand.u32 %v1501, 4294901760
    %1531 = vmatpush1.msra.mxu0 %v1530
    %1532 = vmatprep.subr.mxu0 0.0
    %v1533 = vand.u32 %v1502, 4294901760
    %1534 = vmatpush1.msra.mxu0 %v1533
    %1535 = vmatprep.subr.mxu0 0.0
    %v1536 = vand.u32 %v1503, 4294901760
    %1537 = vmatpush1.msra.mxu0 %v1536
    %1538 = vmatprep.subr.mxu0 0.0
    %v1539 = vand.u32 %v1504, 4294901760
    %1540 = vmatpush1.msra.mxu0 %v1539
    %1541 = vmatprep.subr.mxu0 0.0
    %v1542 = vand.u32 %v1505, 4294901760
    %1543 = vmatpush1.msra.mxu0 %v1542
    %1544 = vmatprep.subr.mxu0 0.0
    %v1545 = vand.u32 %v1506, 4294901760
    %1546 = vmatpush1.msra.mxu0 %v1545
    %1547 = vmatprep.subr.mxu0 0.0
    %v1548 = vand.u32 %v1507, 4294901760
    %1549 = vmatpush1.msra.mxu0 %v1548
    %1550 = vmatprep.subr.mxu0 0.0
    %v1551 = vand.u32 %v1508, 4294901760
    %1552 = vmatpush1.msra.mxu0 %v1551
    %1553 = vmatprep.subr.mxu0 0.0
    %v1554 = vand.u32 %v1509, 4294901760
    %1555 = vmatpush1.msra.mxu0 %v1554
    %1556 = vmatprep.subr.mxu0 0.0
    %v1557 = vand.u32 %v1510, 4294901760
    %1558 = vmatpush1.msra.mxu0 %v1557
    %1559 = vmatprep.subr.mxu0 0.0
    %1560 = vmatpush1.msra.mxu0 0.0
    %1561 = vmatprep.subr.mxu0 0.0
    %1562 = vmatpush1.msra.mxu0 0.0
    %1563 = vmatprep.subr.mxu0 0.0
    %1564 = vmatpush1.msra.mxu0 0.0
    %1565 = vmatprep.subr.mxu0 0.0
    %1566 = vmatpush1.msra.mxu0 0.0
    %1567 = vmatprep.subr.mxu0 0.0
    %1568 = vmatpush1.msra.mxu0 0.0
    %1569 = vmatprep.subr.mxu0 0.0
    %1570 = vmatpush1.msra.mxu0 0.0
    %1571 = vmatprep.subr.mxu0 0.0
    %1572 = vmatpush1.msra.mxu0 0.0
    %1573 = vmatprep.subr.mxu0 0.0
    %1574 = vmatpush1.msra.mxu0 0.0
    %1575 = vmatprep.subr.mxu0 0.0
    %1576 = vmatpush1.msra.mxu0 0.0
    %1577 = vmatprep.subr.mxu0 0.0
    %1578 = vmatpush1.msra.mxu0 0.0
    %1579 = vmatprep.subr.mxu0 0.0
    %1580 = vmatpush1.msra.mxu0 0.0
    %1581 = vmatprep.subr.mxu0 0.0
    %1582 = vmatpush1.msra.mxu0 0.0
    %1583 = vmatprep.subr.mxu0 0.0
    %1584 = vmatpush1.msra.mxu0 0.0
    %1585 = vmatprep.subr.mxu0 0.0
    %1586 = vmatpush1.msra.mxu0 0.0
    %1587 = vmatprep.subr.mxu0 0.0
    %1588 = vmatpush1.msra.mxu0 0.0
    %1589 = vmatprep.subr.mxu0 0.0
    %1590 = vmatpush1.msra.mxu0 0.0
    %1591 = vmatprep.mubr.f32.mxu0 0.0
    %v1592 = vand.u32 %v1487, 4294901760
    %v1593 = vsub.f32 %v1487, %v1592
    %v1594 = vand.u32 %v1593, 4294901760
    %v1595 = vsub.f32 %v1593, %v1594
    %v1596 = vand.u32 %v1595, 4294901760
    %1597 = vmatmul.mubr.f32.gmra.mrb[0].mxu0 %v1596
    %v1598 = vpop.f32.mrb[0].mxu0
    %v1599 = vadd.f32 0.0, %v1598
    %v1600 = vpop.f32.mrb[0].mxu0
    %1601 = vmatprep.mubr.f32.mxu0 0.0
    %v1602 = vand.u32 %v1488, 4294901760
    %v1603 = vsub.f32 %v1488, %v1602
    %v1604 = vand.u32 %v1603, 4294901760
    %v1605 = vsub.f32 %v1603, %v1604
    %v1606 = vand.u32 %v1605, 4294901760
    %1607 = vmatmul.mubr.f32.gmra.mrb[0].mxu0 %v1606
    %v1608 = vpop.f32.mrb[0].mxu0
    %v1609 = vadd.f32 0.0, %v1608
    %v1610 = vpop.f32.mrb[0].mxu0
    %1611 = vdwg.mxu0
    %1612 = vmatprep.subr.mxu0 0.0
    %v1613 = vand.u32 %v1495, 4294901760
    %v1614 = vsub.f32 %v1495, %v1613
    %v1615 = vand.u32 %v1614, 4294901760
    %v1616 = vsub.f32 %v1614, %v1615
    %v1617 = vand.u32 %v1616, 4294901760
    %1618 = vmatpush1.msra.mxu0 %v1617
    %1619 = vmatprep.subr.mxu0 0.0
    %v1620 = vand.u32 %v1496, 4294901760
    %v1621 = vsub.f32 %v1496, %v1620
    %v1622 = vand.u32 %v1621, 4294901760
    %v1623 = vsub.f32 %v1621, %v1622
    %v1624 = vand.u32 %v1623, 4294901760
    %1625 = vmatpush1.msra.mxu0 %v1624
    %1626 = vmatprep.subr.mxu0 0.0
    %v1627 = vand.u32 %v1497, 4294901760
    %v1628 = vsub.f32 %v1497, %v1627
    %v1629 = vand.u32 %v1628, 4294901760
    %v1630 = vsub.f32 %v1628, %v1629
    %v1631 = vand.u32 %v1630, 4294901760
    %1632 = vmatpush1.msra.mxu0 %v1631
    %1633 = vmatprep.subr.mxu0 0.0
    %v1634 = vand.u32 %v1498, 4294901760
    %v1635 = vsub.f32 %v1498, %v1634
    %v1636 = vand.u32 %v1635, 4294901760
    %v1637 = vsub.f32 %v1635, %v1636
    %v1638 = vand.u32 %v1637, 4294901760
    %1639 = vmatpush1.msra.mxu0 %v1638
    %1640 = vmatprep.subr.mxu0 0.0
    %v1641 = vand.u32 %v1499, 4294901760
    %v1642 = vsub.f32 %v1499, %v1641
    %v1643 = vand.u32 %v1642, 4294901760
    %v1644 = vsub.f32 %v1642, %v1643
    %v1645 = vand.u32 %v1644, 4294901760
    %1646 = vmatpush1.msra.mxu0 %v1645
    %1647 = vmatprep.subr.mxu0 0.0
    %v1648 = vand.u32 %v1500, 4294901760
    %v1649 = vsub.f32 %v1500, %v1648
    %v1650 = vand.u32 %v1649, 4294901760
    %v1651 = vsub.f32 %v1649, %v1650
    %v1652 = vand.u32 %v1651, 4294901760
    %1653 = vmatpush1.msra.mxu0 %v1652
    %1654 = vmatprep.subr.mxu0 0.0
    %v1655 = vand.u32 %v1501, 4294901760
    %v1656 = vsub.f32 %v1501, %v1655
    %v1657 = vand.u32 %v1656, 4294901760
    %v1658 = vsub.f32 %v1656, %v1657
    %v1659 = vand.u32 %v1658, 4294901760
    %1660 = vmatpush1.msra.mxu0 %v1659
    %1661 = vmatprep.subr.mxu0 0.0
    %v1662 = vand.u32 %v1502, 4294901760
    %v1663 = vsub.f32 %v1502, %v1662
    %v1664 = vand.u32 %v1663, 4294901760
    %v1665 = vsub.f32 %v1663, %v1664
    %v1666 = vand.u32 %v1665, 4294901760
    %1667 = vmatpush1.msra.mxu0 %v1666
    %1668 = vmatprep.subr.mxu0 0.0
    %v1669 = vand.u32 %v1503, 4294901760
    %v1670 = vsub.f32 %v1503, %v1669
    %v1671 = vand.u32 %v1670, 4294901760
    %v1672 = vsub.f32 %v1670, %v1671
    %v1673 = vand.u32 %v1672, 4294901760
    %1674 = vmatpush1.msra.mxu0 %v1673
    %1675 = vmatprep.subr.mxu0 0.0
    %v1676 = vand.u32 %v1504, 4294901760
    %v1677 = vsub.f32 %v1504, %v1676
    %v1678 = vand.u32 %v1677, 4294901760
    %v1679 = vsub.f32 %v1677, %v1678
    %v1680 = vand.u32 %v1679, 4294901760
    %1681 = vmatpush1.msra.mxu0 %v1680
    %1682 = vmatprep.subr.mxu0 0.0
    %v1683 = vand.u32 %v1505, 4294901760
    %v1684 = vsub.f32 %v1505, %v1683
    %v1685 = vand.u32 %v1684, 4294901760
    %v1686 = vsub.f32 %v1684, %v1685
    %v1687 = vand.u32 %v1686, 4294901760
    %1688 = vmatpush1.msra.mxu0 %v1687
    %1689 = vmatprep.subr.mxu0 0.0
    %v1690 = vand.u32 %v1506, 4294901760
    %v1691 = vsub.f32 %v1506, %v1690
    %v1692 = vand.u32 %v1691, 4294901760
    %v1693 = vsub.f32 %v1691, %v1692
    %v1694 = vand.u32 %v1693, 4294901760
    %1695 = vmatpush1.msra.mxu0 %v1694
    %1696 = vmatprep.subr.mxu0 0.0
    %v1697 = vand.u32 %v1507, 4294901760
    %v1698 = vsub.f32 %v1507, %v1697
    %v1699 = vand.u32 %v1698, 4294901760
    %v1700 = vsub.f32 %v1698, %v1699
    %v1701 = vand.u32 %v1700, 4294901760
    %1702 = vmatpush1.msra.mxu0 %v1701
    %1703 = vmatprep.subr.mxu0 0.0
    %v1704 = vand.u32 %v1508, 4294901760
    %v1705 = vsub.f32 %v1508, %v1704
    %v1706 = vand.u32 %v1705, 4294901760
    %v1707 = vsub.f32 %v1705, %v1706
    %v1708 = vand.u32 %v1707, 4294901760
    %1709 = vmatpush1.msra.mxu0 %v1708
    %1710 = vmatprep.subr.mxu0 0.0
    %v1711 = vand.u32 %v1509, 4294901760
    %v1712 = vsub.f32 %v1509, %v1711
    %v1713 = vand.u32 %v1712, 4294901760
    %v1714 = vsub.f32 %v1712, %v1713
    %v1715 = vand.u32 %v1714, 4294901760
    %1716 = vmatpush1.msra.mxu0 %v1715
    %1717 = vmatprep.subr.mxu0 0.0
    %v1718 = vand.u32 %v1510, 4294901760
    %v1719 = vsub.f32 %v1510, %v1718
    %v1720 = vand.u32 %v1719, 4294901760
    %v1721 = vsub.f32 %v1719, %v1720
    %v1722 = vand.u32 %v1721, 4294901760
    %1723 = vmatpush1.msra.mxu0 %v1722
    %1724 = vmatprep.subr.mxu0 0.0
    %1725 = vmatpush1.msra.mxu0 0.0
    %1726 = vmatprep.subr.mxu0 0.0
    %1727 = vmatpush1.msra.mxu0 0.0
    %1728 = vmatprep.subr.mxu0 0.0
    %1729 = vmatpush1.msra.mxu0 0.0
    %1730 = vmatprep.subr.mxu0 0.0
    %1731 = vmatpush1.msra.mxu0 0.0
    %1732 = vmatprep.subr.mxu0 0.0
    %1733 = vmatpush1.msra.mxu0 0.0
    %1734 = vmatprep.subr.mxu0 0.0
    %1735 = vmatpush1.msra.mxu0 0.0
    %1736 = vmatprep.subr.mxu0 0.0
    %1737 = vmatpush1.msra.mxu0 0.0
    %1738 = vmatprep.subr.mxu0 0.0
    %1739 = vmatpush1.msra.mxu0 0.0
    %1740 = vmatprep.subr.mxu0 0.0
    %1741 = vmatpush1.msra.mxu0 0.0
    %1742 = vmatprep.subr.mxu0 0.0
    %1743 = vmatpush1.msra.mxu0 0.0
    %1744 = vmatprep.subr.mxu0 0.0
    %1745 = vmatpush1.msra.mxu0 0.0
    %1746 = vmatprep.subr.mxu0 0.0
    %1747 = vmatpush1.msra.mxu0 0.0
    %1748 = vmatprep.subr.mxu0 0.0
    %1749 = vmatpush1.msra.mxu0 0.0
    %1750 = vmatprep.subr.mxu0 0.0
    %1751 = vmatpush1.msra.mxu0 0.0
    %1752 = vmatprep.subr.mxu0 0.0
    %1753 = vmatpush1.msra.mxu0 0.0
    %1754 = vmatprep.subr.mxu0 0.0
    %1755 = vmatpush1.msra.mxu0 0.0
    %1756 = vmatprep.mubr.f32.mxu0 0.0
    %v1757 = vand.u32 %v1487, 4294901760
    %1758 = vmatmul.mubr.f32.gmra.mrb[0].mxu0 %v1757
    %v1759 = vpop.f32.mrb[0].mxu0
    %v1760 = vadd.f32 %v1599, %v1759
    %v1761 = vpop.f32.mrb[0].mxu0
    %1762 = vmatprep.mubr.f32.mxu0 0.0
    %v1763 = vand.u32 %v1488, 4294901760
    %1764 = vmatmul.mubr.f32.gmra.mrb[0].mxu0 %v1763
    %v1765 = vpop.f32.mrb[0].mxu0
    %v1766 = vadd.f32 %v1609, %v1765
    %v1767 = vpop.f32.mrb[0].mxu0
    %1768 = vdwg.mxu0
    %1769 = vmatprep.subr.mxu0 0.0
    %v1770 = vand.u32 %v1495, 4294901760
    %v1771 = vsub.f32 %v1495, %v1770
    %1772 = vmatpush1.msra.mxu0 %v1771
    %1773 = vmatprep.subr.mxu0 0.0
    %v1774 = vand.u32 %v1496, 4294901760
    %v1775 = vsub.f32 %v1496, %v1774
    %1776 = vmatpush1.msra.mxu0 %v1775
    %1777 = vmatprep.subr.mxu0 0.0
    %v1778 = vand.u32 %v1497, 4294901760
    %v1779 = vsub.f32 %v1497, %v1778
    %1780 = vmatpush1.msra.mxu0 %v1779
    %1781 = vmatprep.subr.mxu0 0.0
    %v1782 = vand.u32 %v1498, 4294901760
    %v1783 = vsub.f32 %v1498, %v1782
    %1784 = vmatpush1.msra.mxu0 %v1783
    %1785 = vmatprep.subr.mxu0 0.0
    %v1786 = vand.u32 %v1499, 4294901760
    %v1787 = vsub.f32 %v1499, %v1786
    %1788 = vmatpush1.msra.mxu0 %v1787
    %1789 = vmatprep.subr.mxu0 0.0
    %v1790 = vand.u32 %v1500, 4294901760
    %v1791 = vsub.f32 %v1500, %v1790
    %1792 = vmatpush1.msra.mxu0 %v1791
    %1793 = vmatprep.subr.mxu0 0.0
    %v1794 = vand.u32 %v1501, 4294901760
    %v1795 = vsub.f32 %v1501, %v1794
    %1796 = vmatpush1.msra.mxu0 %v1795
    %1797 = vmatprep.subr.mxu0 0.0
    %v1798 = vand.u32 %v1502, 4294901760
    %v1799 = vsub.f32 %v1502, %v1798
    %1800 = vmatpush1.msra.mxu0 %v1799
    %1801 = vmatprep.subr.mxu0 0.0
    %v1802 = vand.u32 %v1503, 4294901760
    %v1803 = vsub.f32 %v1503, %v1802
    %1804 = vmatpush1.msra.mxu0 %v1803
    %1805 = vmatprep.subr.mxu0 0.0
    %v1806 = vand.u32 %v1504, 4294901760
    %v1807 = vsub.f32 %v1504, %v1806
    %1808 = vmatpush1.msra.mxu0 %v1807
    %1809 = vmatprep.subr.mxu0 0.0
    %v1810 = vand.u32 %v1505, 4294901760
    %v1811 = vsub.f32 %v1505, %v1810
    %1812 = vmatpush1.msra.mxu0 %v1811
    %1813 = vmatprep.subr.mxu0 0.0
    %v1814 = vand.u32 %v1506, 4294901760
    %v1815 = vsub.f32 %v1506, %v1814
    %1816 = vmatpush1.msra.mxu0 %v1815
    %1817 = vmatprep.subr.mxu0 0.0
    %v1818 = vand.u32 %v1507, 4294901760
    %v1819 = vsub.f32 %v1507, %v1818
    %1820 = vmatpush1.msra.mxu0 %v1819
    %1821 = vmatprep.subr.mxu0 0.0
    %v1822 = vand.u32 %v1508, 4294901760
    %v1823 = vsub.f32 %v1508, %v1822
    %1824 = vmatpush1.msra.mxu0 %v1823
    %1825 = vmatprep.subr.mxu0 0.0
    %v1826 = vand.u32 %v1509, 4294901760
    %v1827 = vsub.f32 %v1509, %v1826
    %1828 = vmatpush1.msra.mxu0 %v1827
    %1829 = vmatprep.subr.mxu0 0.0
    %v1830 = vand.u32 %v1510, 4294901760
    %v1831 = vsub.f32 %v1510, %v1830
    %1832 = vmatpush1.msra.mxu0 %v1831
    %1833 = vmatprep.subr.mxu0 0.0
    %1834 = vmatpush1.msra.mxu0 0.0
    %1835 = vmatprep.subr.mxu0 0.0
    %1836 = vmatpush1.msra.mxu0 0.0
    %1837 = vmatprep.subr.mxu0 0.0
    %1838 = vmatpush1.msra.mxu0 0.0
    %1839 = vmatprep.subr.mxu0 0.0
    %1840 = vmatpush1.msra.mxu0 0.0
    %1841 = vmatprep.subr.mxu0 0.0
    %1842 = vmatpush1.msra.mxu0 0.0
    %1843 = vmatprep.subr.mxu0 0.0
    %1844 = vmatpush1.msra.mxu0 0.0
    %1845 = vmatprep.subr.mxu0 0.0
    %1846 = vmatpush1.msra.mxu0 0.0
    %1847 = vmatprep.subr.mxu0 0.0
    %1848 = vmatpush1.msra.mxu0 0.0
    %1849 = vmatprep.subr.mxu0 0.0
    %1850 = vmatpush1.msra.mxu0 0.0
    %1851 = vmatprep.subr.mxu0 0.0
    %1852 = vmatpush1.msra.mxu0 0.0
    %1853 = vmatprep.subr.mxu0 0.0
    %1854 = vmatpush1.msra.mxu0 0.0
    %1855 = vmatprep.subr.mxu0 0.0
    %1856 = vmatpush1.msra.mxu0 0.0
    %1857 = vmatprep.subr.mxu0 0.0
    %1858 = vmatpush1.msra.mxu0 0.0
    %1859 = vmatprep.subr.mxu0 0.0
    %1860 = vmatpush1.msra.mxu0 0.0
    %1861 = vmatprep.subr.mxu0 0.0
    %1862 = vmatpush1.msra.mxu0 0.0
    %1863 = vmatprep.subr.mxu0 0.0
    %1864 = vmatpush1.msra.mxu0 0.0
    %1865 = vmatprep.mubr.f32.mxu0 0.0
    %v1866 = vand.u32 %v1487, 4294901760
    %v1867 = vsub.f32 %v1487, %v1866
    %1868 = vmatmul.mubr.f32.gmra.mrb[0].mxu0 %v1867
    %v1869 = vpop.f32.mrb[0].mxu0
    %v1870 = vadd.f32 %v1760, %v1869
    %v1871 = vpop.f32.mrb[0].mxu0
    %1872 = vmatprep.mubr.f32.mxu0 0.0
    %v1873 = vand.u32 %v1488, 4294901760
    %v1874 = vsub.f32 %v1488, %v1873
    %1875 = vmatmul.mubr.f32.gmra.mrb[0].mxu0 %v1874
    %v1876 = vpop.f32.mrb[0].mxu0
    %v1877 = vadd.f32 %v1766, %v1876
    %v1878 = vpop.f32.mrb[0].mxu0
    %1879 = vdwg.mxu0
    %1880 = vmatprep.subr.mxu0 0.0
    %v1881 = vand.u32 %v1495, 4294901760
    %1882 = vmatpush1.msra.mxu0 %v1881
    %1883 = vmatprep.subr.mxu0 0.0
    %v1884 = vand.u32 %v1496, 4294901760
    %1885 = vmatpush1.msra.mxu0 %v1884
    %1886 = vmatprep.subr.mxu0 0.0
    %v1887 = vand.u32 %v1497, 4294901760
    %1888 = vmatpush1.msra.mxu0 %v1887
    %1889 = vmatprep.subr.mxu0 0.0
    %v1890 = vand.u32 %v1498, 4294901760
    %1891 = vmatpush1.msra.mxu0 %v1890
    %1892 = vmatprep.subr.mxu0 0.0
    %v1893 = vand.u32 %v1499, 4294901760
    %1894 = vmatpush1.msra.mxu0 %v1893
    %1895 = vmatprep.subr.mxu0 0.0
    %v1896 = vand.u32 %v1500, 4294901760
    %1897 = vmatpush1.msra.mxu0 %v1896
    %1898 = vmatprep.subr.mxu0 0.0
    %v1899 = vand.u32 %v1501, 4294901760
    %1900 = vmatpush1.msra.mxu0 %v1899
    %1901 = vmatprep.subr.mxu0 0.0
    %v1902 = vand.u32 %v1502, 4294901760
    %1903 = vmatpush1.msra.mxu0 %v1902
    %1904 = vmatprep.subr.mxu0 0.0
    %v1905 = vand.u32 %v1503, 4294901760
    %1906 = vmatpush1.msra.mxu0 %v1905
    %1907 = vmatprep.subr.mxu0 0.0
    %v1908 = vand.u32 %v1504, 4294901760
    %1909 = vmatpush1.msra.mxu0 %v1908
    %1910 = vmatprep.subr.mxu0 0.0
    %v1911 = vand.u32 %v1505, 4294901760
    %1912 = vmatpush1.msra.mxu0 %v1911
    %1913 = vmatprep.subr.mxu0 0.0
    %v1914 = vand.u32 %v1506, 4294901760
    %1915 = vmatpush1.msra.mxu0 %v1914
    %1916 = vmatprep.subr.mxu0 0.0
    %v1917 = vand.u32 %v1507, 4294901760
    %1918 = vmatpush1.msra.mxu0 %v1917
    %1919 = vmatprep.subr.mxu0 0.0
    %v1920 = vand.u32 %v1508, 4294901760
    %1921 = vmatpush1.msra.mxu0 %v1920
    %1922 = vmatprep.subr.mxu0 0.0
    %v1923 = vand.u32 %v1509, 4294901760
    %1924 = vmatpush1.msra.mxu0 %v1923
    %1925 = vmatprep.subr.mxu0 0.0
    %v1926 = vand.u32 %v1510, 4294901760
    %1927 = vmatpush1.msra.mxu0 %v1926
    %1928 = vmatprep.subr.mxu0 0.0
    %1929 = vmatpush1.msra.mxu0 0.0
    %1930 = vmatprep.subr.mxu0 0.0
    %1931 = vmatpush1.msra.mxu0 0.0
    %1932 = vmatprep.subr.mxu0 0.0
    %1933 = vmatpush1.msra.mxu0 0.0
    %1934 = vmatprep.subr.mxu0 0.0
    %1935 = vmatpush1.msra.mxu0 0.0
    %1936 = vmatprep.subr.mxu0 0.0
    %1937 = vmatpush1.msra.mxu0 0.0
    %1938 = vmatprep.subr.mxu0 0.0
    %1939 = vmatpush1.msra.mxu0 0.0
    %1940 = vmatprep.subr.mxu0 0.0
    %1941 = vmatpush1.msra.mxu0 0.0
    %1942 = vmatprep.subr.mxu0 0.0
    %1943 = vmatpush1.msra.mxu0 0.0
    %1944 = vmatprep.subr.mxu0 0.0
    %1945 = vmatpush1.msra.mxu0 0.0
    %1946 = vmatprep.subr.mxu0 0.0
    %1947 = vmatpush1.msra.mxu0 0.0
    %1948 = vmatprep.subr.mxu0 0.0
    %1949 = vmatpush1.msra.mxu0 0.0
    %1950 = vmatprep.subr.mxu0 0.0
    %1951 = vmatpush1.msra.mxu0 0.0
    %1952 = vmatprep.subr.mxu0 0.0
    %1953 = vmatpush1.msra.mxu0 0.0
    %1954 = vmatprep.subr.mxu0 0.0
    %1955 = vmatpush1.msra.mxu0 0.0
    %1956 = vmatprep.subr.mxu0 0.0
    %1957 = vmatpush1.msra.mxu0 0.0
    %1958 = vmatprep.subr.mxu0 0.0
    %1959 = vmatpush1.msra.mxu0 0.0
    %1960 = vmatprep.mubr.f32.mxu0 0.0
    %v1961 = vand.u32 %v1487, 4294901760
    %v1962 = vsub.f32 %v1487, %v1961
    %v1963 = vand.u32 %v1962, 4294901760
    %1964 = vmatmul.mubr.f32.gmra.mrb[0].mxu0 %v1963
    %v1965 = vpop.f32.mrb[0].mxu0
    %v1966 = vadd.f32 %v1870, %v1965
    %v1967 = vpop.f32.mrb[0].mxu0
    %1968 = vmatprep.mubr.f32.mxu0 0.0
    %v1969 = vand.u32 %v1488, 4294901760
    %v1970 = vsub.f32 %v1488, %v1969
    %v1971 = vand.u32 %v1970, 4294901760
    %1972 = vmatmul.mubr.f32.gmra.mrb[0].mxu0 %v1971
    %v1973 = vpop.f32.mrb[0].mxu0
    %v1974 = vadd.f32 %v1877, %v1973
    %v1975 = vpop.f32.mrb[0].mxu0
    %1976 = vdwg.mxu0
    %1977 = vmatprep.subr.mxu0 0.0
    %v1978 = vand.u32 %v1495, 4294901760
    %v1979 = vsub.f32 %v1495, %v1978
    %v1980 = vand.u32 %v1979, 4294901760
    %1981 = vmatpush1.msra.mxu0 %v1980
    %1982 = vmatprep.subr.mxu0 0.0
    %v1983 = vand.u32 %v1496, 4294901760
    %v1984 = vsub.f32 %v1496, %v1983
    %v1985 = vand.u32 %v1984, 4294901760
    %1986 = vmatpush1.msra.mxu0 %v1985
    %1987 = vmatprep.subr.mxu0 0.0
    %v1988 = vand.u32 %v1497, 4294901760
    %v1989 = vsub.f32 %v1497, %v1988
    %v1990 = vand.u32 %v1989, 4294901760
    %1991 = vmatpush1.msra.mxu0 %v1990
    %1992 = vmatprep.subr.mxu0 0.0
    %v1993 = vand.u32 %v1498, 4294901760
    %v1994 = vsub.f32 %v1498, %v1993
    %v1995 = vand.u32 %v1994, 4294901760
    %1996 = vmatpush1.msra.mxu0 %v1995
    %1997 = vmatprep.subr.mxu0 0.0
    %v1998 = vand.u32 %v1499, 4294901760
    %v1999 = vsub.f32 %v1499, %v1998
    %v2000 = vand.u32 %v1999, 4294901760
    %2001 = vmatpush1.msra.mxu0 %v2000
    %2002 = vmatprep.subr.mxu0 0.0
    %v2003 = vand.u32 %v1500, 4294901760
    %v2004 = vsub.f32 %v1500, %v2003
    %v2005 = vand.u32 %v2004, 4294901760
    %2006 = vmatpush1.msra.mxu0 %v2005
    %2007 = vmatprep.subr.mxu0 0.0
    %v2008 = vand.u32 %v1501, 4294901760
    %v2009 = vsub.f32 %v1501, %v2008
    %v2010 = vand.u32 %v2009, 4294901760
    %2011 = vmatpush1.msra.mxu0 %v2010
    %2012 = vmatprep.subr.mxu0 0.0
    %v2013 = vand.u32 %v1502, 4294901760
    %v2014 = vsub.f32 %v1502, %v2013
    %v2015 = vand.u32 %v2014, 4294901760
    %2016 = vmatpush1.msra.mxu0 %v2015
    %2017 = vmatprep.subr.mxu0 0.0
    %v2018 = vand.u32 %v1503, 4294901760
    %v2019 = vsub.f32 %v1503, %v2018
    %v2020 = vand.u32 %v2019, 4294901760
    %2021 = vmatpush1.msra.mxu0 %v2020
    %2022 = vmatprep.subr.mxu0 0.0
    %v2023 = vand.u32 %v1504, 4294901760
    %v2024 = vsub.f32 %v1504, %v2023
    %v2025 = vand.u32 %v2024, 4294901760
    %2026 = vmatpush1.msra.mxu0 %v2025
    %2027 = vmatprep.subr.mxu0 0.0
    %v2028 = vand.u32 %v1505, 4294901760
    %v2029 = vsub.f32 %v1505, %v2028
    %v2030 = vand.u32 %v2029, 4294901760
    %2031 = vmatpush1.msra.mxu0 %v2030
    %2032 = vmatprep.subr.mxu0 0.0
    %v2033 = vand.u32 %v1506, 4294901760
    %v2034 = vsub.f32 %v1506, %v2033
    %v2035 = vand.u32 %v2034, 4294901760
    %2036 = vmatpush1.msra.mxu0 %v2035
    %2037 = vmatprep.subr.mxu0 0.0
    %v2038 = vand.u32 %v1507, 4294901760
    %v2039 = vsub.f32 %v1507, %v2038
    %v2040 = vand.u32 %v2039, 4294901760
    %2041 = vmatpush1.msra.mxu0 %v2040
    %2042 = vmatprep.subr.mxu0 0.0
    %v2043 = vand.u32 %v1508, 4294901760
    %v2044 = vsub.f32 %v1508, %v2043
    %v2045 = vand.u32 %v2044, 4294901760
    %2046 = vmatpush1.msra.mxu0 %v2045
    %2047 = vmatprep.subr.mxu0 0.0
    %v2048 = vand.u32 %v1509, 4294901760
    %v2049 = vsub.f32 %v1509, %v2048
    %v2050 = vand.u32 %v2049, 4294901760
    %2051 = vmatpush1.msra.mxu0 %v2050
    %2052 = vmatprep.subr.mxu0 0.0
    %v2053 = vand.u32 %v1510, 4294901760
    %v2054 = vsub.f32 %v1510, %v2053
    %v2055 = vand.u32 %v2054, 4294901760
    %2056 = vmatpush1.msra.mxu0 %v2055
    %2057 = vmatprep.subr.mxu0 0.0
    %2058 = vmatpush1.msra.mxu0 0.0
    %2059 = vmatprep.subr.mxu0 0.0
    %2060 = vmatpush1.msra.mxu0 0.0
    %2061 = vmatprep.subr.mxu0 0.0
    %2062 = vmatpush1.msra.mxu0 0.0
    %2063 = vmatprep.subr.mxu0 0.0
    %2064 = vmatpush1.msra.mxu0 0.0
    %2065 = vmatprep.subr.mxu0 0.0
    %2066 = vmatpush1.msra.mxu0 0.0
    %2067 = vmatprep.subr.mxu0 0.0
    %2068 = vmatpush1.msra.mxu0 0.0
    %2069 = vmatprep.subr.mxu0 0.0
    %2070 = vmatpush1.msra.mxu0 0.0
    %2071 = vmatprep.subr.mxu0 0.0
    %2072 = vmatpush1.msra.mxu0 0.0
    %2073 = vmatprep.subr.mxu0 0.0
    %2074 = vmatpush1.msra.mxu0 0.0
    %2075 = vmatprep.subr.mxu0 0.0
    %2076 = vmatpush1.msra.mxu0 0.0
    %2077 = vmatprep.subr.mxu0 0.0
    %2078 = vmatpush1.msra.mxu0 0.0
    %2079 = vmatprep.subr.mxu0 0.0
    %2080 = vmatpush1.msra.mxu0 0.0
    %2081 = vmatprep.subr.mxu0 0.0
    %2082 = vmatpush1.msra.mxu0 0.0
    %2083 = vmatprep.subr.mxu0 0.0
    %2084 = vmatpush1.msra.mxu0 0.0
    %2085 = vmatprep.subr.mxu0 0.0
    %2086 = vmatpush1.msra.mxu0 0.0
    %2087 = vmatprep.subr.mxu0 0.0
    %2088 = vmatpush1.msra.mxu0 0.0
    %2089 = vmatprep.mubr.f32.mxu0 0.0
    %v2090 = vand.u32 %v1487, 4294901760
    %2091 = vmatmul.mubr.f32.gmra.mrb[0].mxu0 %v2090
    %v2092 = vpop.f32.mrb[0].mxu0
    %v2093 = vadd.f32 %v1966, %v2092
    %v2094 = vpop.f32.mrb[0].mxu0
    %2095 = vmatprep.mubr.f32.mxu0 0.0
    %v2096 = vand.u32 %v1488, 4294901760
    %2097 = vmatmul.mubr.f32.gmra.mrb[0].mxu0 %v2096
    %v2098 = vpop.f32.mrb[0].mxu0
    %v2099 = vadd.f32 %v1974, %v2098
    %v2100 = vpop.f32.mrb[0].mxu0
    %2101 = vdwg.mxu0
    %2102 = vmatprep.subr.mxu0 0.0
    %v2103 = vand.u32 %v1495, 4294901760
    %2104 = vmatpush1.msra.mxu0 %v2103
    %2105 = vmatprep.subr.mxu0 0.0
    %v2106 = vand.u32 %v1496, 4294901760
    %2107 = vmatpush1.msra.mxu0 %v2106
    %2108 = vmatprep.subr.mxu0 0.0
    %v2109 = vand.u32 %v1497, 4294901760
    %2110 = vmatpush1.msra.mxu0 %v2109
    %2111 = vmatprep.subr.mxu0 0.0
    %v2112 = vand.u32 %v1498, 4294901760
    %2113 = vmatpush1.msra.mxu0 %v2112
    %2114 = vmatprep.subr.mxu0 0.0
    %v2115 = vand.u32 %v1499, 4294901760
    %2116 = vmatpush1.msra.mxu0 %v2115
    %2117 = vmatprep.subr.mxu0 0.0
    %v2118 = vand.u32 %v1500, 4294901760
    %2119 = vmatpush1.msra.mxu0 %v2118
    %2120 = vmatprep.subr.mxu0 0.0
    %v2121 = vand.u32 %v1501, 4294901760
    %2122 = vmatpush1.msra.mxu0 %v2121
    %2123 = vmatprep.subr.mxu0 0.0
    %v2124 = vand.u32 %v1502, 4294901760
    %2125 = vmatpush1.msra.mxu0 %v2124
    %2126 = vmatprep.subr.mxu0 0.0
    %v2127 = vand.u32 %v1503, 4294901760
    %2128 = vmatpush1.msra.mxu0 %v2127
    %2129 = vmatprep.subr.mxu0 0.0
    %v2130 = vand.u32 %v1504, 4294901760
    %2131 = vmatpush1.msra.mxu0 %v2130
    %2132 = vmatprep.subr.mxu0 0.0
    %v2133 = vand.u32 %v1505, 4294901760
    %2134 = vmatpush1.msra.mxu0 %v2133
    %2135 = vmatprep.subr.mxu0 0.0
    %v2136 = vand.u32 %v1506, 4294901760
    %2137 = vmatpush1.msra.mxu0 %v2136
    %2138 = vmatprep.subr.mxu0 0.0
    %v2139 = vand.u32 %v1507, 4294901760
    %2140 = vmatpush1.msra.mxu0 %v2139
    %2141 = vmatprep.subr.mxu0 0.0
    %v2142 = vand.u32 %v1508, 4294901760
    %2143 = vmatpush1.msra.mxu0 %v2142
    %2144 = vmatprep.subr.mxu0 0.0
    %v2145 = vand.u32 %v1509, 4294901760
    %2146 = vmatpush1.msra.mxu0 %v2145
    %2147 = vmatprep.subr.mxu0 0.0
    %v2148 = vand.u32 %v1510, 4294901760
    %2149 = vmatpush1.msra.mxu0 %v2148
    %2150 = vmatprep.subr.mxu0 0.0
    %2151 = vmatpush1.msra.mxu0 0.0
    %2152 = vmatprep.subr.mxu0 0.0
    %2153 = vmatpush1.msra.mxu0 0.0
    %2154 = vmatprep.subr.mxu0 0.0
    %2155 = vmatpush1.msra.mxu0 0.0
    %2156 = vmatprep.subr.mxu0 0.0
    %2157 = vmatpush1.msra.mxu0 0.0
    %2158 = vmatprep.subr.mxu0 0.0
    %2159 = vmatpush1.msra.mxu0 0.0
    %2160 = vmatprep.subr.mxu0 0.0
    %2161 = vmatpush1.msra.mxu0 0.0
    %2162 = vmatprep.subr.mxu0 0.0
    %2163 = vmatpush1.msra.mxu0 0.0
    %2164 = vmatprep.subr.mxu0 0.0
    %2165 = vmatpush1.msra.mxu0 0.0
    %2166 = vmatprep.subr.mxu0 0.0
    %2167 = vmatpush1.msra.mxu0 0.0
    %2168 = vmatprep.subr.mxu0 0.0
    %2169 = vmatpush1.msra.mxu0 0.0
    %2170 = vmatprep.subr.mxu0 0.0
    %2171 = vmatpush1.msra.mxu0 0.0
    %2172 = vmatprep.subr.mxu0 0.0
    %2173 = vmatpush1.msra.mxu0 0.0
    %2174 = vmatprep.subr.mxu0 0.0
    %2175 = vmatpush1.msra.mxu0 0.0
    %2176 = vmatprep.subr.mxu0 0.0
    %2177 = vmatpush1.msra.mxu0 0.0
    %2178 = vmatprep.subr.mxu0 0.0
    %2179 = vmatpush1.msra.mxu0 0.0
    %2180 = vmatprep.subr.mxu0 0.0
    %2181 = vmatpush1.msra.mxu0 0.0
    %2182 = vmatprep.mubr.f32.mxu0 0.0
    %v2183 = vand.u32 %v1487, 4294901760
    %2184 = vmatmul.mubr.f32.gmra.mrb[0].mxu0 %v2183
    %v2185 = vpop.f32.mrb[0].mxu0
    %v2186 = vadd.f32 %v2093, %v2185
    %v2187 = vpop.f32.mrb[0].mxu0
    %2188 = vmatprep.mubr.f32.mxu0 0.0
    %v2189 = vand.u32 %v1488, 4294901760
    %2190 = vmatmul.mubr.f32.gmra.mrb[0].mxu0 %v2189
    %v2191 = vpop.f32.mrb[0].mxu0
    %v2192 = vadd.f32 %v2099, %v2191
    %v2193 = vpop.f32.mrb[0].mxu0
    %2194 = vdwg.mxu0
    %v2195 = vmul.f32 %v2186, 2.0
    %v2196 = vmul.f32 %v2192, 2.0
    %v2197 = vsub.f32 %v1492, %v2195
    %v2198 = vsub.f32 %v1494, %v2196
    %v2199 = vld [vmem:[%s7] sm:$0x1]
    %v2201 = vlaneseq
    %v2202 = vshrl.u32 %v2201, 7
    %v2203 = vsub.s32 0, %v2202
    %v2204 = vrot.slane %v2199, %v2203
    %v2206 = vadd.f32 %v2197, %v2204
    %v2207 = vadd.f32 %v2198, %v2204
    %2208 = vmin.xlane.f32.xlu0 %v2206
    %v2209 = vpop.xlane.xlu0 %2208
    %2210 = vmin.xlane.f32.xlu0 %v2207
    %v2211 = vpop.xlane.xlu0 %2210
    %v2212 = vlaneseq
    %v2213 = vand.u32 %v2212, 127
    %vm2214 = vcmp.le.f32.partialorder %v2206, %v2209
    %vm2215 = vcmp.le.f32.partialorder %v2207, %v2211
    %v2216 = vsel %vm2214, %v2213, 128
    %v2217 = vsel %vm2215, %v2213, 128
    %v2218 = vand.u32 %v2216, 65535
    %v2219 = vshra.s32 %v2216, 16
    %v2220 = vcvt.s32.f32 %v2218
    %v2221 = vcvt.s32.f32 %v2219
    %2222 = vmin.xlane.f32.xlu0 %v2221
    %v2223 = vpop.xlane.xlu0 %2222
    %vm2224 = vcmp.eq.f32.partialorder %v2221, %v2223
    %v2225 = vsel %vm2224, %v2220, inf
    %2226 = vmin.xlane.f32.xlu0 %v2225
    %v2227 = vpop.xlane.xlu0 %2226
    %v2228 = vcvt.f32.s32 %v2227
    %v2229 = vcvt.f32.s32 %v2223
    %v2230 = vshll.u32 %v2229, 16
    %v2231 = vadd.s32 %v2230, %v2228
    %v2232 = vand.u32 %v2217, 65535
    %v2233 = vshra.s32 %v2217, 16
    %v2234 = vcvt.s32.f32 %v2232
    %v2235 = vcvt.s32.f32 %v2233
    %2236 = vmin.xlane.f32.xlu0 %v2235
    %v2237 = vpop.xlane.xlu0 %2236
    %vm2238 = vcmp.eq.f32.partialorder %v2235, %v2237
    %v2239 = vsel %vm2238, %v2234, inf
    %2240 = vmin.xlane.f32.xlu0 %v2239
    %v2241 = vpop.xlane.xlu0 %2240
    %v2242 = vcvt.f32.s32 %v2241
    %v2243 = vcvt.f32.s32 %v2237
    %v2244 = vshll.u32 %v2243, 16
    %v2245 = vadd.s32 %v2244, %v2242
    %vm2246 = vcmp.eq.s32.totalorder %v2213, %v2231
    %vm2247 = vcmp.eq.s32.totalorder %v2213, %v2245
    %v2248 = vsel %vm2246, 1, 0
    %v2249 = vsel %vm2247, 1, 0
    %v2250 = vcvt.s32.f32 %v2248
    %v2251 = vcvt.s32.f32 %v2249
    %v2252 = vld [vmem:[%s5] sm:$0xff]
    %v2253 = vld [vmem:[%s5 + $0x8] sm:$0xff]
    %v2254 = vld [vmem:[%s5 + $0x10] sm:$0xff]
    %v2255 = vld [vmem:[%s5 + $0x18] sm:$0xff]
    %v2256 = vld [vmem:[%s5 + $0x20] sm:$0xff]
    %v2257 = vld [vmem:[%s5 + $0x28] sm:$0xff]
    %v2258 = vld [vmem:[%s5 + $0x30] sm:$0xff]
    %v2259 = vld [vmem:[%s5 + $0x38] sm:$0xff]
    %v2260 = vld [vmem:[%s5 + $0x40] sm:$0xff]
    %v2261 = vld [vmem:[%s5 + $0x48] sm:$0xff]
    %v2262 = vld [vmem:[%s5 + $0x50] sm:$0xff]
    %v2263 = vld [vmem:[%s5 + $0x58] sm:$0xff]
    %v2264 = vld [vmem:[%s5 + $0x60] sm:$0xff]
    %v2265 = vld [vmem:[%s5 + $0x68] sm:$0xff]
    %v2266 = vld [vmem:[%s5 + $0x70] sm:$0xff]
    %v2267 = vld [vmem:[%s5 + $0x78] sm:$0xff]
    %2268 = vmatprep.subr.mxu0 0.0
    %v2269 = vand.u32 %v2252, 4294901760
    %2270 = vmatpush1.msra.mxu0 %v2269
    %2271 = vmatprep.subr.mxu0 0.0
    %v2272 = vand.u32 %v2253, 4294901760
    %2273 = vmatpush1.msra.mxu0 %v2272
    %2274 = vmatprep.subr.mxu0 0.0
    %v2275 = vand.u32 %v2254, 4294901760
    %2276 = vmatpush1.msra.mxu0 %v2275
    %2277 = vmatprep.subr.mxu0 0.0
    %v2278 = vand.u32 %v2255, 4294901760
    %2279 = vmatpush1.msra.mxu0 %v2278
    %2280 = vmatprep.subr.mxu0 0.0
    %v2281 = vand.u32 %v2256, 4294901760
    %2282 = vmatpush1.msra.mxu0 %v2281
    %2283 = vmatprep.subr.mxu0 0.0
    %v2284 = vand.u32 %v2257, 4294901760
    %2285 = vmatpush1.msra.mxu0 %v2284
    %2286 = vmatprep.subr.mxu0 0.0
    %v2287 = vand.u32 %v2258, 4294901760
    %2288 = vmatpush1.msra.mxu0 %v2287
    %2289 = vmatprep.subr.mxu0 0.0
    %v2290 = vand.u32 %v2259, 4294901760
    %2291 = vmatpush1.msra.mxu0 %v2290
    %2292 = vmatprep.subr.mxu0 0.0
    %v2293 = vand.u32 %v2260, 4294901760
    %2294 = vmatpush1.msra.mxu0 %v2293
    %2295 = vmatprep.subr.mxu0 0.0
    %v2296 = vand.u32 %v2261, 4294901760
    %2297 = vmatpush1.msra.mxu0 %v2296
    %2298 = vmatprep.subr.mxu0 0.0
    %v2299 = vand.u32 %v2262, 4294901760
    %2300 = vmatpush1.msra.mxu0 %v2299
    %2301 = vmatprep.subr.mxu0 0.0
    %v2302 = vand.u32 %v2263, 4294901760
    %2303 = vmatpush1.msra.mxu0 %v2302
    %2304 = vmatprep.subr.mxu0 0.0
    %v2305 = vand.u32 %v2264, 4294901760
    %2306 = vmatpush1.msra.mxu0 %v2305
    %2307 = vmatprep.subr.mxu0 0.0
    %v2308 = vand.u32 %v2265, 4294901760
    %2309 = vmatpush1.msra.mxu0 %v2308
    %2310 = vmatprep.subr.mxu0 0.0
    %v2311 = vand.u32 %v2266, 4294901760
    %2312 = vmatpush1.msra.mxu0 %v2311
    %2313 = vmatprep.subr.mxu0 0.0
    %v2314 = vand.u32 %v2267, 4294901760
    %2315 = vmatpush1.msra.mxu0 %v2314
    %2316 = vmatprep.subr.mxu0 0.0
    %2317 = vmatpush1.msra.mxu0 0.0
    %2318 = vmatprep.subr.mxu0 0.0
    %2319 = vmatpush1.msra.mxu0 0.0
    %2320 = vmatprep.subr.mxu0 0.0
    %2321 = vmatpush1.msra.mxu0 0.0
    %2322 = vmatprep.subr.mxu0 0.0
    %2323 = vmatpush1.msra.mxu0 0.0
    %2324 = vmatprep.subr.mxu0 0.0
    %2325 = vmatpush1.msra.mxu0 0.0
    %2326 = vmatprep.subr.mxu0 0.0
    %2327 = vmatpush1.msra.mxu0 0.0
    %2328 = vmatprep.subr.mxu0 0.0
    %2329 = vmatpush1.msra.mxu0 0.0
    %2330 = vmatprep.subr.mxu0 0.0
    %2331 = vmatpush1.msra.mxu0 0.0
    %2332 = vmatprep.subr.mxu0 0.0
    %2333 = vmatpush1.msra.mxu0 0.0
    %2334 = vmatprep.subr.mxu0 0.0
    %2335 = vmatpush1.msra.mxu0 0.0
    %2336 = vmatprep.subr.mxu0 0.0
    %2337 = vmatpush1.msra.mxu0 0.0
    %2338 = vmatprep.subr.mxu0 0.0
    %2339 = vmatpush1.msra.mxu0 0.0
    %2340 = vmatprep.subr.mxu0 0.0
    %2341 = vmatpush1.msra.mxu0 0.0
    %2342 = vmatprep.subr.mxu0 0.0
    %2343 = vmatpush1.msra.mxu0 0.0
    %2344 = vmatprep.subr.mxu0 0.0
    %2345 = vmatpush1.msra.mxu0 0.0
    %2346 = vmatprep.subr.mxu0 0.0
    %2347 = vmatpush1.msra.mxu0 0.0
    %2348 = vmatprep.mubr.f32.mxu0 0.0
    %v2349 = vand.u32 %v2250, 4294901760
    %v2350 = vsub.f32 %v2250, %v2349
    %v2351 = vand.u32 %v2350, 4294901760
    %v2352 = vsub.f32 %v2350, %v2351
    %v2353 = vand.u32 %v2352, 4294901760
    %2354 = vmatmul.mubr.f32.gmra.mrb[0].mxu0 %v2353
    %v2355 = vpop.f32.mrb[0].mxu0
    %v2356 = vadd.f32 0.0, %v2355
    %v2357 = vpop.f32.mrb[0].mxu0
    %2358 = vmatprep.mubr.f32.mxu0 0.0
    %v2359 = vand.u32 %v2251, 4294901760
    %v2360 = vsub.f32 %v2251, %v2359
    %v2361 = vand.u32 %v2360, 4294901760
    %v2362 = vsub.f32 %v2360, %v2361
    %v2363 = vand.u32 %v2362, 4294901760
    %2364 = vmatmul.mubr.f32.gmra.mrb[0].mxu0 %v2363
    %v2365 = vpop.f32.mrb[0].mxu0
    %v2366 = vadd.f32 0.0, %v2365
    %v2367 = vpop.f32.mrb[0].mxu0
    %2368 = vdwg.mxu0
    %2369 = vmatprep.subr.mxu0 0.0
    %v2370 = vand.u32 %v2252, 4294901760
    %v2371 = vsub.f32 %v2252, %v2370
    %v2372 = vand.u32 %v2371, 4294901760
    %v2373 = vsub.f32 %v2371, %v2372
    %v2374 = vand.u32 %v2373, 4294901760
    %2375 = vmatpush1.msra.mxu0 %v2374
    %2376 = vmatprep.subr.mxu0 0.0
    %v2377 = vand.u32 %v2253, 4294901760
    %v2378 = vsub.f32 %v2253, %v2377
    %v2379 = vand.u32 %v2378, 4294901760
    %v2380 = vsub.f32 %v2378, %v2379
    %v2381 = vand.u32 %v2380, 4294901760
    %2382 = vmatpush1.msra.mxu0 %v2381
    %2383 = vmatprep.subr.mxu0 0.0
    %v2384 = vand.u32 %v2254, 4294901760
    %v2385 = vsub.f32 %v2254, %v2384
    %v2386 = vand.u32 %v2385, 4294901760
    %v2387 = vsub.f32 %v2385, %v2386
    %v2388 = vand.u32 %v2387, 4294901760
    %2389 = vmatpush1.msra.mxu0 %v2388
    %2390 = vmatprep.subr.mxu0 0.0
    %v2391 = vand.u32 %v2255, 4294901760
    %v2392 = vsub.f32 %v2255, %v2391
    %v2393 = vand.u32 %v2392, 4294901760
    %v2394 = vsub.f32 %v2392, %v2393
    %v2395 = vand.u32 %v2394, 4294901760
    %2396 = vmatpush1.msra.mxu0 %v2395
    %2397 = vmatprep.subr.mxu0 0.0
    %v2398 = vand.u32 %v2256, 4294901760
    %v2399 = vsub.f32 %v2256, %v2398
    %v2400 = vand.u32 %v2399, 4294901760
    %v2401 = vsub.f32 %v2399, %v2400
    %v2402 = vand.u32 %v2401, 4294901760
    %2403 = vmatpush1.msra.mxu0 %v2402
    %2404 = vmatprep.subr.mxu0 0.0
    %v2405 = vand.u32 %v2257, 4294901760
    %v2406 = vsub.f32 %v2257, %v2405
    %v2407 = vand.u32 %v2406, 4294901760
    %v2408 = vsub.f32 %v2406, %v2407
    %v2409 = vand.u32 %v2408, 4294901760
    %2410 = vmatpush1.msra.mxu0 %v2409
    %2411 = vmatprep.subr.mxu0 0.0
    %v2412 = vand.u32 %v2258, 4294901760
    %v2413 = vsub.f32 %v2258, %v2412
    %v2414 = vand.u32 %v2413, 4294901760
    %v2415 = vsub.f32 %v2413, %v2414
    %v2416 = vand.u32 %v2415, 4294901760
    %2417 = vmatpush1.msra.mxu0 %v2416
    %2418 = vmatprep.subr.mxu0 0.0
    %v2419 = vand.u32 %v2259, 4294901760
    %v2420 = vsub.f32 %v2259, %v2419
    %v2421 = vand.u32 %v2420, 4294901760
    %v2422 = vsub.f32 %v2420, %v2421
    %v2423 = vand.u32 %v2422, 4294901760
    %2424 = vmatpush1.msra.mxu0 %v2423
    %2425 = vmatprep.subr.mxu0 0.0
    %v2426 = vand.u32 %v2260, 4294901760
    %v2427 = vsub.f32 %v2260, %v2426
    %v2428 = vand.u32 %v2427, 4294901760
    %v2429 = vsub.f32 %v2427, %v2428
    %v2430 = vand.u32 %v2429, 4294901760
    %2431 = vmatpush1.msra.mxu0 %v2430
    %2432 = vmatprep.subr.mxu0 0.0
    %v2433 = vand.u32 %v2261, 4294901760
    %v2434 = vsub.f32 %v2261, %v2433
    %v2435 = vand.u32 %v2434, 4294901760
    %v2436 = vsub.f32 %v2434, %v2435
    %v2437 = vand.u32 %v2436, 4294901760
    %2438 = vmatpush1.msra.mxu0 %v2437
    %2439 = vmatprep.subr.mxu0 0.0
    %v2440 = vand.u32 %v2262, 4294901760
    %v2441 = vsub.f32 %v2262, %v2440
    %v2442 = vand.u32 %v2441, 4294901760
    %v2443 = vsub.f32 %v2441, %v2442
    %v2444 = vand.u32 %v2443, 4294901760
    %2445 = vmatpush1.msra.mxu0 %v2444
    %2446 = vmatprep.subr.mxu0 0.0
    %v2447 = vand.u32 %v2263, 4294901760
    %v2448 = vsub.f32 %v2263, %v2447
    %v2449 = vand.u32 %v2448, 4294901760
    %v2450 = vsub.f32 %v2448, %v2449
    %v2451 = vand.u32 %v2450, 4294901760
    %2452 = vmatpush1.msra.mxu0 %v2451
    %2453 = vmatprep.subr.mxu0 0.0
    %v2454 = vand.u32 %v2264, 4294901760
    %v2455 = vsub.f32 %v2264, %v2454
    %v2456 = vand.u32 %v2455, 4294901760
    %v2457 = vsub.f32 %v2455, %v2456
    %v2458 = vand.u32 %v2457, 4294901760
    %2459 = vmatpush1.msra.mxu0 %v2458
    %2460 = vmatprep.subr.mxu0 0.0
    %v2461 = vand.u32 %v2265, 4294901760
    %v2462 = vsub.f32 %v2265, %v2461
    %v2463 = vand.u32 %v2462, 4294901760
    %v2464 = vsub.f32 %v2462, %v2463
    %v2465 = vand.u32 %v2464, 4294901760
    %2466 = vmatpush1.msra.mxu0 %v2465
    %2467 = vmatprep.subr.mxu0 0.0
    %v2468 = vand.u32 %v2266, 4294901760
    %v2469 = vsub.f32 %v2266, %v2468
    %v2470 = vand.u32 %v2469, 4294901760
    %v2471 = vsub.f32 %v2469, %v2470
    %v2472 = vand.u32 %v2471, 4294901760
    %2473 = vmatpush1.msra.mxu0 %v2472
    %2474 = vmatprep.subr.mxu0 0.0
    %v2475 = vand.u32 %v2267, 4294901760
    %v2476 = vsub.f32 %v2267, %v2475
    %v2477 = vand.u32 %v2476, 4294901760
    %v2478 = vsub.f32 %v2476, %v2477
    %v2479 = vand.u32 %v2478, 4294901760
    %2480 = vmatpush1.msra.mxu0 %v2479
    %2481 = vmatprep.subr.mxu0 0.0
    %2482 = vmatpush1.msra.mxu0 0.0
    %2483 = vmatprep.subr.mxu0 0.0
    %2484 = vmatpush1.msra.mxu0 0.0
    %2485 = vmatprep.subr.mxu0 0.0
    %2486 = vmatpush1.msra.mxu0 0.0
    %2487 = vmatprep.subr.mxu0 0.0
    %2488 = vmatpush1.msra.mxu0 0.0
    %2489 = vmatprep.subr.mxu0 0.0
    %2490 = vmatpush1.msra.mxu0 0.0
    %2491 = vmatprep.subr.mxu0 0.0
    %2492 = vmatpush1.msra.mxu0 0.0
    %2493 = vmatprep.subr.mxu0 0.0
    %2494 = vmatpush1.msra.mxu0 0.0
    %2495 = vmatprep.subr.mxu0 0.0
    %2496 = vmatpush1.msra.mxu0 0.0
    %2497 = vmatprep.subr.mxu0 0.0
    %2498 = vmatpush1.msra.mxu0 0.0
    %2499 = vmatprep.subr.mxu0 0.0
    %2500 = vmatpush1.msra.mxu0 0.0
    %2501 = vmatprep.subr.mxu0 0.0
    %2502 = vmatpush1.msra.mxu0 0.0
    %2503 = vmatprep.subr.mxu0 0.0
    %2504 = vmatpush1.msra.mxu0 0.0
    %2505 = vmatprep.subr.mxu0 0.0
    %2506 = vmatpush1.msra.mxu0 0.0
    %2507 = vmatprep.subr.mxu0 0.0
    %2508 = vmatpush1.msra.mxu0 0.0
    %2509 = vmatprep.subr.mxu0 0.0
    %2510 = vmatpush1.msra.mxu0 0.0
    %2511 = vmatprep.subr.mxu0 0.0
    %2512 = vmatpush1.msra.mxu0 0.0
    %2513 = vmatprep.mubr.f32.mxu0 0.0
    %v2514 = vand.u32 %v2250, 4294901760
    %2515 = vmatmul.mubr.f32.gmra.mrb[0].mxu0 %v2514
    %v2516 = vpop.f32.mrb[0].mxu0
    %v2517 = vadd.f32 %v2356, %v2516
    %v2518 = vpop.f32.mrb[0].mxu0
    %2519 = vmatprep.mubr.f32.mxu0 0.0
    %v2520 = vand.u32 %v2251, 4294901760
    %2521 = vmatmul.mubr.f32.gmra.mrb[0].mxu0 %v2520
    %v2522 = vpop.f32.mrb[0].mxu0
    %v2523 = vadd.f32 %v2366, %v2522
    %v2524 = vpop.f32.mrb[0].mxu0
    %2525 = vdwg.mxu0
    %2526 = vmatprep.subr.mxu0 0.0
    %v2527 = vand.u32 %v2252, 4294901760
    %v2528 = vsub.f32 %v2252, %v2527
    %2529 = vmatpush1.msra.mxu0 %v2528
    %2530 = vmatprep.subr.mxu0 0.0
    %v2531 = vand.u32 %v2253, 4294901760
    %v2532 = vsub.f32 %v2253, %v2531
    %2533 = vmatpush1.msra.mxu0 %v2532
    %2534 = vmatprep.subr.mxu0 0.0
    %v2535 = vand.u32 %v2254, 4294901760
    %v2536 = vsub.f32 %v2254, %v2535
    %2537 = vmatpush1.msra.mxu0 %v2536
    %2538 = vmatprep.subr.mxu0 0.0
    %v2539 = vand.u32 %v2255, 4294901760
    %v2540 = vsub.f32 %v2255, %v2539
    %2541 = vmatpush1.msra.mxu0 %v2540
    %2542 = vmatprep.subr.mxu0 0.0
    %v2543 = vand.u32 %v2256, 4294901760
    %v2544 = vsub.f32 %v2256, %v2543
    %2545 = vmatpush1.msra.mxu0 %v2544
    %2546 = vmatprep.subr.mxu0 0.0
    %v2547 = vand.u32 %v2257, 4294901760
    %v2548 = vsub.f32 %v2257, %v2547
    %2549 = vmatpush1.msra.mxu0 %v2548
    %2550 = vmatprep.subr.mxu0 0.0
    %v2551 = vand.u32 %v2258, 4294901760
    %v2552 = vsub.f32 %v2258, %v2551
    %2553 = vmatpush1.msra.mxu0 %v2552
    %2554 = vmatprep.subr.mxu0 0.0
    %v2555 = vand.u32 %v2259, 4294901760
    %v2556 = vsub.f32 %v2259, %v2555
    %2557 = vmatpush1.msra.mxu0 %v2556
    %2558 = vmatprep.subr.mxu0 0.0
    %v2559 = vand.u32 %v2260, 4294901760
    %v2560 = vsub.f32 %v2260, %v2559
    %2561 = vmatpush1.msra.mxu0 %v2560
    %2562 = vmatprep.subr.mxu0 0.0
    %v2563 = vand.u32 %v2261, 4294901760
    %v2564 = vsub.f32 %v2261, %v2563
    %2565 = vmatpush1.msra.mxu0 %v2564
    %2566 = vmatprep.subr.mxu0 0.0
    %v2567 = vand.u32 %v2262, 4294901760
    %v2568 = vsub.f32 %v2262, %v2567
    %2569 = vmatpush1.msra.mxu0 %v2568
    %2570 = vmatprep.subr.mxu0 0.0
    %v2571 = vand.u32 %v2263, 4294901760
    %v2572 = vsub.f32 %v2263, %v2571
    %2573 = vmatpush1.msra.mxu0 %v2572
    %2574 = vmatprep.subr.mxu0 0.0
    %v2575 = vand.u32 %v2264, 4294901760
    %v2576 = vsub.f32 %v2264, %v2575
    %2577 = vmatpush1.msra.mxu0 %v2576
    %2578 = vmatprep.subr.mxu0 0.0
    %v2579 = vand.u32 %v2265, 4294901760
    %v2580 = vsub.f32 %v2265, %v2579
    %2581 = vmatpush1.msra.mxu0 %v2580
    %2582 = vmatprep.subr.mxu0 0.0
    %v2583 = vand.u32 %v2266, 4294901760
    %v2584 = vsub.f32 %v2266, %v2583
    %2585 = vmatpush1.msra.mxu0 %v2584
    %2586 = vmatprep.subr.mxu0 0.0
    %v2587 = vand.u32 %v2267, 4294901760
    %v2588 = vsub.f32 %v2267, %v2587
    %2589 = vmatpush1.msra.mxu0 %v2588
    %2590 = vmatprep.subr.mxu0 0.0
    %2591 = vmatpush1.msra.mxu0 0.0
    %2592 = vmatprep.subr.mxu0 0.0
    %2593 = vmatpush1.msra.mxu0 0.0
    %2594 = vmatprep.subr.mxu0 0.0
    %2595 = vmatpush1.msra.mxu0 0.0
    %2596 = vmatprep.subr.mxu0 0.0
    %2597 = vmatpush1.msra.mxu0 0.0
    %2598 = vmatprep.subr.mxu0 0.0
    %2599 = vmatpush1.msra.mxu0 0.0
    %2600 = vmatprep.subr.mxu0 0.0
    %2601 = vmatpush1.msra.mxu0 0.0
    %2602 = vmatprep.subr.mxu0 0.0
    %2603 = vmatpush1.msra.mxu0 0.0
    %2604 = vmatprep.subr.mxu0 0.0
    %2605 = vmatpush1.msra.mxu0 0.0
    %2606 = vmatprep.subr.mxu0 0.0
    %2607 = vmatpush1.msra.mxu0 0.0
    %2608 = vmatprep.subr.mxu0 0.0
    %2609 = vmatpush1.msra.mxu0 0.0
    %2610 = vmatprep.subr.mxu0 0.0
    %2611 = vmatpush1.msra.mxu0 0.0
    %2612 = vmatprep.subr.mxu0 0.0
    %2613 = vmatpush1.msra.mxu0 0.0
    %2614 = vmatprep.subr.mxu0 0.0
    %2615 = vmatpush1.msra.mxu0 0.0
    %2616 = vmatprep.subr.mxu0 0.0
    %2617 = vmatpush1.msra.mxu0 0.0
    %2618 = vmatprep.subr.mxu0 0.0
    %2619 = vmatpush1.msra.mxu0 0.0
    %2620 = vmatprep.subr.mxu0 0.0
    %2621 = vmatpush1.msra.mxu0 0.0
    %2622 = vmatprep.mubr.f32.mxu0 0.0
    %v2623 = vand.u32 %v2250, 4294901760
    %v2624 = vsub.f32 %v2250, %v2623
    %2625 = vmatmul.mubr.f32.gmra.mrb[0].mxu0 %v2624
    %v2626 = vpop.f32.mrb[0].mxu0
    %v2627 = vadd.f32 %v2517, %v2626
    %v2628 = vpop.f32.mrb[0].mxu0
    %2629 = vmatprep.mubr.f32.mxu0 0.0
    %v2630 = vand.u32 %v2251, 4294901760
    %v2631 = vsub.f32 %v2251, %v2630
    %2632 = vmatmul.mubr.f32.gmra.mrb[0].mxu0 %v2631
    %v2633 = vpop.f32.mrb[0].mxu0
    %v2634 = vadd.f32 %v2523, %v2633
    %v2635 = vpop.f32.mrb[0].mxu0
    %2636 = vdwg.mxu0
    %2637 = vmatprep.subr.mxu0 0.0
    %v2638 = vand.u32 %v2252, 4294901760
    %2639 = vmatpush1.msra.mxu0 %v2638
    %2640 = vmatprep.subr.mxu0 0.0
    %v2641 = vand.u32 %v2253, 4294901760
    %2642 = vmatpush1.msra.mxu0 %v2641
    %2643 = vmatprep.subr.mxu0 0.0
    %v2644 = vand.u32 %v2254, 4294901760
    %2645 = vmatpush1.msra.mxu0 %v2644
    %2646 = vmatprep.subr.mxu0 0.0
    %v2647 = vand.u32 %v2255, 4294901760
    %2648 = vmatpush1.msra.mxu0 %v2647
    %2649 = vmatprep.subr.mxu0 0.0
    %v2650 = vand.u32 %v2256, 4294901760
    %2651 = vmatpush1.msra.mxu0 %v2650
    %2652 = vmatprep.subr.mxu0 0.0
    %v2653 = vand.u32 %v2257, 4294901760
    %2654 = vmatpush1.msra.mxu0 %v2653
    %2655 = vmatprep.subr.mxu0 0.0
    %v2656 = vand.u32 %v2258, 4294901760
    %2657 = vmatpush1.msra.mxu0 %v2656
    %2658 = vmatprep.subr.mxu0 0.0
    %v2659 = vand.u32 %v2259, 4294901760
    %2660 = vmatpush1.msra.mxu0 %v2659
    %2661 = vmatprep.subr.mxu0 0.0
    %v2662 = vand.u32 %v2260, 4294901760
    %2663 = vmatpush1.msra.mxu0 %v2662
    %2664 = vmatprep.subr.mxu0 0.0
    %v2665 = vand.u32 %v2261, 4294901760
    %2666 = vmatpush1.msra.mxu0 %v2665
    %2667 = vmatprep.subr.mxu0 0.0
    %v2668 = vand.u32 %v2262, 4294901760
    %2669 = vmatpush1.msra.mxu0 %v2668
    %2670 = vmatprep.subr.mxu0 0.0
    %v2671 = vand.u32 %v2263, 4294901760
    %2672 = vmatpush1.msra.mxu0 %v2671
    %2673 = vmatprep.subr.mxu0 0.0
    %v2674 = vand.u32 %v2264, 4294901760
    %2675 = vmatpush1.msra.mxu0 %v2674
    %2676 = vmatprep.subr.mxu0 0.0
    %v2677 = vand.u32 %v2265, 4294901760
    %2678 = vmatpush1.msra.mxu0 %v2677
    %2679 = vmatprep.subr.mxu0 0.0
    %v2680 = vand.u32 %v2266, 4294901760
    %2681 = vmatpush1.msra.mxu0 %v2680
    %2682 = vmatprep.subr.mxu0 0.0
    %v2683 = vand.u32 %v2267, 4294901760
    %2684 = vmatpush1.msra.mxu0 %v2683
    %2685 = vmatprep.subr.mxu0 0.0
    %2686 = vmatpush1.msra.mxu0 0.0
    %2687 = vmatprep.subr.mxu0 0.0
    %2688 = vmatpush1.msra.mxu0 0.0
    %2689 = vmatprep.subr.mxu0 0.0
    %2690 = vmatpush1.msra.mxu0 0.0
    %2691 = vmatprep.subr.mxu0 0.0
    %2692 = vmatpush1.msra.mxu0 0.0
    %2693 = vmatprep.subr.mxu0 0.0
    %2694 = vmatpush1.msra.mxu0 0.0
    %2695 = vmatprep.subr.mxu0 0.0
    %2696 = vmatpush1.msra.mxu0 0.0
    %2697 = vmatprep.subr.mxu0 0.0
    %2698 = vmatpush1.msra.mxu0 0.0
    %2699 = vmatprep.subr.mxu0 0.0
    %2700 = vmatpush1.msra.mxu0 0.0
    %2701 = vmatprep.subr.mxu0 0.0
    %2702 = vmatpush1.msra.mxu0 0.0
    %2703 = vmatprep.subr.mxu0 0.0
    %2704 = vmatpush1.msra.mxu0 0.0
    %2705 = vmatprep.subr.mxu0 0.0
    %2706 = vmatpush1.msra.mxu0 0.0
    %2707 = vmatprep.subr.mxu0 0.0
    %2708 = vmatpush1.msra.mxu0 0.0
    %2709 = vmatprep.subr.mxu0 0.0
    %2710 = vmatpush1.msra.mxu0 0.0
    %2711 = vmatprep.subr.mxu0 0.0
    %2712 = vmatpush1.msra.mxu0 0.0
    %2713 = vmatprep.subr.mxu0 0.0
    %2714 = vmatpush1.msra.mxu0 0.0
    %2715 = vmatprep.subr.mxu0 0.0
    %2716 = vmatpush1.msra.mxu0 0.0
    %2717 = vmatprep.mubr.f32.mxu0 0.0
    %v2718 = vand.u32 %v2250, 4294901760
    %v2719 = vsub.f32 %v2250, %v2718
    %v2720 = vand.u32 %v2719, 4294901760
    %2721 = vmatmul.mubr.f32.gmra.mrb[0].mxu0 %v2720
    %v2722 = vpop.f32.mrb[0].mxu0
    %v2723 = vadd.f32 %v2627, %v2722
    %v2724 = vpop.f32.mrb[0].mxu0
    %2725 = vmatprep.mubr.f32.mxu0 0.0
    %v2726 = vand.u32 %v2251, 4294901760
    %v2727 = vsub.f32 %v2251, %v2726
    %v2728 = vand.u32 %v2727, 4294901760
    %2729 = vmatmul.mubr.f32.gmra.mrb[0].mxu0 %v2728
    %v2730 = vpop.f32.mrb[0].mxu0
    %v2731 = vadd.f32 %v2634, %v2730
    %v2732 = vpop.f32.mrb[0].mxu0
    %2733 = vdwg.mxu0
    %2734 = vmatprep.subr.mxu0 0.0
    %v2735 = vand.u32 %v2252, 4294901760
    %v2736 = vsub.f32 %v2252, %v2735
    %v2737 = vand.u32 %v2736, 4294901760
    %2738 = vmatpush1.msra.mxu0 %v2737
    %2739 = vmatprep.subr.mxu0 0.0
    %v2740 = vand.u32 %v2253, 4294901760
    %v2741 = vsub.f32 %v2253, %v2740
    %v2742 = vand.u32 %v2741, 4294901760
    %2743 = vmatpush1.msra.mxu0 %v2742
    %2744 = vmatprep.subr.mxu0 0.0
    %v2745 = vand.u32 %v2254, 4294901760
    %v2746 = vsub.f32 %v2254, %v2745
    %v2747 = vand.u32 %v2746, 4294901760
    %2748 = vmatpush1.msra.mxu0 %v2747
    %2749 = vmatprep.subr.mxu0 0.0
    %v2750 = vand.u32 %v2255, 4294901760
    %v2751 = vsub.f32 %v2255, %v2750
    %v2752 = vand.u32 %v2751, 4294901760
    %2753 = vmatpush1.msra.mxu0 %v2752
    %2754 = vmatprep.subr.mxu0 0.0
    %v2755 = vand.u32 %v2256, 4294901760
    %v2756 = vsub.f32 %v2256, %v2755
    %v2757 = vand.u32 %v2756, 4294901760
    %2758 = vmatpush1.msra.mxu0 %v2757
    %2759 = vmatprep.subr.mxu0 0.0
    %v2760 = vand.u32 %v2257, 4294901760
    %v2761 = vsub.f32 %v2257, %v2760
    %v2762 = vand.u32 %v2761, 4294901760
    %2763 = vmatpush1.msra.mxu0 %v2762
    %2764 = vmatprep.subr.mxu0 0.0
    %v2765 = vand.u32 %v2258, 4294901760
    %v2766 = vsub.f32 %v2258, %v2765
    %v2767 = vand.u32 %v2766, 4294901760
    %2768 = vmatpush1.msra.mxu0 %v2767
    %2769 = vmatprep.subr.mxu0 0.0
    %v2770 = vand.u32 %v2259, 4294901760
    %v2771 = vsub.f32 %v2259, %v2770
    %v2772 = vand.u32 %v2771, 4294901760
    %2773 = vmatpush1.msra.mxu0 %v2772
    %2774 = vmatprep.subr.mxu0 0.0
    %v2775 = vand.u32 %v2260, 4294901760
    %v2776 = vsub.f32 %v2260, %v2775
    %v2777 = vand.u32 %v2776, 4294901760
    %2778 = vmatpush1.msra.mxu0 %v2777
    %2779 = vmatprep.subr.mxu0 0.0
    %v2780 = vand.u32 %v2261, 4294901760
    %v2781 = vsub.f32 %v2261, %v2780
    %v2782 = vand.u32 %v2781, 4294901760
    %2783 = vmatpush1.msra.mxu0 %v2782
    %2784 = vmatprep.subr.mxu0 0.0
    %v2785 = vand.u32 %v2262, 4294901760
    %v2786 = vsub.f32 %v2262, %v2785
    %v2787 = vand.u32 %v2786, 4294901760
    %2788 = vmatpush1.msra.mxu0 %v2787
    %2789 = vmatprep.subr.mxu0 0.0
    %v2790 = vand.u32 %v2263, 4294901760
    %v2791 = vsub.f32 %v2263, %v2790
    %v2792 = vand.u32 %v2791, 4294901760
    %2793 = vmatpush1.msra.mxu0 %v2792
    %2794 = vmatprep.subr.mxu0 0.0
    %v2795 = vand.u32 %v2264, 4294901760
    %v2796 = vsub.f32 %v2264, %v2795
    %v2797 = vand.u32 %v2796, 4294901760
    %2798 = vmatpush1.msra.mxu0 %v2797
    %2799 = vmatprep.subr.mxu0 0.0
    %v2800 = vand.u32 %v2265, 4294901760
    %v2801 = vsub.f32 %v2265, %v2800
    %v2802 = vand.u32 %v2801, 4294901760
    %2803 = vmatpush1.msra.mxu0 %v2802
    %2804 = vmatprep.subr.mxu0 0.0
    %v2805 = vand.u32 %v2266, 4294901760
    %v2806 = vsub.f32 %v2266, %v2805
    %v2807 = vand.u32 %v2806, 4294901760
    %2808 = vmatpush1.msra.mxu0 %v2807
    %2809 = vmatprep.subr.mxu0 0.0
    %v2810 = vand.u32 %v2267, 4294901760
    %v2811 = vsub.f32 %v2267, %v2810
    %v2812 = vand.u32 %v2811, 4294901760
    %2813 = vmatpush1.msra.mxu0 %v2812
    %2814 = vmatprep.subr.mxu0 0.0
    %2815 = vmatpush1.msra.mxu0 0.0
    %2816 = vmatprep.subr.mxu0 0.0
    %2817 = vmatpush1.msra.mxu0 0.0
    %2818 = vmatprep.subr.mxu0 0.0
    %2819 = vmatpush1.msra.mxu0 0.0
    %2820 = vmatprep.subr.mxu0 0.0
    %2821 = vmatpush1.msra.mxu0 0.0
    %2822 = vmatprep.subr.mxu0 0.0
    %2823 = vmatpush1.msra.mxu0 0.0
    %2824 = vmatprep.subr.mxu0 0.0
    %2825 = vmatpush1.msra.mxu0 0.0
    %2826 = vmatprep.subr.mxu0 0.0
    %2827 = vmatpush1.msra.mxu0 0.0
    %2828 = vmatprep.subr.mxu0 0.0
    %2829 = vmatpush1.msra.mxu0 0.0
    %2830 = vmatprep.subr.mxu0 0.0
    %2831 = vmatpush1.msra.mxu0 0.0
    %2832 = vmatprep.subr.mxu0 0.0
    %2833 = vmatpush1.msra.mxu0 0.0
    %2834 = vmatprep.subr.mxu0 0.0
    %2835 = vmatpush1.msra.mxu0 0.0
    %2836 = vmatprep.subr.mxu0 0.0
    %2837 = vmatpush1.msra.mxu0 0.0
    %2838 = vmatprep.subr.mxu0 0.0
    %2839 = vmatpush1.msra.mxu0 0.0
    %2840 = vmatprep.subr.mxu0 0.0
    %2841 = vmatpush1.msra.mxu0 0.0
    %2842 = vmatprep.subr.mxu0 0.0
    %2843 = vmatpush1.msra.mxu0 0.0
    %2844 = vmatprep.subr.mxu0 0.0
    %2845 = vmatpush1.msra.mxu0 0.0
    %2846 = vmatprep.mubr.f32.mxu0 0.0
    %v2847 = vand.u32 %v2250, 4294901760
    %2848 = vmatmul.mubr.f32.gmra.mrb[0].mxu0 %v2847
    %v2849 = vpop.f32.mrb[0].mxu0
    %v2850 = vadd.f32 %v2723, %v2849
    %v2851 = vpop.f32.mrb[0].mxu0
    %2852 = vmatprep.mubr.f32.mxu0 0.0
    %v2853 = vand.u32 %v2251, 4294901760
    %2854 = vmatmul.mubr.f32.gmra.mrb[0].mxu0 %v2853
    %v2855 = vpop.f32.mrb[0].mxu0
    %v2856 = vadd.f32 %v2731, %v2855
    %v2857 = vpop.f32.mrb[0].mxu0
    %2858 = vdwg.mxu0
    %2859 = vmatprep.subr.mxu0 0.0
    %v2860 = vand.u32 %v2252, 4294901760
    %2861 = vmatpush1.msra.mxu0 %v2860
    %2862 = vmatprep.subr.mxu0 0.0
    %v2863 = vand.u32 %v2253, 4294901760
    %2864 = vmatpush1.msra.mxu0 %v2863
    %2865 = vmatprep.subr.mxu0 0.0
    %v2866 = vand.u32 %v2254, 4294901760
    %2867 = vmatpush1.msra.mxu0 %v2866
    %2868 = vmatprep.subr.mxu0 0.0
    %v2869 = vand.u32 %v2255, 4294901760
    %2870 = vmatpush1.msra.mxu0 %v2869
    %2871 = vmatprep.subr.mxu0 0.0
    %v2872 = vand.u32 %v2256, 4294901760
    %2873 = vmatpush1.msra.mxu0 %v2872
    %2874 = vmatprep.subr.mxu0 0.0
    %v2875 = vand.u32 %v2257, 4294901760
    %2876 = vmatpush1.msra.mxu0 %v2875
    %2877 = vmatprep.subr.mxu0 0.0
    %v2878 = vand.u32 %v2258, 4294901760
    %2879 = vmatpush1.msra.mxu0 %v2878
    %2880 = vmatprep.subr.mxu0 0.0
    %v2881 = vand.u32 %v2259, 4294901760
    %2882 = vmatpush1.msra.mxu0 %v2881
    %2883 = vmatprep.subr.mxu0 0.0
    %v2884 = vand.u32 %v2260, 4294901760
    %2885 = vmatpush1.msra.mxu0 %v2884
    %2886 = vmatprep.subr.mxu0 0.0
    %v2887 = vand.u32 %v2261, 4294901760
    %2888 = vmatpush1.msra.mxu0 %v2887
    %2889 = vmatprep.subr.mxu0 0.0
    %v2890 = vand.u32 %v2262, 4294901760
    %2891 = vmatpush1.msra.mxu0 %v2890
    %2892 = vmatprep.subr.mxu0 0.0
    %v2893 = vand.u32 %v2263, 4294901760
    %2894 = vmatpush1.msra.mxu0 %v2893
    %2895 = vmatprep.subr.mxu0 0.0
    %v2896 = vand.u32 %v2264, 4294901760
    %2897 = vmatpush1.msra.mxu0 %v2896
    %2898 = vmatprep.subr.mxu0 0.0
    %v2899 = vand.u32 %v2265, 4294901760
    %2900 = vmatpush1.msra.mxu0 %v2899
    %2901 = vmatprep.subr.mxu0 0.0
    %v2902 = vand.u32 %v2266, 4294901760
    %2903 = vmatpush1.msra.mxu0 %v2902
    %2904 = vmatprep.subr.mxu0 0.0
    %v2905 = vand.u32 %v2267, 4294901760
    %2906 = vmatpush1.msra.mxu0 %v2905
    %2907 = vmatprep.subr.mxu0 0.0
    %2908 = vmatpush1.msra.mxu0 0.0
    %2909 = vmatprep.subr.mxu0 0.0
    %2910 = vmatpush1.msra.mxu0 0.0
    %2911 = vmatprep.subr.mxu0 0.0
    %2912 = vmatpush1.msra.mxu0 0.0
    %2913 = vmatprep.subr.mxu0 0.0
    %2914 = vmatpush1.msra.mxu0 0.0
    %2915 = vmatprep.subr.mxu0 0.0
    %2916 = vmatpush1.msra.mxu0 0.0
    %2917 = vmatprep.subr.mxu0 0.0
    %2918 = vmatpush1.msra.mxu0 0.0
    %2919 = vmatprep.subr.mxu0 0.0
    %2920 = vmatpush1.msra.mxu0 0.0
    %2921 = vmatprep.subr.mxu0 0.0
    %2922 = vmatpush1.msra.mxu0 0.0
    %2923 = vmatprep.subr.mxu0 0.0
    %2924 = vmatpush1.msra.mxu0 0.0
    %2925 = vmatprep.subr.mxu0 0.0
    %2926 = vmatpush1.msra.mxu0 0.0
    %2927 = vmatprep.subr.mxu0 0.0
    %2928 = vmatpush1.msra.mxu0 0.0
    %2929 = vmatprep.subr.mxu0 0.0
    %2930 = vmatpush1.msra.mxu0 0.0
    %2931 = vmatprep.subr.mxu0 0.0
    %2932 = vmatpush1.msra.mxu0 0.0
    %2933 = vmatprep.subr.mxu0 0.0
    %2934 = vmatpush1.msra.mxu0 0.0
    %2935 = vmatprep.subr.mxu0 0.0
    %2936 = vmatpush1.msra.mxu0 0.0
    %2937 = vmatprep.subr.mxu0 0.0
    %2938 = vmatpush1.msra.mxu0 0.0
    %2939 = vmatprep.mubr.f32.mxu0 0.0
    %v2940 = vand.u32 %v2250, 4294901760
    %2941 = vmatmul.mubr.f32.gmra.mrb[0].mxu0 %v2940
    %v2942 = vpop.f32.mrb[0].mxu0
    %v2943 = vadd.f32 %v2850, %v2942
    %v2944 = vpop.f32.mrb[0].mxu0
    %2945 = vmatprep.mubr.f32.mxu0 0.0
    %v2946 = vand.u32 %v2251, 4294901760
    %2947 = vmatmul.mubr.f32.gmra.mrb[0].mxu0 %v2946
    %v2948 = vpop.f32.mrb[0].mxu0
    %v2949 = vadd.f32 %v2856, %v2948
    %v2950 = vpop.f32.mrb[0].mxu0
    %2951 = vdwg.mxu0
    %v2952 = vsub.f32 %v1487, %v2943
    %v2953 = vsub.f32 %v1488, %v2949
    %v2954 = vld [vmem:[%s8] sm:$0xff]
    %v2955 = vld [vmem:[%s8 + $0x8] sm:$0xff]
    %v2956 = vld [vmem:[%s8 + $0x10] sm:$0xff]
    %v2957 = vld [vmem:[%s8 + $0x18] sm:$0xff]
    %v2958 = vld [vmem:[%s8 + $0x20] sm:$0xff]
    %v2959 = vld [vmem:[%s8 + $0x28] sm:$0xff]
    %v2960 = vld [vmem:[%s8 + $0x30] sm:$0xff]
    %v2961 = vld [vmem:[%s8 + $0x38] sm:$0xff]
    %v2962 = vld [vmem:[%s8 + $0x40] sm:$0xff]
    %v2963 = vld [vmem:[%s8 + $0x48] sm:$0xff]
    %v2964 = vld [vmem:[%s8 + $0x50] sm:$0xff]
    %v2965 = vld [vmem:[%s8 + $0x58] sm:$0xff]
    %v2966 = vld [vmem:[%s8 + $0x60] sm:$0xff]
    %v2967 = vld [vmem:[%s8 + $0x68] sm:$0xff]
    %v2968 = vld [vmem:[%s8 + $0x70] sm:$0xff]
    %v2969 = vld [vmem:[%s8 + $0x78] sm:$0xff]
    %2970 = vmatprep.subr.mxu0 0.0
    %v2971 = vand.u32 %v2954, 4294901760
    %2972 = vmatpush1.msra.mxu0 %v2971
    %2973 = vmatprep.subr.mxu0 0.0
    %v2974 = vand.u32 %v2955, 4294901760
    %2975 = vmatpush1.msra.mxu0 %v2974
    %2976 = vmatprep.subr.mxu0 0.0
    %v2977 = vand.u32 %v2956, 4294901760
    %2978 = vmatpush1.msra.mxu0 %v2977
    %2979 = vmatprep.subr.mxu0 0.0
    %v2980 = vand.u32 %v2957, 4294901760
    %2981 = vmatpush1.msra.mxu0 %v2980
    %2982 = vmatprep.subr.mxu0 0.0
    %v2983 = vand.u32 %v2958, 4294901760
    %2984 = vmatpush1.msra.mxu0 %v2983
    %2985 = vmatprep.subr.mxu0 0.0
    %v2986 = vand.u32 %v2959, 4294901760
    %2987 = vmatpush1.msra.mxu0 %v2986
    %2988 = vmatprep.subr.mxu0 0.0
    %v2989 = vand.u32 %v2960, 4294901760
    %2990 = vmatpush1.msra.mxu0 %v2989
    %2991 = vmatprep.subr.mxu0 0.0
    %v2992 = vand.u32 %v2961, 4294901760
    %2993 = vmatpush1.msra.mxu0 %v2992
    %2994 = vmatprep.subr.mxu0 0.0
    %v2995 = vand.u32 %v2962, 4294901760
    %2996 = vmatpush1.msra.mxu0 %v2995
    %2997 = vmatprep.subr.mxu0 0.0
    %v2998 = vand.u32 %v2963, 4294901760
    %2999 = vmatpush1.msra.mxu0 %v2998
    %3000 = vmatprep.subr.mxu0 0.0
    %v3001 = vand.u32 %v2964, 4294901760
    %3002 = vmatpush1.msra.mxu0 %v3001
    %3003 = vmatprep.subr.mxu0 0.0
    %v3004 = vand.u32 %v2965, 4294901760
    %3005 = vmatpush1.msra.mxu0 %v3004
    %3006 = vmatprep.subr.mxu0 0.0
    %v3007 = vand.u32 %v2966, 4294901760
    %3008 = vmatpush1.msra.mxu0 %v3007
    %3009 = vmatprep.subr.mxu0 0.0
    %v3010 = vand.u32 %v2967, 4294901760
    %3011 = vmatpush1.msra.mxu0 %v3010
    %3012 = vmatprep.subr.mxu0 0.0
    %v3013 = vand.u32 %v2968, 4294901760
    %3014 = vmatpush1.msra.mxu0 %v3013
    %3015 = vmatprep.subr.mxu0 0.0
    %v3016 = vand.u32 %v2969, 4294901760
    %3017 = vmatpush1.msra.mxu0 %v3016
    %3018 = vmatprep.subr.mxu0 0.0
    %3019 = vmatpush1.msra.mxu0 0.0
    %3020 = vmatprep.subr.mxu0 0.0
    %3021 = vmatpush1.msra.mxu0 0.0
    %3022 = vmatprep.subr.mxu0 0.0
    %3023 = vmatpush1.msra.mxu0 0.0
    %3024 = vmatprep.subr.mxu0 0.0
    %3025 = vmatpush1.msra.mxu0 0.0
    %3026 = vmatprep.subr.mxu0 0.0
    %3027 = vmatpush1.msra.mxu0 0.0
    %3028 = vmatprep.subr.mxu0 0.0
    %3029 = vmatpush1.msra.mxu0 0.0
    %3030 = vmatprep.subr.mxu0 0.0
    %3031 = vmatpush1.msra.mxu0 0.0
    %3032 = vmatprep.subr.mxu0 0.0
    %3033 = vmatpush1.msra.mxu0 0.0
    %3034 = vmatprep.subr.mxu0 0.0
    %3035 = vmatpush1.msra.mxu0 0.0
    %3036 = vmatprep.subr.mxu0 0.0
    %3037 = vmatpush1.msra.mxu0 0.0
    %3038 = vmatprep.subr.mxu0 0.0
    %3039 = vmatpush1.msra.mxu0 0.0
    %3040 = vmatprep.subr.mxu0 0.0
    %3041 = vmatpush1.msra.mxu0 0.0
    %3042 = vmatprep.subr.mxu0 0.0
    %3043 = vmatpush1.msra.mxu0 0.0
    %3044 = vmatprep.subr.mxu0 0.0
    %3045 = vmatpush1.msra.mxu0 0.0
    %3046 = vmatprep.subr.mxu0 0.0
    %3047 = vmatpush1.msra.mxu0 0.0
    %3048 = vmatprep.subr.mxu0 0.0
    %3049 = vmatpush1.msra.mxu0 0.0
    %3050 = vmatprep.mubr.f32.mxu0 0.0
    %v3051 = vand.u32 %v2943, 4294901760
    %v3052 = vsub.f32 %v2943, %v3051
    %v3053 = vand.u32 %v3052, 4294901760
    %v3054 = vsub.f32 %v3052, %v3053
    %v3055 = vand.u32 %v3054, 4294901760
    %3056 = vmatmul.mubr.f32.gmra.mrb[0].mxu0 %v3055
    %v3057 = vpop.f32.mrb[0].mxu0
    %v3058 = vadd.f32 0.0, %v3057
    %v3059 = vpop.f32.mrb[0].mxu0
    %3060 = vmatprep.mubr.f32.mxu0 0.0
    %v3061 = vand.u32 %v2949, 4294901760
    %v3062 = vsub.f32 %v2949, %v3061
    %v3063 = vand.u32 %v3062, 4294901760
    %v3064 = vsub.f32 %v3062, %v3063
    %v3065 = vand.u32 %v3064, 4294901760
    %3066 = vmatmul.mubr.f32.gmra.mrb[0].mxu0 %v3065
    %v3067 = vpop.f32.mrb[0].mxu0
    %v3068 = vadd.f32 0.0, %v3067
    %v3069 = vpop.f32.mrb[0].mxu0
    %3070 = vdwg.mxu0
    %3071 = vmatprep.subr.mxu0 0.0
    %v3072 = vand.u32 %v2954, 4294901760
    %v3073 = vsub.f32 %v2954, %v3072
    %v3074 = vand.u32 %v3073, 4294901760
    %v3075 = vsub.f32 %v3073, %v3074
    %v3076 = vand.u32 %v3075, 4294901760
    %3077 = vmatpush1.msra.mxu0 %v3076
    %3078 = vmatprep.subr.mxu0 0.0
    %v3079 = vand.u32 %v2955, 4294901760
    %v3080 = vsub.f32 %v2955, %v3079
    %v3081 = vand.u32 %v3080, 4294901760
    %v3082 = vsub.f32 %v3080, %v3081
    %v3083 = vand.u32 %v3082, 4294901760
    %3084 = vmatpush1.msra.mxu0 %v3083
    %3085 = vmatprep.subr.mxu0 0.0
    %v3086 = vand.u32 %v2956, 4294901760
    %v3087 = vsub.f32 %v2956, %v3086
    %v3088 = vand.u32 %v3087, 4294901760
    %v3089 = vsub.f32 %v3087, %v3088
    %v3090 = vand.u32 %v3089, 4294901760
    %3091 = vmatpush1.msra.mxu0 %v3090
    %3092 = vmatprep.subr.mxu0 0.0
    %v3093 = vand.u32 %v2957, 4294901760
    %v3094 = vsub.f32 %v2957, %v3093
    %v3095 = vand.u32 %v3094, 4294901760
    %v3096 = vsub.f32 %v3094, %v3095
    %v3097 = vand.u32 %v3096, 4294901760
    %3098 = vmatpush1.msra.mxu0 %v3097
    %3099 = vmatprep.subr.mxu0 0.0
    %v3100 = vand.u32 %v2958, 4294901760
    %v3101 = vsub.f32 %v2958, %v3100
    %v3102 = vand.u32 %v3101, 4294901760
    %v3103 = vsub.f32 %v3101, %v3102
    %v3104 = vand.u32 %v3103, 4294901760
    %3105 = vmatpush1.msra.mxu0 %v3104
    %3106 = vmatprep.subr.mxu0 0.0
    %v3107 = vand.u32 %v2959, 4294901760
    %v3108 = vsub.f32 %v2959, %v3107
    %v3109 = vand.u32 %v3108, 4294901760
    %v3110 = vsub.f32 %v3108, %v3109
    %v3111 = vand.u32 %v3110, 4294901760
    %3112 = vmatpush1.msra.mxu0 %v3111
    %3113 = vmatprep.subr.mxu0 0.0
    %v3114 = vand.u32 %v2960, 4294901760
    %v3115 = vsub.f32 %v2960, %v3114
    %v3116 = vand.u32 %v3115, 4294901760
    %v3117 = vsub.f32 %v3115, %v3116
    %v3118 = vand.u32 %v3117, 4294901760
    %3119 = vmatpush1.msra.mxu0 %v3118
    %3120 = vmatprep.subr.mxu0 0.0
    %v3121 = vand.u32 %v2961, 4294901760
    %v3122 = vsub.f32 %v2961, %v3121
    %v3123 = vand.u32 %v3122, 4294901760
    %v3124 = vsub.f32 %v3122, %v3123
    %v3125 = vand.u32 %v3124, 4294901760
    %3126 = vmatpush1.msra.mxu0 %v3125
    %3127 = vmatprep.subr.mxu0 0.0
    %v3128 = vand.u32 %v2962, 4294901760
    %v3129 = vsub.f32 %v2962, %v3128
    %v3130 = vand.u32 %v3129, 4294901760
    %v3131 = vsub.f32 %v3129, %v3130
    %v3132 = vand.u32 %v3131, 4294901760
    %3133 = vmatpush1.msra.mxu0 %v3132
    %3134 = vmatprep.subr.mxu0 0.0
    %v3135 = vand.u32 %v2963, 4294901760
    %v3136 = vsub.f32 %v2963, %v3135
    %v3137 = vand.u32 %v3136, 4294901760
    %v3138 = vsub.f32 %v3136, %v3137
    %v3139 = vand.u32 %v3138, 4294901760
    %3140 = vmatpush1.msra.mxu0 %v3139
    %3141 = vmatprep.subr.mxu0 0.0
    %v3142 = vand.u32 %v2964, 4294901760
    %v3143 = vsub.f32 %v2964, %v3142
    %v3144 = vand.u32 %v3143, 4294901760
    %v3145 = vsub.f32 %v3143, %v3144
    %v3146 = vand.u32 %v3145, 4294901760
    %3147 = vmatpush1.msra.mxu0 %v3146
    %3148 = vmatprep.subr.mxu0 0.0
    %v3149 = vand.u32 %v2965, 4294901760
    %v3150 = vsub.f32 %v2965, %v3149
    %v3151 = vand.u32 %v3150, 4294901760
    %v3152 = vsub.f32 %v3150, %v3151
    %v3153 = vand.u32 %v3152, 4294901760
    %3154 = vmatpush1.msra.mxu0 %v3153
    %3155 = vmatprep.subr.mxu0 0.0
    %v3156 = vand.u32 %v2966, 4294901760
    %v3157 = vsub.f32 %v2966, %v3156
    %v3158 = vand.u32 %v3157, 4294901760
    %v3159 = vsub.f32 %v3157, %v3158
    %v3160 = vand.u32 %v3159, 4294901760
    %3161 = vmatpush1.msra.mxu0 %v3160
    %3162 = vmatprep.subr.mxu0 0.0
    %v3163 = vand.u32 %v2967, 4294901760
    %v3164 = vsub.f32 %v2967, %v3163
    %v3165 = vand.u32 %v3164, 4294901760
    %v3166 = vsub.f32 %v3164, %v3165
    %v3167 = vand.u32 %v3166, 4294901760
    %3168 = vmatpush1.msra.mxu0 %v3167
    %3169 = vmatprep.subr.mxu0 0.0
    %v3170 = vand.u32 %v2968, 4294901760
    %v3171 = vsub.f32 %v2968, %v3170
    %v3172 = vand.u32 %v3171, 4294901760
    %v3173 = vsub.f32 %v3171, %v3172
    %v3174 = vand.u32 %v3173, 4294901760
    %3175 = vmatpush1.msra.mxu0 %v3174
    %3176 = vmatprep.subr.mxu0 0.0
    %v3177 = vand.u32 %v2969, 4294901760
    %v3178 = vsub.f32 %v2969, %v3177
    %v3179 = vand.u32 %v3178, 4294901760
    %v3180 = vsub.f32 %v3178, %v3179
    %v3181 = vand.u32 %v3180, 4294901760
    %3182 = vmatpush1.msra.mxu0 %v3181
    %3183 = vmatprep.subr.mxu0 0.0
    %3184 = vmatpush1.msra.mxu0 0.0
    %3185 = vmatprep.subr.mxu0 0.0
    %3186 = vmatpush1.msra.mxu0 0.0
    %3187 = vmatprep.subr.mxu0 0.0
    %3188 = vmatpush1.msra.mxu0 0.0
    %3189 = vmatprep.subr.mxu0 0.0
    %3190 = vmatpush1.msra.mxu0 0.0
    %3191 = vmatprep.subr.mxu0 0.0
    %3192 = vmatpush1.msra.mxu0 0.0
    %3193 = vmatprep.subr.mxu0 0.0
    %3194 = vmatpush1.msra.mxu0 0.0
    %3195 = vmatprep.subr.mxu0 0.0
    %3196 = vmatpush1.msra.mxu0 0.0
    %3197 = vmatprep.subr.mxu0 0.0
    %3198 = vmatpush1.msra.mxu0 0.0
    %3199 = vmatprep.subr.mxu0 0.0
    %3200 = vmatpush1.msra.mxu0 0.0
    %3201 = vmatprep.subr.mxu0 0.0
    %3202 = vmatpush1.msra.mxu0 0.0
    %3203 = vmatprep.subr.mxu0 0.0
    %3204 = vmatpush1.msra.mxu0 0.0
    %3205 = vmatprep.subr.mxu0 0.0
    %3206 = vmatpush1.msra.mxu0 0.0
    %3207 = vmatprep.subr.mxu0 0.0
    %3208 = vmatpush1.msra.mxu0 0.0
    %3209 = vmatprep.subr.mxu0 0.0
    %3210 = vmatpush1.msra.mxu0 0.0
    %3211 = vmatprep.subr.mxu0 0.0
    %3212 = vmatpush1.msra.mxu0 0.0
    %3213 = vmatprep.subr.mxu0 0.0
    %3214 = vmatpush1.msra.mxu0 0.0
    %3215 = vmatprep.mubr.f32.mxu0 0.0
    %v3216 = vand.u32 %v2943, 4294901760
    %3217 = vmatmul.mubr.f32.gmra.mrb[0].mxu0 %v3216
    %v3218 = vpop.f32.mrb[0].mxu0
    %v3219 = vadd.f32 %v3058, %v3218
    %v3220 = vpop.f32.mrb[0].mxu0
    %3221 = vmatprep.mubr.f32.mxu0 0.0
    %v3222 = vand.u32 %v2949, 4294901760
    %3223 = vmatmul.mubr.f32.gmra.mrb[0].mxu0 %v3222
    %v3224 = vpop.f32.mrb[0].mxu0
    %v3225 = vadd.f32 %v3068, %v3224
    %v3226 = vpop.f32.mrb[0].mxu0
    %3227 = vdwg.mxu0
    %3228 = vmatprep.subr.mxu0 0.0
    %v3229 = vand.u32 %v2954, 4294901760
    %v3230 = vsub.f32 %v2954, %v3229
    %3231 = vmatpush1.msra.mxu0 %v3230
    %3232 = vmatprep.subr.mxu0 0.0
    %v3233 = vand.u32 %v2955, 4294901760
    %v3234 = vsub.f32 %v2955, %v3233
    %3235 = vmatpush1.msra.mxu0 %v3234
    %3236 = vmatprep.subr.mxu0 0.0
    %v3237 = vand.u32 %v2956, 4294901760
    %v3238 = vsub.f32 %v2956, %v3237
    %3239 = vmatpush1.msra.mxu0 %v3238
    %3240 = vmatprep.subr.mxu0 0.0
    %v3241 = vand.u32 %v2957, 4294901760
    %v3242 = vsub.f32 %v2957, %v3241
    %3243 = vmatpush1.msra.mxu0 %v3242
    %3244 = vmatprep.subr.mxu0 0.0
    %v3245 = vand.u32 %v2958, 4294901760
    %v3246 = vsub.f32 %v2958, %v3245
    %3247 = vmatpush1.msra.mxu0 %v3246
    %3248 = vmatprep.subr.mxu0 0.0
    %v3249 = vand.u32 %v2959, 4294901760
    %v3250 = vsub.f32 %v2959, %v3249
    %3251 = vmatpush1.msra.mxu0 %v3250
    %3252 = vmatprep.subr.mxu0 0.0
    %v3253 = vand.u32 %v2960, 4294901760
    %v3254 = vsub.f32 %v2960, %v3253
    %3255 = vmatpush1.msra.mxu0 %v3254
    %3256 = vmatprep.subr.mxu0 0.0
    %v3257 = vand.u32 %v2961, 4294901760
    %v3258 = vsub.f32 %v2961, %v3257
    %3259 = vmatpush1.msra.mxu0 %v3258
    %3260 = vmatprep.subr.mxu0 0.0
    %v3261 = vand.u32 %v2962, 4294901760
    %v3262 = vsub.f32 %v2962, %v3261
    %3263 = vmatpush1.msra.mxu0 %v3262
    %3264 = vmatprep.subr.mxu0 0.0
    %v3265 = vand.u32 %v2963, 4294901760
    %v3266 = vsub.f32 %v2963, %v3265
    %3267 = vmatpush1.msra.mxu0 %v3266
    %3268 = vmatprep.subr.mxu0 0.0
    %v3269 = vand.u32 %v2964, 4294901760
    %v3270 = vsub.f32 %v2964, %v3269
    %3271 = vmatpush1.msra.mxu0 %v3270
    %3272 = vmatprep.subr.mxu0 0.0
    %v3273 = vand.u32 %v2965, 4294901760
    %v3274 = vsub.f32 %v2965, %v3273
    %3275 = vmatpush1.msra.mxu0 %v3274
    %3276 = vmatprep.subr.mxu0 0.0
    %v3277 = vand.u32 %v2966, 4294901760
    %v3278 = vsub.f32 %v2966, %v3277
    %3279 = vmatpush1.msra.mxu0 %v3278
    %3280 = vmatprep.subr.mxu0 0.0
    %v3281 = vand.u32 %v2967, 4294901760
    %v3282 = vsub.f32 %v2967, %v3281
    %3283 = vmatpush1.msra.mxu0 %v3282
    %3284 = vmatprep.subr.mxu0 0.0
    %v3285 = vand.u32 %v2968, 4294901760
    %v3286 = vsub.f32 %v2968, %v3285
    %3287 = vmatpush1.msra.mxu0 %v3286
    %3288 = vmatprep.subr.mxu0 0.0
    %v3289 = vand.u32 %v2969, 4294901760
    %v3290 = vsub.f32 %v2969, %v3289
    %3291 = vmatpush1.msra.mxu0 %v3290
    %3292 = vmatprep.subr.mxu0 0.0
    %3293 = vmatpush1.msra.mxu0 0.0
    %3294 = vmatprep.subr.mxu0 0.0
    %3295 = vmatpush1.msra.mxu0 0.0
    %3296 = vmatprep.subr.mxu0 0.0
    %3297 = vmatpush1.msra.mxu0 0.0
    %3298 = vmatprep.subr.mxu0 0.0
    %3299 = vmatpush1.msra.mxu0 0.0
    %3300 = vmatprep.subr.mxu0 0.0
    %3301 = vmatpush1.msra.mxu0 0.0
    %3302 = vmatprep.subr.mxu0 0.0
    %3303 = vmatpush1.msra.mxu0 0.0
    %3304 = vmatprep.subr.mxu0 0.0
    %3305 = vmatpush1.msra.mxu0 0.0
    %3306 = vmatprep.subr.mxu0 0.0
    %3307 = vmatpush1.msra.mxu0 0.0
    %3308 = vmatprep.subr.mxu0 0.0
    %3309 = vmatpush1.msra.mxu0 0.0
    %3310 = vmatprep.subr.mxu0 0.0
    %3311 = vmatpush1.msra.mxu0 0.0
    %3312 = vmatprep.subr.mxu0 0.0
    %3313 = vmatpush1.msra.mxu0 0.0
    %3314 = vmatprep.subr.mxu0 0.0
    %3315 = vmatpush1.msra.mxu0 0.0
    %3316 = vmatprep.subr.mxu0 0.0
    %3317 = vmatpush1.msra.mxu0 0.0
    %3318 = vmatprep.subr.mxu0 0.0
    %3319 = vmatpush1.msra.mxu0 0.0
    %3320 = vmatprep.subr.mxu0 0.0
    %3321 = vmatpush1.msra.mxu0 0.0
    %3322 = vmatprep.subr.mxu0 0.0
    %3323 = vmatpush1.msra.mxu0 0.0
    %3324 = vmatprep.mubr.f32.mxu0 0.0
    %v3325 = vand.u32 %v2943, 4294901760
    %v3326 = vsub.f32 %v2943, %v3325
    %3327 = vmatmul.mubr.f32.gmra.mrb[0].mxu0 %v3326
    %v3328 = vpop.f32.mrb[0].mxu0
    %v3329 = vadd.f32 %v3219, %v3328
    %v3330 = vpop.f32.mrb[0].mxu0
    %3331 = vmatprep.mubr.f32.mxu0 0.0
    %v3332 = vand.u32 %v2949, 4294901760
    %v3333 = vsub.f32 %v2949, %v3332
    %3334 = vmatmul.mubr.f32.gmra.mrb[0].mxu0 %v3333
    %v3335 = vpop.f32.mrb[0].mxu0
    %v3336 = vadd.f32 %v3225, %v3335
    %v3337 = vpop.f32.mrb[0].mxu0
    %3338 = vdwg.mxu0
    %3339 = vmatprep.subr.mxu0 0.0
    %v3340 = vand.u32 %v2954, 4294901760
    %3341 = vmatpush1.msra.mxu0 %v3340
    %3342 = vmatprep.subr.mxu0 0.0
    %v3343 = vand.u32 %v2955, 4294901760
    %3344 = vmatpush1.msra.mxu0 %v3343
    %3345 = vmatprep.subr.mxu0 0.0
    %v3346 = vand.u32 %v2956, 4294901760
    %3347 = vmatpush1.msra.mxu0 %v3346
    %3348 = vmatprep.subr.mxu0 0.0
    %v3349 = vand.u32 %v2957, 4294901760
    %3350 = vmatpush1.msra.mxu0 %v3349
    %3351 = vmatprep.subr.mxu0 0.0
    %v3352 = vand.u32 %v2958, 4294901760
    %3353 = vmatpush1.msra.mxu0 %v3352
    %3354 = vmatprep.subr.mxu0 0.0
    %v3355 = vand.u32 %v2959, 4294901760
    %3356 = vmatpush1.msra.mxu0 %v3355
    %3357 = vmatprep.subr.mxu0 0.0
    %v3358 = vand.u32 %v2960, 4294901760
    %3359 = vmatpush1.msra.mxu0 %v3358
    %3360 = vmatprep.subr.mxu0 0.0
    %v3361 = vand.u32 %v2961, 4294901760
    %3362 = vmatpush1.msra.mxu0 %v3361
    %3363 = vmatprep.subr.mxu0 0.0
    %v3364 = vand.u32 %v2962, 4294901760
    %3365 = vmatpush1.msra.mxu0 %v3364
    %3366 = vmatprep.subr.mxu0 0.0
    %v3367 = vand.u32 %v2963, 4294901760
    %3368 = vmatpush1.msra.mxu0 %v3367
    %3369 = vmatprep.subr.mxu0 0.0
    %v3370 = vand.u32 %v2964, 4294901760
    %3371 = vmatpush1.msra.mxu0 %v3370
    %3372 = vmatprep.subr.mxu0 0.0
    %v3373 = vand.u32 %v2965, 4294901760
    %3374 = vmatpush1.msra.mxu0 %v3373
    %3375 = vmatprep.subr.mxu0 0.0
    %v3376 = vand.u32 %v2966, 4294901760
    %3377 = vmatpush1.msra.mxu0 %v3376
    %3378 = vmatprep.subr.mxu0 0.0
    %v3379 = vand.u32 %v2967, 4294901760
    %3380 = vmatpush1.msra.mxu0 %v3379
    %3381 = vmatprep.subr.mxu0 0.0
    %v3382 = vand.u32 %v2968, 4294901760
    %3383 = vmatpush1.msra.mxu0 %v3382
    %3384 = vmatprep.subr.mxu0 0.0
    %v3385 = vand.u32 %v2969, 4294901760
    %3386 = vmatpush1.msra.mxu0 %v3385
    %3387 = vmatprep.subr.mxu0 0.0
    %3388 = vmatpush1.msra.mxu0 0.0
    %3389 = vmatprep.subr.mxu0 0.0
    %3390 = vmatpush1.msra.mxu0 0.0
    %3391 = vmatprep.subr.mxu0 0.0
    %3392 = vmatpush1.msra.mxu0 0.0
    %3393 = vmatprep.subr.mxu0 0.0
    %3394 = vmatpush1.msra.mxu0 0.0
    %3395 = vmatprep.subr.mxu0 0.0
    %3396 = vmatpush1.msra.mxu0 0.0
    %3397 = vmatprep.subr.mxu0 0.0
    %3398 = vmatpush1.msra.mxu0 0.0
    %3399 = vmatprep.subr.mxu0 0.0
    %3400 = vmatpush1.msra.mxu0 0.0
    %3401 = vmatprep.subr.mxu0 0.0
    %3402 = vmatpush1.msra.mxu0 0.0
    %3403 = vmatprep.subr.mxu0 0.0
    %3404 = vmatpush1.msra.mxu0 0.0
    %3405 = vmatprep.subr.mxu0 0.0
    %3406 = vmatpush1.msra.mxu0 0.0
    %3407 = vmatprep.subr.mxu0 0.0
    %3408 = vmatpush1.msra.mxu0 0.0
    %3409 = vmatprep.subr.mxu0 0.0
    %3410 = vmatpush1.msra.mxu0 0.0
    %3411 = vmatprep.subr.mxu0 0.0
    %3412 = vmatpush1.msra.mxu0 0.0
    %3413 = vmatprep.subr.mxu0 0.0
    %3414 = vmatpush1.msra.mxu0 0.0
    %3415 = vmatprep.subr.mxu0 0.0
    %3416 = vmatpush1.msra.mxu0 0.0
    %3417 = vmatprep.subr.mxu0 0.0
    %3418 = vmatpush1.msra.mxu0 0.0
    %3419 = vmatprep.mubr.f32.mxu0 0.0
    %v3420 = vand.u32 %v2943, 4294901760
    %v3421 = vsub.f32 %v2943, %v3420
    %v3422 = vand.u32 %v3421, 4294901760
    %3423 = vmatmul.mubr.f32.gmra.mrb[0].mxu0 %v3422
    %v3424 = vpop.f32.mrb[0].mxu0
    %v3425 = vadd.f32 %v3329, %v3424
    %v3426 = vpop.f32.mrb[0].mxu0
    %3427 = vmatprep.mubr.f32.mxu0 0.0
    %v3428 = vand.u32 %v2949, 4294901760
    %v3429 = vsub.f32 %v2949, %v3428
    %v3430 = vand.u32 %v3429, 4294901760
    %3431 = vmatmul.mubr.f32.gmra.mrb[0].mxu0 %v3430
    %v3432 = vpop.f32.mrb[0].mxu0
    %v3433 = vadd.f32 %v3336, %v3432
    %v3434 = vpop.f32.mrb[0].mxu0
    %3435 = vdwg.mxu0
    %3436 = vmatprep.subr.mxu0 0.0
    %v3437 = vand.u32 %v2954, 4294901760
    %v3438 = vsub.f32 %v2954, %v3437
    %v3439 = vand.u32 %v3438, 4294901760
    %3440 = vmatpush1.msra.mxu0 %v3439
    %3441 = vmatprep.subr.mxu0 0.0
    %v3442 = vand.u32 %v2955, 4294901760
    %v3443 = vsub.f32 %v2955, %v3442
    %v3444 = vand.u32 %v3443, 4294901760
    %3445 = vmatpush1.msra.mxu0 %v3444
    %3446 = vmatprep.subr.mxu0 0.0
    %v3447 = vand.u32 %v2956, 4294901760
    %v3448 = vsub.f32 %v2956, %v3447
    %v3449 = vand.u32 %v3448, 4294901760
    %3450 = vmatpush1.msra.mxu0 %v3449
    %3451 = vmatprep.subr.mxu0 0.0
    %v3452 = vand.u32 %v2957, 4294901760
    %v3453 = vsub.f32 %v2957, %v3452
    %v3454 = vand.u32 %v3453, 4294901760
    %3455 = vmatpush1.msra.mxu0 %v3454
    %3456 = vmatprep.subr.mxu0 0.0
    %v3457 = vand.u32 %v2958, 4294901760
    %v3458 = vsub.f32 %v2958, %v3457
    %v3459 = vand.u32 %v3458, 4294901760
    %3460 = vmatpush1.msra.mxu0 %v3459
    %3461 = vmatprep.subr.mxu0 0.0
    %v3462 = vand.u32 %v2959, 4294901760
    %v3463 = vsub.f32 %v2959, %v3462
    %v3464 = vand.u32 %v3463, 4294901760
    %3465 = vmatpush1.msra.mxu0 %v3464
    %3466 = vmatprep.subr.mxu0 0.0
    %v3467 = vand.u32 %v2960, 4294901760
    %v3468 = vsub.f32 %v2960, %v3467
    %v3469 = vand.u32 %v3468, 4294901760
    %3470 = vmatpush1.msra.mxu0 %v3469
    %3471 = vmatprep.subr.mxu0 0.0
    %v3472 = vand.u32 %v2961, 4294901760
    %v3473 = vsub.f32 %v2961, %v3472
    %v3474 = vand.u32 %v3473, 4294901760
    %3475 = vmatpush1.msra.mxu0 %v3474
    %3476 = vmatprep.subr.mxu0 0.0
    %v3477 = vand.u32 %v2962, 4294901760
    %v3478 = vsub.f32 %v2962, %v3477
    %v3479 = vand.u32 %v3478, 4294901760
    %3480 = vmatpush1.msra.mxu0 %v3479
    %3481 = vmatprep.subr.mxu0 0.0
    %v3482 = vand.u32 %v2963, 4294901760
    %v3483 = vsub.f32 %v2963, %v3482
    %v3484 = vand.u32 %v3483, 4294901760
    %3485 = vmatpush1.msra.mxu0 %v3484
    %3486 = vmatprep.subr.mxu0 0.0
    %v3487 = vand.u32 %v2964, 4294901760
    %v3488 = vsub.f32 %v2964, %v3487
    %v3489 = vand.u32 %v3488, 4294901760
    %3490 = vmatpush1.msra.mxu0 %v3489
    %3491 = vmatprep.subr.mxu0 0.0
    %v3492 = vand.u32 %v2965, 4294901760
    %v3493 = vsub.f32 %v2965, %v3492
    %v3494 = vand.u32 %v3493, 4294901760
    %3495 = vmatpush1.msra.mxu0 %v3494
    %3496 = vmatprep.subr.mxu0 0.0
    %v3497 = vand.u32 %v2966, 4294901760
    %v3498 = vsub.f32 %v2966, %v3497
    %v3499 = vand.u32 %v3498, 4294901760
    %3500 = vmatpush1.msra.mxu0 %v3499
    %3501 = vmatprep.subr.mxu0 0.0
    %v3502 = vand.u32 %v2967, 4294901760
    %v3503 = vsub.f32 %v2967, %v3502
    %v3504 = vand.u32 %v3503, 4294901760
    %3505 = vmatpush1.msra.mxu0 %v3504
    %3506 = vmatprep.subr.mxu0 0.0
    %v3507 = vand.u32 %v2968, 4294901760
    %v3508 = vsub.f32 %v2968, %v3507
    %v3509 = vand.u32 %v3508, 4294901760
    %3510 = vmatpush1.msra.mxu0 %v3509
    %3511 = vmatprep.subr.mxu0 0.0
    %v3512 = vand.u32 %v2969, 4294901760
    %v3513 = vsub.f32 %v2969, %v3512
    %v3514 = vand.u32 %v3513, 4294901760
    %3515 = vmatpush1.msra.mxu0 %v3514
    %3516 = vmatprep.subr.mxu0 0.0
    %3517 = vmatpush1.msra.mxu0 0.0
    %3518 = vmatprep.subr.mxu0 0.0
    %3519 = vmatpush1.msra.mxu0 0.0
    %3520 = vmatprep.subr.mxu0 0.0
    %3521 = vmatpush1.msra.mxu0 0.0
    %3522 = vmatprep.subr.mxu0 0.0
    %3523 = vmatpush1.msra.mxu0 0.0
    %3524 = vmatprep.subr.mxu0 0.0
    %3525 = vmatpush1.msra.mxu0 0.0
    %3526 = vmatprep.subr.mxu0 0.0
    %3527 = vmatpush1.msra.mxu0 0.0
    %3528 = vmatprep.subr.mxu0 0.0
    %3529 = vmatpush1.msra.mxu0 0.0
    %3530 = vmatprep.subr.mxu0 0.0
    %3531 = vmatpush1.msra.mxu0 0.0
    %3532 = vmatprep.subr.mxu0 0.0
    %3533 = vmatpush1.msra.mxu0 0.0
    %3534 = vmatprep.subr.mxu0 0.0
    %3535 = vmatpush1.msra.mxu0 0.0
    %3536 = vmatprep.subr.mxu0 0.0
    %3537 = vmatpush1.msra.mxu0 0.0
    %3538 = vmatprep.subr.mxu0 0.0
    %3539 = vmatpush1.msra.mxu0 0.0
    %3540 = vmatprep.subr.mxu0 0.0
    %3541 = vmatpush1.msra.mxu0 0.0
    %3542 = vmatprep.subr.mxu0 0.0
    %3543 = vmatpush1.msra.mxu0 0.0
    %3544 = vmatprep.subr.mxu0 0.0
    %3545 = vmatpush1.msra.mxu0 0.0
    %3546 = vmatprep.subr.mxu0 0.0
    %3547 = vmatpush1.msra.mxu0 0.0
    %3548 = vmatprep.mubr.f32.mxu0 0.0
    %v3549 = vand.u32 %v2943, 4294901760
    %3550 = vmatmul.mubr.f32.gmra.mrb[0].mxu0 %v3549
    %v3551 = vpop.f32.mrb[0].mxu0
    %v3552 = vadd.f32 %v3425, %v3551
    %v3553 = vpop.f32.mrb[0].mxu0
    %3554 = vmatprep.mubr.f32.mxu0 0.0
    %v3555 = vand.u32 %v2949, 4294901760
    %3556 = vmatmul.mubr.f32.gmra.mrb[0].mxu0 %v3555
    %v3557 = vpop.f32.mrb[0].mxu0
    %v3558 = vadd.f32 %v3433, %v3557
    %v3559 = vpop.f32.mrb[0].mxu0
    %3560 = vdwg.mxu0
    %3561 = vmatprep.subr.mxu0 0.0
    %v3562 = vand.u32 %v2954, 4294901760
    %3563 = vmatpush1.msra.mxu0 %v3562
    %3564 = vmatprep.subr.mxu0 0.0
    %v3565 = vand.u32 %v2955, 4294901760
    %3566 = vmatpush1.msra.mxu0 %v3565
    %3567 = vmatprep.subr.mxu0 0.0
    %v3568 = vand.u32 %v2956, 4294901760
    %3569 = vmatpush1.msra.mxu0 %v3568
    %3570 = vmatprep.subr.mxu0 0.0
    %v3571 = vand.u32 %v2957, 4294901760
    %3572 = vmatpush1.msra.mxu0 %v3571
    %3573 = vmatprep.subr.mxu0 0.0
    %v3574 = vand.u32 %v2958, 4294901760
    %3575 = vmatpush1.msra.mxu0 %v3574
    %3576 = vmatprep.subr.mxu0 0.0
    %v3577 = vand.u32 %v2959, 4294901760
    %3578 = vmatpush1.msra.mxu0 %v3577
    %3579 = vmatprep.subr.mxu0 0.0
    %v3580 = vand.u32 %v2960, 4294901760
    %3581 = vmatpush1.msra.mxu0 %v3580
    %3582 = vmatprep.subr.mxu0 0.0
    %v3583 = vand.u32 %v2961, 4294901760
    %3584 = vmatpush1.msra.mxu0 %v3583
    %3585 = vmatprep.subr.mxu0 0.0
    %v3586 = vand.u32 %v2962, 4294901760
    %3587 = vmatpush1.msra.mxu0 %v3586
    %3588 = vmatprep.subr.mxu0 0.0
    %v3589 = vand.u32 %v2963, 4294901760
    %3590 = vmatpush1.msra.mxu0 %v3589
    %3591 = vmatprep.subr.mxu0 0.0
    %v3592 = vand.u32 %v2964, 4294901760
    %3593 = vmatpush1.msra.mxu0 %v3592
    %3594 = vmatprep.subr.mxu0 0.0
    %v3595 = vand.u32 %v2965, 4294901760
    %3596 = vmatpush1.msra.mxu0 %v3595
    %3597 = vmatprep.subr.mxu0 0.0
    %v3598 = vand.u32 %v2966, 4294901760
    %3599 = vmatpush1.msra.mxu0 %v3598
    %3600 = vmatprep.subr.mxu0 0.0
    %v3601 = vand.u32 %v2967, 4294901760
    %3602 = vmatpush1.msra.mxu0 %v3601
    %3603 = vmatprep.subr.mxu0 0.0
    %v3604 = vand.u32 %v2968, 4294901760
    %3605 = vmatpush1.msra.mxu0 %v3604
    %3606 = vmatprep.subr.mxu0 0.0
    %v3607 = vand.u32 %v2969, 4294901760
    %3608 = vmatpush1.msra.mxu0 %v3607
    %3609 = vmatprep.subr.mxu0 0.0
    %3610 = vmatpush1.msra.mxu0 0.0
    %3611 = vmatprep.subr.mxu0 0.0
    %3612 = vmatpush1.msra.mxu0 0.0
    %3613 = vmatprep.subr.mxu0 0.0
    %3614 = vmatpush1.msra.mxu0 0.0
    %3615 = vmatprep.subr.mxu0 0.0
    %3616 = vmatpush1.msra.mxu0 0.0
    %3617 = vmatprep.subr.mxu0 0.0
    %3618 = vmatpush1.msra.mxu0 0.0
    %3619 = vmatprep.subr.mxu0 0.0
    %3620 = vmatpush1.msra.mxu0 0.0
    %3621 = vmatprep.subr.mxu0 0.0
    %3622 = vmatpush1.msra.mxu0 0.0
    %3623 = vmatprep.subr.mxu0 0.0
    %3624 = vmatpush1.msra.mxu0 0.0
    %3625 = vmatprep.subr.mxu0 0.0
    %3626 = vmatpush1.msra.mxu0 0.0
    %3627 = vmatprep.subr.mxu0 0.0
    %3628 = vmatpush1.msra.mxu0 0.0
    %3629 = vmatprep.subr.mxu0 0.0
    %3630 = vmatpush1.msra.mxu0 0.0
    %3631 = vmatprep.subr.mxu0 0.0
    %3632 = vmatpush1.msra.mxu0 0.0
    %3633 = vmatprep.subr.mxu0 0.0
    %3634 = vmatpush1.msra.mxu0 0.0
    %3635 = vmatprep.subr.mxu0 0.0
    %3636 = vmatpush1.msra.mxu0 0.0
    %3637 = vmatprep.subr.mxu0 0.0
    %3638 = vmatpush1.msra.mxu0 0.0
    %3639 = vmatprep.subr.mxu0 0.0
    %3640 = vmatpush1.msra.mxu0 0.0
    %3641 = vmatprep.mubr.f32.mxu0 0.0
    %v3642 = vand.u32 %v2943, 4294901760
    %3643 = vmatmul.mubr.f32.gmra.mrb[0].mxu0 %v3642
    %v3644 = vpop.f32.mrb[0].mxu0
    %v3645 = vadd.f32 %v3552, %v3644
    %v3646 = vpop.f32.mrb[0].mxu0
    %3647 = vmatprep.mubr.f32.mxu0 0.0
    %v3648 = vand.u32 %v2949, 4294901760
    %3649 = vmatmul.mubr.f32.gmra.mrb[0].mxu0 %v3648
    %v3650 = vpop.f32.mrb[0].mxu0
    %v3651 = vadd.f32 %v3558, %v3650
    %v3652 = vpop.f32.mrb[0].mxu0
    %3653 = vdwg.mxu0
    %v3654 = vadd.f32 %v76, %v3645
    %v3655 = vadd.f32 %v77, %v3651
    %v3656 = vpack.c.bf16 %v3655, %v3654
    %v3657 = vld [vmem:[%s9] sm:$0xff]
    %v3658 = vld [vmem:[%s9 + $0x8] sm:$0xff]
    %v3659 = vld [vmem:[%s9 + $0x10] sm:$0xff]
    %v3660 = vld [vmem:[%s9 + $0x18] sm:$0xff]
    %v3661 = vld [vmem:[%s9 + $0x20] sm:$0xff]
    %v3662 = vld [vmem:[%s9 + $0x28] sm:$0xff]
    %v3663 = vld [vmem:[%s9 + $0x30] sm:$0xff]
    %v3664 = vld [vmem:[%s9 + $0x38] sm:$0xff]
    %v3665 = vld [vmem:[%s9 + $0x40] sm:$0xff]
    %v3666 = vld [vmem:[%s9 + $0x48] sm:$0xff]
    %v3667 = vld [vmem:[%s9 + $0x50] sm:$0xff]
    %v3668 = vld [vmem:[%s9 + $0x58] sm:$0xff]
    %v3669 = vld [vmem:[%s9 + $0x60] sm:$0xff]
    %v3670 = vld [vmem:[%s9 + $0x68] sm:$0xff]
    %v3671 = vld [vmem:[%s9 + $0x70] sm:$0xff]
    %v3672 = vld [vmem:[%s9 + $0x78] sm:$0xff]
    %v3673 = vld [vmem:[%s10] sm:$0x3]
    %v3675 = vlaneseq
    %v3676 = vshrl.u32 %v3675, 7
    %v3677 = vsub.s32 0, %v3676
    %v3678 = vrot.slane %v3673, %v3677
    %v3679 = vlaneseq
    %v3680 = vshrl.u32 %v3679, 7
    %v3681 = vsub.s32 1, %v3680
    %v3682 = vrot.slane %v3673, %v3681
    %v3701 = vunpack.c.l.b16 %v3657
    %v3702 = vunpack.c.h.b16 %v3657
    %v3703 = vunpack.c.l.b16 %v3658
    %v3704 = vunpack.c.h.b16 %v3658
    %v3705 = vunpack.c.l.b16 %v3659
    %v3706 = vunpack.c.h.b16 %v3659
    %v3707 = vunpack.c.l.b16 %v3660
    %v3708 = vunpack.c.h.b16 %v3660
    %v3709 = vunpack.c.l.b16 %v3661
    %v3710 = vunpack.c.h.b16 %v3661
    %v3711 = vunpack.c.l.b16 %v3662
    %v3712 = vunpack.c.h.b16 %v3662
    %v3713 = vunpack.c.l.b16 %v3663
    %v3714 = vunpack.c.h.b16 %v3663
    %v3715 = vunpack.c.l.b16 %v3664
    %v3716 = vunpack.c.h.b16 %v3664
    %v3717 = vunpack.c.l.b16 %v3665
    %v3718 = vunpack.c.h.b16 %v3665
    %v3719 = vunpack.c.l.b16 %v3666
    %v3720 = vunpack.c.h.b16 %v3666
    %v3721 = vunpack.c.l.b16 %v3667
    %v3722 = vunpack.c.h.b16 %v3667
    %v3723 = vunpack.c.l.b16 %v3668
    %v3724 = vunpack.c.h.b16 %v3668
    %v3725 = vunpack.c.l.b16 %v3669
    %v3726 = vunpack.c.h.b16 %v3669
    %v3727 = vunpack.c.l.b16 %v3670
    %v3728 = vunpack.c.h.b16 %v3670
    %v3729 = vunpack.c.l.b16 %v3671
    %v3730 = vunpack.c.h.b16 %v3671
    %v3731 = vunpack.c.l.b16 %v3672
    %v3732 = vunpack.c.h.b16 %v3672
    %v3733 = vpack.c.b16 %v3703, %v3701
    %v3734 = vpack.c.b16 %v3704, %v3702
    %v3735 = vpack.c.b16 %v3707, %v3705
    %v3736 = vpack.c.b16 %v3708, %v3706
    %v3737 = vpack.c.b16 %v3711, %v3709
    %v3738 = vpack.c.b16 %v3712, %v3710
    %v3739 = vpack.c.b16 %v3715, %v3713
    %v3740 = vpack.c.b16 %v3716, %v3714
    %v3741 = vpack.c.b16 %v3719, %v3717
    %v3742 = vpack.c.b16 %v3720, %v3718
    %v3743 = vpack.c.b16 %v3723, %v3721
    %v3744 = vpack.c.b16 %v3724, %v3722
    %v3745 = vpack.c.b16 %v3727, %v3725
    %v3746 = vpack.c.b16 %v3728, %v3726
    %v3747 = vpack.c.b16 %v3731, %v3729
    %v3748 = vpack.c.b16 %v3732, %v3730
    %3765 = vmatprep.subr.bf16.mxu0 %v3734
    %3766 = vmatpush1.bf16.msra.mxu0 %v3733
    %3767 = vmatprep.subr.bf16.mxu0 %v3736
    %3768 = vmatpush1.bf16.msra.mxu0 %v3735
    %3769 = vmatprep.subr.bf16.mxu0 %v3738
    %3770 = vmatpush1.bf16.msra.mxu0 %v3737
    %3771 = vmatprep.subr.bf16.mxu0 %v3740
    %3772 = vmatpush1.bf16.msra.mxu0 %v3739
    %3773 = vmatprep.subr.bf16.mxu0 %v3742
    %3774 = vmatpush1.bf16.msra.mxu0 %v3741
    %3775 = vmatprep.subr.bf16.mxu0 %v3744
    %3776 = vmatpush1.bf16.msra.mxu0 %v3743
    %3777 = vmatprep.subr.bf16.mxu0 %v3746
    %3778 = vmatpush1.bf16.msra.mxu0 %v3745
    %3779 = vmatprep.subr.bf16.mxu0 %v3748
    %3780 = vmatpush1.bf16.msra.mxu0 %v3747
    %3781 = vmatprep.subr.bf16.mxu0 0
    %3782 = vmatpush1.bf16.msra.mxu0 0
    %3783 = vmatprep.subr.bf16.mxu0 0
    %3784 = vmatpush1.bf16.msra.mxu0 0
    %3785 = vmatprep.subr.bf16.mxu0 0
    %3786 = vmatpush1.bf16.msra.mxu0 0
    %3787 = vmatprep.subr.bf16.mxu0 0
    %3788 = vmatpush1.bf16.msra.mxu0 0
    %3789 = vmatprep.subr.bf16.mxu0 0
    %3790 = vmatpush1.bf16.msra.mxu0 0
    %3791 = vmatprep.subr.bf16.mxu0 0
    %3792 = vmatpush1.bf16.msra.mxu0 0
    %3793 = vmatprep.subr.bf16.mxu0 0
    %3794 = vmatpush1.bf16.msra.mxu0 0
    %3795 = vmatprep.subr.bf16.mxu0 0
    %3796 = vmatpush1.bf16.msra.mxu0 0
    %3797 = vmatprep.mubr.bf16.mxu0 0
    %3798 = vmatmul.mubr.bf16.gmra.mrb[0].mxu0 %v3656
    %v3799 = vpop.f32.mrb[0].mxu0
    %v3800 = vadd.f32 %v3678, %v3799
    %v3801 = vpop.f32.mrb[0].mxu0
    %v3802 = vadd.f32 %v3682, %v3801
    %v3803 = vpop.f32.mrb[0].mxu0
    %v3804 = vadd.f32 %v3678, %v3803
    %v3805 = vpop.f32.mrb[0].mxu0
    %v3806 = vadd.f32 %v3682, %v3805
    %3807 = vdwg.mxu0
    %v3808 = vmax.f32 %v3800, 0.0
    %v3809 = vmax.f32 %v3802, 0.0
    %v3810 = vmax.f32 %v3804, 0.0
    %v3811 = vmax.f32 %v3806, 0.0
    %v3812 = vpack.c.bf16 %v3810, %v3808
    %v3813 = vpack.c.bf16 %v3811, %v3809
    %v3814 = vld [vmem:[%s11] sm:$0xf]
    %v3815 = vld [vmem:[%s11 + $0x4] sm:$0xf]
    %v3816 = vld [vmem:[%s11 + $0x8] sm:$0xf]
    %v3817 = vld [vmem:[%s11 + $0xc] sm:$0xf]
    %v3818 = vld [vmem:[%s11 + $0x10] sm:$0xf]
    %v3819 = vld [vmem:[%s11 + $0x14] sm:$0xf]
    %v3820 = vld [vmem:[%s11 + $0x18] sm:$0xf]
    %v3821 = vld [vmem:[%s11 + $0x1c] sm:$0xf]
    %v3822 = vld [vmem:[%s11 + $0x20] sm:$0xf]
    %v3823 = vld [vmem:[%s11 + $0x24] sm:$0xf]
    %v3824 = vld [vmem:[%s11 + $0x28] sm:$0xf]
    %v3825 = vld [vmem:[%s11 + $0x2c] sm:$0xf]
    %v3826 = vld [vmem:[%s11 + $0x30] sm:$0xf]
    %v3827 = vld [vmem:[%s11 + $0x34] sm:$0xf]
    %v3828 = vld [vmem:[%s11 + $0x38] sm:$0xf]
    %v3829 = vld [vmem:[%s11 + $0x3c] sm:$0xf]
    %v3830 = vld [vmem:[%s11 + $0x40] sm:$0xf]
    %v3831 = vld [vmem:[%s11 + $0x44] sm:$0xf]
    %v3832 = vld [vmem:[%s11 + $0x48] sm:$0xf]
    %v3833 = vld [vmem:[%s11 + $0x4c] sm:$0xf]
    %v3834 = vld [vmem:[%s11 + $0x50] sm:$0xf]
    %v3835 = vld [vmem:[%s11 + $0x54] sm:$0xf]
    %v3836 = vld [vmem:[%s11 + $0x58] sm:$0xf]
    %v3837 = vld [vmem:[%s11 + $0x5c] sm:$0xf]
    %v3838 = vld [vmem:[%s11 + $0x60] sm:$0xf]
    %v3839 = vld [vmem:[%s11 + $0x64] sm:$0xf]
    %v3840 = vld [vmem:[%s11 + $0x68] sm:$0xf]
    %v3841 = vld [vmem:[%s11 + $0x6c] sm:$0xf]
    %v3842 = vld [vmem:[%s11 + $0x70] sm:$0xf]
    %v3843 = vld [vmem:[%s11 + $0x74] sm:$0xf]
    %v3844 = vld [vmem:[%s11 + $0x78] sm:$0xf]
    %v3845 = vld [vmem:[%s11 + $0x7c] sm:$0xf]
    %v3846 = vld [vmem:[%s12] sm:$0x1]
    %v3848 = vlaneseq
    %v3849 = vshrl.u32 %v3848, 7
    %v3850 = vsub.s32 0, %v3849
    %v3851 = vrot.slane %v3846, %v3850
    %v3885 = vunpack.c.l.b16 %v3814
    %v3886 = vunpack.c.l.b16 %v3815
    %v3887 = vunpack.c.l.b16 %v3816
    %v3888 = vunpack.c.l.b16 %v3817
    %v3889 = vunpack.c.l.b16 %v3818
    %v3890 = vunpack.c.l.b16 %v3819
    %v3891 = vunpack.c.l.b16 %v3820
    %v3892 = vunpack.c.l.b16 %v3821
    %v3893 = vunpack.c.l.b16 %v3822
    %v3894 = vunpack.c.l.b16 %v3823
    %v3895 = vunpack.c.l.b16 %v3824
    %v3896 = vunpack.c.l.b16 %v3825
    %v3897 = vunpack.c.l.b16 %v3826
    %v3898 = vunpack.c.l.b16 %v3827
    %v3899 = vunpack.c.l.b16 %v3828
    %v3900 = vunpack.c.l.b16 %v3829
    %v3901 = vunpack.c.l.b16 %v3830
    %v3902 = vunpack.c.l.b16 %v3831
    %v3903 = vunpack.c.l.b16 %v3832
    %v3904 = vunpack.c.l.b16 %v3833
    %v3905 = vunpack.c.l.b16 %v3834
    %v3906 = vunpack.c.l.b16 %v3835
    %v3907 = vunpack.c.l.b16 %v3836
    %v3908 = vunpack.c.l.b16 %v3837
    %v3909 = vunpack.c.l.b16 %v3838
    %v3910 = vunpack.c.l.b16 %v3839
    %v3911 = vunpack.c.l.b16 %v3840
    %v3912 = vunpack.c.l.b16 %v3841
    %v3913 = vunpack.c.l.b16 %v3842
    %v3914 = vunpack.c.l.b16 %v3843
    %v3915 = vunpack.c.l.b16 %v3844
    %v3916 = vunpack.c.l.b16 %v3845
    %v3917 = vpack.c.b16 %v3886, %v3885
    %v3918 = vpack.c.b16 %v3888, %v3887
    %v3919 = vpack.c.b16 %v3890, %v3889
    %v3920 = vpack.c.b16 %v3892, %v3891
    %v3921 = vpack.c.b16 %v3894, %v3893
    %v3922 = vpack.c.b16 %v3896, %v3895
    %v3923 = vpack.c.b16 %v3898, %v3897
    %v3924 = vpack.c.b16 %v3900, %v3899
    %v3925 = vpack.c.b16 %v3902, %v3901
    %v3926 = vpack.c.b16 %v3904, %v3903
    %v3927 = vpack.c.b16 %v3906, %v3905
    %v3928 = vpack.c.b16 %v3908, %v3907
    %v3929 = vpack.c.b16 %v3910, %v3909
    %v3930 = vpack.c.b16 %v3912, %v3911
    %v3931 = vpack.c.b16 %v3914, %v3913
    %v3932 = vpack.c.b16 %v3916, %v3915
    %3949 = vmatprep.subr.bf16.mxu0 0
    %3950 = vmatpush1.bf16.msra.mxu0 %v3917
    %3951 = vmatprep.subr.bf16.mxu0 0
    %3952 = vmatpush1.bf16.msra.mxu0 %v3918
    %3953 = vmatprep.subr.bf16.mxu0 0
    %3954 = vmatpush1.bf16.msra.mxu0 %v3919
    %3955 = vmatprep.subr.bf16.mxu0 0
    %3956 = vmatpush1.bf16.msra.mxu0 %v3920
    %3957 = vmatprep.subr.bf16.mxu0 0
    %3958 = vmatpush1.bf16.msra.mxu0 %v3921
    %3959 = vmatprep.subr.bf16.mxu0 0
    %3960 = vmatpush1.bf16.msra.mxu0 %v3922
    %3961 = vmatprep.subr.bf16.mxu0 0
    %3962 = vmatpush1.bf16.msra.mxu0 %v3923
    %3963 = vmatprep.subr.bf16.mxu0 0
    %3964 = vmatpush1.bf16.msra.mxu0 %v3924
    %3965 = vmatprep.subr.bf16.mxu0 0
    %3966 = vmatpush1.bf16.msra.mxu0 %v3925
    %3967 = vmatprep.subr.bf16.mxu0 0
    %3968 = vmatpush1.bf16.msra.mxu0 %v3926
    %3969 = vmatprep.subr.bf16.mxu0 0
    %3970 = vmatpush1.bf16.msra.mxu0 %v3927
    %3971 = vmatprep.subr.bf16.mxu0 0
    %3972 = vmatpush1.bf16.msra.mxu0 %v3928
    %3973 = vmatprep.subr.bf16.mxu0 0
    %3974 = vmatpush1.bf16.msra.mxu0 %v3929
    %3975 = vmatprep.subr.bf16.mxu0 0
    %3976 = vmatpush1.bf16.msra.mxu0 %v3930
    %3977 = vmatprep.subr.bf16.mxu0 0
    %3978 = vmatpush1.bf16.msra.mxu0 %v3931
    %3979 = vmatprep.subr.bf16.mxu0 0
    %3980 = vmatpush1.bf16.msra.mxu0 %v3932
    %3981 = vmatprep.mubr.bf16.mxu0 %v3813
    %3982 = vmatmul.mubr.bf16.gmra.mrb[0].mxu0 %v3812
    %v3983 = vpop.f32.mrb[0].mxu0
    %v3984 = vadd.f32 %v3851, %v3983
    %v3985 = vpop.f32.mrb[0].mxu0
    %v3986 = vpop.f32.mrb[0].mxu0
    %v3987 = vadd.f32 %v3851, %v3986
    %v3988 = vpop.f32.mrb[0].mxu0
    %3989 = vdwg.mxu0
    %v3990 = vadd.f32 %v76, %v3984
    %v3991 = vadd.f32 %v77, %v3987
    %3992 = vst [vmem:[%s13] sm:$0xff] %v3990
    %3993 = vst [vmem:[%s13 + $0x8] sm:$0xff] %v3991
    %3994 = vst [vmem:[%s14] sm:$0xff] %v2943
    %3995 = vst [vmem:[%s14 + $0x8] sm:$0xff] %v2949
    %3996 = vst [vmem:[%s15] sm:$0xff] %v2952
    %3997 = vst [vmem:[%s15 + $0x8] sm:$0xff] %v2953
    // Predicated region
    $region62: #{forward.1} parent=1 // pred_check
      _
    $region63: #{forward.1} parent=1 // pred_check_branch
      %3999 = sbr.rel (0) target = $region65
    $region64: #{forward.1} parent=1 // pred_region
      _
    $region65: #{forward.1} parent=1 // pred_fallthru
      _
    // Predicated region
    $region66: #{forward.1} parent=1 // pred_check
      _
    $region67: #{forward.1} parent=1 // pred_check_branch
      %4001 = sbr.rel (0) target = $region69
    $region68: #{forward.1} parent=1 // pred_region
      _
    $region69: #{forward.1} parent=1 // pred_fallthru
      _
    // Predicated region
    $region70: #{forward.1} parent=1 // pred_check
      _
    $region71: #{forward.1} parent=1 // pred_check_branch
      %4003 = sbr.rel (0) target = $region73
    $region72: #{forward.1} parent=1 // pred_region
      _
    $region73: #{forward.1} parent=1 // pred_fallthru
      _
    // Predicated region
    $region74: #{forward.1} parent=1 // pred_check
      _
    $region75: #{forward.1} parent=1 // pred_check_branch
      %4005 = sbr.rel (0) target = $region77
    $region76: #{forward.1} parent=1 // pred_region
      _
    $region77: #{forward.1} parent=1 // pred_fallthru
      _
    // Predicated region
    $region78: #{forward.1} parent=1 // pred_check
      _
    $region79: #{forward.1} parent=1 // pred_check_branch
      %4007 = sbr.rel (0) target = $region81
    $region80: #{forward.1} parent=1 // pred_region
      _
    $region81: #{forward.1} parent=1 // pred_fallthru
      _
    // Predicated region
    $region82: #{forward.1} parent=1 // pred_check
      _
    $region83: #{forward.1} parent=1 // pred_check_branch
      %4009 = sbr.rel (0) target = $region85
    $region84: #{forward.1} parent=1 // pred_region
      _
    $region85: #{forward.1} parent=1 // pred_fallthru
      _
    %4010 = vsyncpa [#allocation3], 1
    %4011 = vsyncpa [#allocation5], 1

</llo_original>
